<compile_context>
chip_gen: v6e
topology: v6e:2x2x1
jax: 0.10.0
libtpu: 0.0.40
codegen_flags: <defaults>
</compile_context>

<pallas_src>
import functools

import jax
import jax.numpy as jnp
from jax.experimental import pallas as pl
from jax.experimental.pallas import tpu as pltpu


def _quant_embed_kernel(x_ref, lo_ref, hi_ref, emb_ref, o_ref, *, pack):
    """x_ref: (tile_rows, pack) f32   -- pack consecutive elements per row
    lo_ref/hi_ref: (1, n_bins) f32    -- lower/upper bucket boundaries
    emb_ref: (pack, n_bins, pack*hidden) f32 -- block-diagonal embedding table
    o_ref:  (tile_rows, pack*hidden)  -- lane-dense packed output
    """
    lo = lo_ref[...]                                   # (1, n_bins)
    hi = hi_ref[...]                                   # (1, n_bins)

    acc = None
    for j in range(pack):                              # static, fully unrolled
        xj = x_ref[:, j : j + 1]                       # (tile_rows, 1)
        # bucket k <=> lo[k] < x <= hi[k]   (exact two-compare one-hot)
        oh = ((xj > lo) & (xj <= hi)).astype(jnp.float32)   # (tile_rows, n_bins)
        # (tile_rows, n_bins) @ (n_bins, pack*hidden) on the MXU; the RHS block
        # only has nonzeros in columns [j*hidden, (j+1)*hidden).
        d = jnp.dot(oh, emb_ref[j], preferred_element_type=jnp.float32)
        acc = d if acc is None else acc + d
    o_ref[...] = acc.astype(o_ref.dtype)


@functools.partial(jax.jit, static_argnames=("tile_m",))
def quantization_embedding(x, bins, emb_table, *, tile_m=1024):
    """x: any shape. bins: (n_bins-1,) sorted boundaries. emb_table: (n_bins, hidden).

    Returns x.shape + (hidden,). tile_m = elements of x per grid step
    (sweep 1024-4096; must leave >= a few grid steps on v7x to use both TCs).
    """
    orig_shape = x.shape
    n_bins, hidden = emb_table.shape
    out_dtype = emb_table.dtype

    # Pack factor: how many consecutive elements share one 128-lane output row.
    if hidden < 128 and 128 % hidden == 0:
        pack = 128 // hidden
    else:
        pack = 1                      # fallback: hidden already >= 128 or ragged
    out_w = pack * hidden

    # tile_m must be a multiple of 8*pack so block sublane dims divide 8.
    quantum = 8 * pack
    tile_m = max(quantum, (int(tile_m) // quantum) * quantum)

    x_flat = x.reshape(-1).astype(jnp.float32)
    n = x_flat.shape[0]
    n_pad = pl.cdiv(n, tile_m) * tile_m
    if n_pad != n:
        x_flat = jnp.pad(x_flat, (0, n_pad - n))

    rows = n_pad // pack
    tile_rows = tile_m // pack
    x_q = x_flat.reshape(rows, pack)                   # lane dim = pack (full dim)

    # Bucket boundaries, padded with +/-inf sentinels to exactly n_bins lanes
    # (256 = 2 full 128-lane tiles -> no ragged-lane compares).
    bins_f = bins.astype(jnp.float32).reshape(-1)
    lo = jnp.concatenate([jnp.array([-jnp.inf], jnp.float32), bins_f]).reshape(1, n_bins)
    hi = jnp.concatenate([bins_f, jnp.array([jnp.inf], jnp.float32)]).reshape(1, n_bins)

    # Block-diagonal embedding: emb_block[j, k, j*hidden:(j+1)*hidden] = emb[k, :]
    emb_f = emb_table.astype(jnp.float32)
    emb_block = jnp.kron(jnp.eye(pack, dtype=jnp.float32), emb_f).reshape(
        pack, n_bins, out_w
    )

    grid = (rows // tile_rows,)
    cost = pl.CostEstimate(
        flops=2 * n_pad * n_bins * hidden,
        transcendentals=0,
        bytes_accessed=(
            n_pad * 4                     # x
            + n_pad * hidden * 4          # output
            + pack * n_bins * out_w * 4   # block-diag table
            + 2 * n_bins * 4              # boundaries
        ),
    )

    out = pl.pallas_call(
        functools.partial(_quant_embed_kernel, pack=pack),
        out_shape=jax.ShapeDtypeStruct((rows, out_w), jnp.float32),
        grid_spec=pltpu.PrefetchScalarGridSpec(
            num_scalar_prefetch=0,
            grid=grid,
            in_specs=[
                pl.BlockSpec((tile_rows, pack), lambda i: (i, 0)),       # packed x
                pl.BlockSpec((1, n_bins), lambda i: (0, 0)),             # lo (resident)
                pl.BlockSpec((1, n_bins), lambda i: (0, 0)),             # hi (resident)
                pl.BlockSpec((pack, n_bins, out_w), lambda i: (0, 0, 0)),  # emb blocks
            ],
            out_specs=pl.BlockSpec((tile_rows, out_w), lambda i: (i, 0)),
        ),
        compiler_params=pltpu.CompilerParams(dimension_semantics=("parallel",)),
        cost_estimate=cost,
    )(x_q, lo, hi, emb_block)

    # (rows, pack*hidden) row-major is bit-identical to (n_pad, hidden) row-major.
    out = out.reshape(n_pad, hidden)[:n].astype(out_dtype)
    return out.reshape(*orig_shape, hidden)


def make_params(values_range=(-5.0, 5.0), n_bins=256, encoder_hidden=32,
                large_zero=False, key=None):
    """Deterministic parameter construction mirroring the PyTorch __init__."""
    min_v, max_v = values_range
    if large_zero:
        lin = jnp.concatenate(
            [jnp.array([0.0]), jnp.linspace(min_v, max_v, n_bins - 2)]
        )
    else:
        lin = jnp.linspace(min_v, max_v, n_bins - 1)
    bins = jnp.expm1(lin).astype(jnp.float32)   # buffer (requires_grad=False)

    if key is None:
        key = jax.random.PRNGKey(0)
    # nn.Embedding default init: N(0, 1)
    emb_table = jax.random.normal(key, (n_bins, encoder_hidden), dtype=jnp.float32)
    return bins, emb_table


def reference(x, bins, emb_table):
    idx = jnp.searchsorted(bins, x.reshape(-1), side="left")
    return jnp.take(emb_table, idx, axis=0).reshape(*x.shape, emb_table.shape[1])


if __name__ == "__main__":
    key = jax.random.PRNGKey(0)
    k_x, k_emb = jax.random.split(key)

    B, C, H, W = 2, 4, 16, 16
    n_bins, hidden = 256, 32

    bins, emb_table = make_params(values_range=(-5.0, 5.0), n_bins=n_bins,
                                  encoder_hidden=hidden, large_zero=False,
                                  key=k_emb)

    # Inputs spanning many buckets (bins range expm1(-5)..expm1(5)).
    x = jax.random.uniform(k_x, (B, C, H, W), minval=-1.0, maxval=100.0,
                           dtype=jnp.float32)

    out = quantization_embedding(x, bins, emb_table)
    out = jax.block_until_ready(out)

    ref = reference(x, bins, emb_table)
    assert out.shape == (B, C, H, W, hidden), out.shape
    assert jnp.allclose(out, ref, atol=1e-5, rtol=1e-5), "mismatch vs reference"

    print("KERNEL_OK")
</pallas_src>

<mosaic_0001>
module attributes {stable_mosaic.version = 11 : i64} {
  func.func @_quant_embed_kernel(%arg0: i32, %arg1: memref<256x4xf32, #tpu.memory_space<vmem>>, %arg2: memref<1x256xf32, #tpu.memory_space<vmem>>, %arg3: memref<1x256xf32, #tpu.memory_space<vmem>>, %arg4: memref<4x256x128xf32, #tpu.memory_space<vmem>>, %arg5: memref<256x128xf32, #tpu.memory_space<vmem>>) attributes {dimension_semantics = [#tpu.dimension_semantics<parallel>], iteration_bounds = array<i64: 2>, scalar_prefetch = 0 : i64, scratch_operands = 0 : i64, tpu.core_type = #tpu.core_type<tc>, window_params = [{transform_indices = @transform_0, window_bounds = array<i64: 256, 4>}, {pipeline_mode = #tpu.pipeline_mode<synchronous>, transform_indices = @transform_1, window_bounds = array<i64: 1, 256>}, {pipeline_mode = #tpu.pipeline_mode<synchronous>, transform_indices = @transform_2, window_bounds = array<i64: 1, 256>}, {pipeline_mode = #tpu.pipeline_mode<synchronous>, transform_indices = @transform_3, window_bounds = array<i64: 4, 256, 128>}, {transform_indices = @transform_4, window_bounds = array<i64: 256, 128>}]} {
    %c0 = arith.constant 0 : index
    %c0_0 = arith.constant 0 : index
    %0 = vector.load %arg2[%c0, %c0_0] : memref<1x256xf32, #tpu.memory_space<vmem>>, vector<1x256xf32>
    %c0_1 = arith.constant 0 : index
    %c0_2 = arith.constant 0 : index
    %1 = vector.load %arg3[%c0_1, %c0_2] : memref<1x256xf32, #tpu.memory_space<vmem>>, vector<1x256xf32>
    %c0_3 = arith.constant 0 : index
    %c0_4 = arith.constant 0 : index
    %2 = vector.load %arg1[%c0_3, %c0_4] : memref<256x4xf32, #tpu.memory_space<vmem>>, vector<256x1xf32>
    %3 = vector.broadcast %2 : vector<256x1xf32> to vector<256x256xf32>
    %4 = vector.broadcast %0 : vector<1x256xf32> to vector<256x256xf32>
    %5 = arith.cmpf ogt, %3, %4 : vector<256x256xf32>
    %6 = vector.broadcast %2 : vector<256x1xf32> to vector<256x256xf32>
    %7 = vector.broadcast %1 : vector<1x256xf32> to vector<256x256xf32>
    %8 = arith.cmpf ole, %6, %7 : vector<256x256xf32>
    %9 = arith.andi %5, %8 : vector<256x256xi1>
    %10 = arith.extui %9 : vector<256x256xi1> to vector<256x256xi32>
    %11 = arith.sitofp %10 : vector<256x256xi32> to vector<256x256xf32>
    %c0_5 = arith.constant 0 : index
    %c0_6 = arith.constant 0 : index
    %c0_7 = arith.constant 0 : index
    %12 = vector.load %arg4[%c0_5, %c0_6, %c0_7] : memref<4x256x128xf32, #tpu.memory_space<vmem>>, vector<1x256x128xf32>
    %13 = vector.shape_cast %12 : vector<1x256x128xf32> to vector<256x128xf32>
    %cst = arith.constant dense<0.000000e+00> : vector<256x128xf32>
    %14 = tpu.matmul %11, %13, %cst {dimension_numbers = #tpu.dot_dimension_numbers<[1], [0], [0], [1], [0, 0, 1, 1], [], []>} : vector<256x256xf32>, vector<256x128xf32>, vector<256x128xf32> -> vector<256x128xf32>
    %c0_8 = arith.constant 0 : index
    %c1 = arith.constant 1 : index
    %15 = vector.load %arg1[%c0_8, %c1] : memref<256x4xf32, #tpu.memory_space<vmem>>, vector<256x1xf32>
    %16 = vector.broadcast %15 : vector<256x1xf32> to vector<256x256xf32>
    %17 = vector.broadcast %0 : vector<1x256xf32> to vector<256x256xf32>
    %18 = arith.cmpf ogt, %16, %17 : vector<256x256xf32>
    %19 = vector.broadcast %15 : vector<256x1xf32> to vector<256x256xf32>
    %20 = vector.broadcast %1 : vector<1x256xf32> to vector<256x256xf32>
    %21 = arith.cmpf ole, %19, %20 : vector<256x256xf32>
    %22 = arith.andi %18, %21 : vector<256x256xi1>
    %23 = arith.extui %22 : vector<256x256xi1> to vector<256x256xi32>
    %24 = arith.sitofp %23 : vector<256x256xi32> to vector<256x256xf32>
    %c1_9 = arith.constant 1 : index
    %c0_10 = arith.constant 0 : index
    %c0_11 = arith.constant 0 : index
    %25 = vector.load %arg4[%c1_9, %c0_10, %c0_11] : memref<4x256x128xf32, #tpu.memory_space<vmem>>, vector<1x256x128xf32>
    %26 = vector.shape_cast %25 : vector<1x256x128xf32> to vector<256x128xf32>
    %cst_12 = arith.constant dense<0.000000e+00> : vector<256x128xf32>
    %27 = tpu.matmul %24, %26, %cst_12 {dimension_numbers = #tpu.dot_dimension_numbers<[1], [0], [0], [1], [0, 0, 1, 1], [], []>} : vector<256x256xf32>, vector<256x128xf32>, vector<256x128xf32> -> vector<256x128xf32>
    %28 = arith.addf %14, %27 : vector<256x128xf32>
    %c0_13 = arith.constant 0 : index
    %c2 = arith.constant 2 : index
    %29 = vector.load %arg1[%c0_13, %c2] : memref<256x4xf32, #tpu.memory_space<vmem>>, vector<256x1xf32>
    %30 = vector.broadcast %29 : vector<256x1xf32> to vector<256x256xf32>
    %31 = vector.broadcast %0 : vector<1x256xf32> to vector<256x256xf32>
    %32 = arith.cmpf ogt, %30, %31 : vector<256x256xf32>
    %33 = vector.broadcast %29 : vector<256x1xf32> to vector<256x256xf32>
    %34 = vector.broadcast %1 : vector<1x256xf32> to vector<256x256xf32>
    %35 = arith.cmpf ole, %33, %34 : vector<256x256xf32>
    %36 = arith.andi %32, %35 : vector<256x256xi1>
    %37 = arith.extui %36 : vector<256x256xi1> to vector<256x256xi32>
    %38 = arith.sitofp %37 : vector<256x256xi32> to vector<256x256xf32>
    %c2_14 = arith.constant 2 : index
    %c0_15 = arith.constant 0 : index
    %c0_16 = arith.constant 0 : index
    %39 = vector.load %arg4[%c2_14, %c0_15, %c0_16] : memref<4x256x128xf32, #tpu.memory_space<vmem>>, vector<1x256x128xf32>
    %40 = vector.shape_cast %39 : vector<1x256x128xf32> to vector<256x128xf32>
    %cst_17 = arith.constant dense<0.000000e+00> : vector<256x128xf32>
    %41 = tpu.matmul %38, %40, %cst_17 {dimension_numbers = #tpu.dot_dimension_numbers<[1], [0], [0], [1], [0, 0, 1, 1], [], []>} : vector<256x256xf32>, vector<256x128xf32>, vector<256x128xf32> -> vector<256x128xf32>
    %42 = arith.addf %28, %41 : vector<256x128xf32>
    %c0_18 = arith.constant 0 : index
    %c3 = arith.constant 3 : index
    %43 = vector.load %arg1[%c0_18, %c3] : memref<256x4xf32, #tpu.memory_space<vmem>>, vector<256x1xf32>
    %44 = vector.broadcast %43 : vector<256x1xf32> to vector<256x256xf32>
    %45 = vector.broadcast %0 : vector<1x256xf32> to vector<256x256xf32>
    %46 = arith.cmpf ogt, %44, %45 : vector<256x256xf32>
    %47 = vector.broadcast %43 : vector<256x1xf32> to vector<256x256xf32>
    %48 = vector.broadcast %1 : vector<1x256xf32> to vector<256x256xf32>
    %49 = arith.cmpf ole, %47, %48 : vector<256x256xf32>
    %50 = arith.andi %46, %49 : vector<256x256xi1>
    %51 = arith.extui %50 : vector<256x256xi1> to vector<256x256xi32>
    %52 = arith.sitofp %51 : vector<256x256xi32> to vector<256x256xf32>
    %c3_19 = arith.constant 3 : index
    %c0_20 = arith.constant 0 : index
    %c0_21 = arith.constant 0 : index
    %53 = vector.load %arg4[%c3_19, %c0_20, %c0_21] : memref<4x256x128xf32, #tpu.memory_space<vmem>>, vector<1x256x128xf32>
    %54 = vector.shape_cast %53 : vector<1x256x128xf32> to vector<256x128xf32>
    %cst_22 = arith.constant dense<0.000000e+00> : vector<256x128xf32>
    %55 = tpu.matmul %52, %54, %cst_22 {dimension_numbers = #tpu.dot_dimension_numbers<[1], [0], [0], [1], [0, 0, 1, 1], [], []>} : vector<256x256xf32>, vector<256x128xf32>, vector<256x128xf32> -> vector<256x128xf32>
    %56 = arith.addf %42, %55 : vector<256x128xf32>
    %c0_23 = arith.constant 0 : index
    %c0_24 = arith.constant 0 : index
    %57 = vector.load %arg5[%c0_23, %c0_24] : memref<256x128xf32, #tpu.memory_space<vmem>>, vector<256x128xf32>
    tpu.vector_store %arg5[%c0_23, %c0_24], %56 {strides = array<i32>} : memref<256x128xf32, #tpu.memory_space<vmem>>, vector<256x128xf32>,
    return
  }
  func.func @transform_0(%arg0: i32) -> (i32, i32) {
    %c0_i32 = arith.constant 0 : i32
    %c0_i32_0 = arith.constant 0 : i32
    return %arg0, %c0_i32 : i32, i32
  }
  func.func @transform_1(%arg0: i32) -> (i32, i32) {
    %c0_i32 = arith.constant 0 : i32
    %c0_i32_0 = arith.constant 0 : i32
    %c0_i32_1 = arith.constant 0 : i32
    return %c0_i32, %c0_i32_0 : i32, i32
  }
  func.func @transform_2(%arg0: i32) -> (i32, i32) {
    %c0_i32 = arith.constant 0 : i32
    %c0_i32_0 = arith.constant 0 : i32
    %c0_i32_1 = arith.constant 0 : i32
    return %c0_i32, %c0_i32_0 : i32, i32
  }
  func.func @transform_3(%arg0: i32) -> (i32, i32, i32) {
    %c0_i32 = arith.constant 0 : i32
    %c0_i32_0 = arith.constant 0 : i32
    %c0_i32_1 = arith.constant 0 : i32
    %c0_i32_2 = arith.constant 0 : i32
    return %c0_i32, %c0_i32_0, %c0_i32_1 : i32, i32, i32
  }
  func.func @transform_4(%arg0: i32) -> (i32, i32) {
    %c0_i32 = arith.constant 0 : i32
    %c0_i32_0 = arith.constant 0 : i32
    return %arg0, %c0_i32 : i32, i32
  }
}

</mosaic_0001>

<llo_original>
// kernel: quantization_embedding.1
$region0: #{quantization_embedding.1}
  #allocation0 [shape = 'u32[]', space=smem, size = 0x4, offset = 0x4, fixed_abs, tag = 'smem constant byte address 0x4 - core index']
  #allocation1 [shape = 'u32[144,128]{1,0:T(1,128)}', space=vmem, size = 0x12000, scoped, tag = 'internal scratch']
  %s0 = inlined_call_operand.vmem [shape: f32[512,4], index: 0, kind: input, shape index: {}]
  %s1 = inlined_call_operand.vmem [shape: f32[1,256], index: 1, kind: input, shape index: {}]
  %s2 = inlined_call_operand.vmem [shape: f32[1,256], index: 2, kind: input, shape index: {}]
  %s3 = inlined_call_operand.vmem [shape: f32[4,256,128], index: 3, kind: input, shape index: {}]
  %s4 = inlined_call_operand.vmem [shape: f32[512,128], index: 4, kind: output, shape index: {}]
  %s5 = sld [smem:[#allocation0]]
  $region49: #{quantization_embedding.1} parent=0
    _
  %s7 = ssub.s32 1, %s5
  %s8 = scalar_select 0, %s7, %s5
  loop: start=0, step=1, limit=4
  $region2: #{quantization_embedding.1} parent=0 // loop_pre_header
    _
  $region3: #{quantization_embedding.1} parent=0 // loop_header
    %s10 = sphi 0, %s14
    %p11 = scmp.ge.s32.totalorder %s10, 4
    %s20 = sphi 0, %s22
    %s23 = sphi 0, %s20
    %s24 = sphi 0, %s23
    %s40 = sphi 0, %s24
    %s44 = sphi 0, %s44
    %s46 = sphi 0, %s44
    %s47 = sphi 0, %s46
    %s61 = sphi 0, %s47
    %s65 = sphi 0, %s65
    %s67 = sphi 0, %s65
    %s68 = sphi 0, %s67
    %s82 = sphi 0, %s68
    %s86 = sphi 0, %s86
    %s88 = sphi 0, %s86
    %s89 = sphi 0, %s88
    %s103 = sphi 0, %s89
    %s109 = sphi 0, %s111
    %s112 = sphi 0, %s109
    %s113 = sphi 0, %s112
    %s129 = sphi 0, %s113
  $region4: #{quantization_embedding.1} parent=0 // loop_header_branch
    %13 = sbr.rel (%p11) target = $region8
  $region5: #{quantization_embedding.1} parent=0 // loop_body
    %s15 = ssub.s32 %s10, 1
    %s16 = ssub.s32 %s10, 2
    %s17 = sadd.s32 %s10, 1
    %s18 = ssub.s32 %s10, %s17
    %p19 = scmp.eq.s32.totalorder %s18, 0
    %s21 = sadd.s32 %s20, 1
    %s22 = scalar_select %p19, %s20, %s21
    %p25 = pneg %p19
    %p26 = scmp.eq.s32.totalorder %s10, 1
    %p27 = por %p25, %p26
    %p28 = scmp.ne.s32.totalorder %s20, %s23
    %p29 = scmp.eq.s32.totalorder %s10, 0
    %p30 = por %p28, %p29
    %p31 = scmp.ne.s32.totalorder %s20, %s23
    %p32 = scmp.eq.s32.totalorder %s15, 1
    %p33 = por %p31, %p32
    %p34 = scmp.ne.s32.totalorder %s23, %s24
    %p35 = scmp.eq.s32.totalorder %s15, 0
    %p36 = por %p34, %p35
    %p37 = scmp.ne.s32.totalorder %s23, %s24
    %p38 = scmp.eq.s32.totalorder %s16, 1
    %p39 = por %p37, %p38
    %p41 = scmp.ne.s32.totalorder %s24, %s40
    %p42 = scmp.eq.s32.totalorder %s16, 0
    %p43 = por %p41, %p42
    %s45 = sadd.s32 %s44, 1
    %p48 = scmp.eq.s32.totalorder %s10, 1
    %p49 = scmp.ne.s32.totalorder %s44, %s46
    %p50 = scmp.eq.s32.totalorder %s10, 0
    %p51 = por %p49, %p50
    %p52 = scmp.ne.s32.totalorder %s44, %s46
    %p53 = scmp.eq.s32.totalorder %s15, 1
    %p54 = por %p52, %p53
    %p55 = scmp.ne.s32.totalorder %s46, %s47
    %p56 = scmp.eq.s32.totalorder %s15, 0
    %p57 = por %p55, %p56
    %p58 = scmp.ne.s32.totalorder %s46, %s47
    %p59 = scmp.eq.s32.totalorder %s16, 1
    %p60 = por %p58, %p59
    %p62 = scmp.ne.s32.totalorder %s47, %s61
    %p63 = scmp.eq.s32.totalorder %s16, 0
    %p64 = por %p62, %p63
    %s66 = sadd.s32 %s65, 1
    %p69 = scmp.eq.s32.totalorder %s10, 1
    %p70 = scmp.ne.s32.totalorder %s65, %s67
    %p71 = scmp.eq.s32.totalorder %s10, 0
    %p72 = por %p70, %p71
    %p73 = scmp.ne.s32.totalorder %s65, %s67
    %p74 = scmp.eq.s32.totalorder %s15, 1
    %p75 = por %p73, %p74
    %p76 = scmp.ne.s32.totalorder %s67, %s68
    %p77 = scmp.eq.s32.totalorder %s15, 0
    %p78 = por %p76, %p77
    %p79 = scmp.ne.s32.totalorder %s67, %s68
    %p80 = scmp.eq.s32.totalorder %s16, 1
    %p81 = por %p79, %p80
    %p83 = scmp.ne.s32.totalorder %s68, %s82
    %p84 = scmp.eq.s32.totalorder %s16, 0
    %p85 = por %p83, %p84
    %s87 = sadd.s32 %s86, 1
    %p90 = scmp.eq.s32.totalorder %s10, 1
    %p91 = scmp.ne.s32.totalorder %s86, %s88
    %p92 = scmp.eq.s32.totalorder %s10, 0
    %p93 = por %p91, %p92
    %p94 = scmp.ne.s32.totalorder %s86, %s88
    %p95 = scmp.eq.s32.totalorder %s15, 1
    %p96 = por %p94, %p95
    %p97 = scmp.ne.s32.totalorder %s88, %s89
    %p98 = scmp.eq.s32.totalorder %s15, 0
    %p99 = por %p97, %p98
    %p100 = scmp.ne.s32.totalorder %s88, %s89
    %p101 = scmp.eq.s32.totalorder %s16, 1
    %p102 = por %p100, %p101
    %p104 = scmp.ne.s32.totalorder %s89, %s103
    %p105 = scmp.eq.s32.totalorder %s16, 0
    %p106 = por %p104, %p105
    %s107 = ssub.s32 %s10, %s17
    %p108 = scmp.eq.s32.totalorder %s107, 0
    %s110 = sadd.s32 %s109, 1
    %s111 = scalar_select %p108, %s109, %s110
    %p114 = pneg %p108
    %p115 = scmp.eq.s32.totalorder %s10, 1
    %p116 = por %p114, %p115
    %p117 = scmp.ne.s32.totalorder %s109, %s112
    %p118 = scmp.eq.s32.totalorder %s10, 0
    %p119 = por %p117, %p118
    %p120 = scmp.ne.s32.totalorder %s109, %s112
    %p121 = scmp.eq.s32.totalorder %s15, 1
    %p122 = por %p120, %p121
    %p123 = scmp.ne.s32.totalorder %s112, %s113
    %p124 = scmp.eq.s32.totalorder %s15, 0
    %p125 = por %p123, %p124
    %p126 = scmp.ne.s32.totalorder %s112, %s113
    %p127 = scmp.eq.s32.totalorder %s16, 1
    %p128 = por %p126, %p127
    %p130 = scmp.ne.s32.totalorder %s113, %s129
    %p131 = scmp.eq.s32.totalorder %s16, 0
    %p132 = por %p130, %p131
    %p133 = scmp.le.s32.totalorder 1, %s10
    %p134 = scmp.lt.s32.totalorder %s10, 3
    %p135 = pnand %p133, %p134
    %p136 = pneg %p135
    // Predicated region
    $region9: #{quantization_embedding.1} parent=5 // pred_check
      _
    $region10: #{quantization_embedding.1} parent=5 // pred_check_branch
      %138 = sbr.rel (%p135) target = $region12
    $region11: #{quantization_embedding.1} parent=5 // pred_region
      %s139 = ssub.s32 %s10, 1
      // Predicated region
      $region13: #{quantization_embedding.1} parent=11 // pred_check
        %p140 = pneg %p57
      $region14: #{quantization_embedding.1} parent=11 // pred_check_branch
        %142 = sbr.rel (%p140) target = $region16
      $region15: #{quantization_embedding.1} parent=11 // pred_region
        _
      $region16: #{quantization_embedding.1} parent=11 // pred_fallthru
        _
      // Predicated region
      $region17: #{quantization_embedding.1} parent=11 // pred_check
        %p143 = pneg %p78
      $region18: #{quantization_embedding.1} parent=11 // pred_check_branch
        %145 = sbr.rel (%p143) target = $region20
      $region19: #{quantization_embedding.1} parent=11 // pred_region
        _
      $region20: #{quantization_embedding.1} parent=11 // pred_fallthru
        _
      // Predicated region
      $region21: #{quantization_embedding.1} parent=11 // pred_check
        %p146 = pneg %p99
      $region22: #{quantization_embedding.1} parent=11 // pred_check_branch
        %148 = sbr.rel (%p146) target = $region24
      $region23: #{quantization_embedding.1} parent=11 // pred_region
        _
      $region24: #{quantization_embedding.1} parent=11 // pred_fallthru
        _
    $region12: #{quantization_embedding.1} parent=5 // pred_fallthru
      _
    %p149 = scmp.lt.s32.totalorder %s10, 2
    // Predicated region
    $region25: #{quantization_embedding.1} parent=5 // pred_check
      %p150 = pneg %p149
    $region26: #{quantization_embedding.1} parent=5 // pred_check_branch
      %152 = sbr.rel (%p150) target = $region28
    $region27: #{quantization_embedding.1} parent=5 // pred_region
      // Predicated region
      $region29: #{quantization_embedding.1} parent=27 // pred_check
        %p153 = pneg %p30
      $region30: #{quantization_embedding.1} parent=27 // pred_check_branch
        %155 = sbr.rel (%p153) target = $region32
      $region31: #{quantization_embedding.1} parent=27 // pred_region
        %s156 = smul.u32 32, %s10
        %p157 = scmp.lt.s32.totalorder %s156, 63
        %s158 = scalar_select %p157, %s156, 63
        %s159 = smul.addr %s158, 8
        %s160 = scalar_lea.vmem %s0, %s159
        %s161 = smul.u32 32, %s10
      $region32: #{quantization_embedding.1} parent=27 // pred_fallthru
        _
    $region28: #{quantization_embedding.1} parent=5 // pred_fallthru
      _
    %p162 = scmp.le.s32.totalorder 1, %s10
    %p163 = scmp.lt.s32.totalorder %s10, 3
    %p164 = pnand %p162, %p163
    %p165 = pneg %p164
    // Predicated region
    $region33: #{quantization_embedding.1} parent=5 // pred_check
      _
    $region34: #{quantization_embedding.1} parent=5 // pred_check_branch
      %167 = sbr.rel (%p164) target = $region36
    $region35: #{quantization_embedding.1} parent=5 // pred_region
      %s168 = ssub.s32 %s10, 1
      %s169 = smul.u32 32, %s15
      %p170 = scmp.lt.s32.totalorder %s169, 63
      %s171 = scalar_select %p170, %s169, 63
      %s172 = smul.addr %s171, 8
      %s173 = scalar_lea.vmem %s0, %s172
      %p174 = pneg %p36
      %p175 = pneg %p33
      %p176 = pneg %p57
      %p177 = pneg %p54
      %p178 = pneg %p78
      %p179 = pneg %p75
      %p180 = pneg %p99
      %p181 = pneg %p96
      %p182 = pneg %p125
      %p183 = pneg %p122
      %s184 = smul.u32 32, %s15
      %p185 = scmp.lt.s32.totalorder %s184, 63
      %s186 = scalar_select %p185, %s184, 63
      %s187 = smul.addr %s186, 8
      %s188 = scalar_lea.vmem %s4, %s187
      %s189 = smul.u32 32, %s15
      %p190 = scmp.lt.s32.totalorder %s189, 63
      %s191 = scalar_select %p190, %s189, 63
      %s192 = smul.addr %s191, 8
      %s193 = scalar_lea.vmem %s0, %s192
      %s194 = smul.u32 32, %s15
      %s195 = smul.u32 32, %s15
      %p196 = scmp.lt.s32.totalorder %s195, 63
      %s197 = scalar_select %p196, %s195, 63
      %s198 = smul.addr %s197, 8
      %s199 = scalar_lea.vmem %s4, %s198
      %s200 = smul.u32 32, %s15
      %v201 = vld [vmem:[%s1] sm:$0x3]
      %v202 = vld [vmem:[%s2] sm:$0x3]
      %v203 = vld [vmem:[%s193] sm:$0xff]
      %v204 = vld [vmem:[%s193 + $0x8] sm:$0xff]
      %v205 = vld [vmem:[%s193 + $0x10] sm:$0xff]
      %v206 = vld [vmem:[%s193 + $0x18] sm:$0xff]
      %v207 = vld [vmem:[%s193 + $0x20] sm:$0xff]
      %v208 = vld [vmem:[%s193 + $0x28] sm:$0xff]
      %v209 = vld [vmem:[%s193 + $0x30] sm:$0xff]
      %v210 = vld [vmem:[%s193 + $0x38] sm:$0xff]
      %v211 = vld [vmem:[%s193 + $0x40] sm:$0xff]
      %v212 = vld [vmem:[%s193 + $0x48] sm:$0xff]
      %v213 = vld [vmem:[%s193 + $0x50] sm:$0xff]
      %v214 = vld [vmem:[%s193 + $0x58] sm:$0xff]
      %v215 = vld [vmem:[%s193 + $0x60] sm:$0xff]
      %v216 = vld [vmem:[%s193 + $0x68] sm:$0xff]
      %v217 = vld [vmem:[%s193 + $0x70] sm:$0xff]
      %v218 = vld [vmem:[%s193 + $0x78] sm:$0xff]
      %v219 = vld [vmem:[%s193 + $0x80] sm:$0xff]
      %v220 = vld [vmem:[%s193 + $0x88] sm:$0xff]
      %v221 = vld [vmem:[%s193 + $0x90] sm:$0xff]
      %v222 = vld [vmem:[%s193 + $0x98] sm:$0xff]
      %v223 = vld [vmem:[%s193 + $0xa0] sm:$0xff]
      %v224 = vld [vmem:[%s193 + $0xa8] sm:$0xff]
      %v225 = vld [vmem:[%s193 + $0xb0] sm:$0xff]
      %v226 = vld [vmem:[%s193 + $0xb8] sm:$0xff]
      %v227 = vld [vmem:[%s193 + $0xc0] sm:$0xff]
      %v228 = vld [vmem:[%s193 + $0xc8] sm:$0xff]
      %v229 = vld [vmem:[%s193 + $0xd0] sm:$0xff]
      %v230 = vld [vmem:[%s193 + $0xd8] sm:$0xff]
      %v231 = vld [vmem:[%s193 + $0xe0] sm:$0xff]
      %v232 = vld [vmem:[%s193 + $0xe8] sm:$0xff]
      %v233 = vld [vmem:[%s193 + $0xf0] sm:$0xff]
      %v234 = vld [vmem:[%s193 + $0xf8] sm:$0xff]
      %236 = vset.pattern.permute.xlu0 0
      %237 = vperm.xlu0 %236, %v203
      %v238 = vpop.permute.xlu0 %237
      %241 = vset.pattern.permute.xlu0 0
      %242 = vperm.xlu0 %241, %v204
      %v243 = vpop.permute.xlu0 %242
      %246 = vset.pattern.permute.xlu0 0
      %247 = vperm.xlu0 %246, %v205
      %v248 = vpop.permute.xlu0 %247
      %251 = vset.pattern.permute.xlu0 0
      %252 = vperm.xlu0 %251, %v206
      %v253 = vpop.permute.xlu0 %252
      %256 = vset.pattern.permute.xlu0 0
      %257 = vperm.xlu0 %256, %v207
      %v258 = vpop.permute.xlu0 %257
      %261 = vset.pattern.permute.xlu0 0
      %262 = vperm.xlu0 %261, %v208
      %v263 = vpop.permute.xlu0 %262
      %266 = vset.pattern.permute.xlu0 0
      %267 = vperm.xlu0 %266, %v209
      %v268 = vpop.permute.xlu0 %267
      %271 = vset.pattern.permute.xlu0 0
      %272 = vperm.xlu0 %271, %v210
      %v273 = vpop.permute.xlu0 %272
      %276 = vset.pattern.permute.xlu0 0
      %277 = vperm.xlu0 %276, %v211
      %v278 = vpop.permute.xlu0 %277
      %281 = vset.pattern.permute.xlu0 0
      %282 = vperm.xlu0 %281, %v212
      %v283 = vpop.permute.xlu0 %282
      %286 = vset.pattern.permute.xlu0 0
      %287 = vperm.xlu0 %286, %v213
      %v288 = vpop.permute.xlu0 %287
      %291 = vset.pattern.permute.xlu0 0
      %292 = vperm.xlu0 %291, %v214
      %v293 = vpop.permute.xlu0 %292
      %296 = vset.pattern.permute.xlu0 0
      %297 = vperm.xlu0 %296, %v215
      %v298 = vpop.permute.xlu0 %297
      %301 = vset.pattern.permute.xlu0 0
      %302 = vperm.xlu0 %301, %v216
      %v303 = vpop.permute.xlu0 %302
      %306 = vset.pattern.permute.xlu0 0
      %307 = vperm.xlu0 %306, %v217
      %v308 = vpop.permute.xlu0 %307
      %311 = vset.pattern.permute.xlu0 0
      %312 = vperm.xlu0 %311, %v218
      %v313 = vpop.permute.xlu0 %312
      %316 = vset.pattern.permute.xlu0 0
      %317 = vperm.xlu0 %316, %v219
      %v318 = vpop.permute.xlu0 %317
      %321 = vset.pattern.permute.xlu0 0
      %322 = vperm.xlu0 %321, %v220
      %v323 = vpop.permute.xlu0 %322
      %326 = vset.pattern.permute.xlu0 0
      %327 = vperm.xlu0 %326, %v221
      %v328 = vpop.permute.xlu0 %327
      %331 = vset.pattern.permute.xlu0 0
      %332 = vperm.xlu0 %331, %v222
      %v333 = vpop.permute.xlu0 %332
      %336 = vset.pattern.permute.xlu0 0
      %337 = vperm.xlu0 %336, %v223
      %v338 = vpop.permute.xlu0 %337
      %341 = vset.pattern.permute.xlu0 0
      %342 = vperm.xlu0 %341, %v224
      %v343 = vpop.permute.xlu0 %342
      %346 = vset.pattern.permute.xlu0 0
      %347 = vperm.xlu0 %346, %v225
      %v348 = vpop.permute.xlu0 %347
      %351 = vset.pattern.permute.xlu0 0
      %352 = vperm.xlu0 %351, %v226
      %v353 = vpop.permute.xlu0 %352
      %356 = vset.pattern.permute.xlu0 0
      %357 = vperm.xlu0 %356, %v227
      %v358 = vpop.permute.xlu0 %357
      %361 = vset.pattern.permute.xlu0 0
      %362 = vperm.xlu0 %361, %v228
      %v363 = vpop.permute.xlu0 %362
      %366 = vset.pattern.permute.xlu0 0
      %367 = vperm.xlu0 %366, %v229
      %v368 = vpop.permute.xlu0 %367
      %371 = vset.pattern.permute.xlu0 0
      %372 = vperm.xlu0 %371, %v230
      %v373 = vpop.permute.xlu0 %372
      %376 = vset.pattern.permute.xlu0 0
      %377 = vperm.xlu0 %376, %v231
      %v378 = vpop.permute.xlu0 %377
      %381 = vset.pattern.permute.xlu0 0
      %382 = vperm.xlu0 %381, %v232
      %v383 = vpop.permute.xlu0 %382
      %386 = vset.pattern.permute.xlu0 0
      %387 = vperm.xlu0 %386, %v233
      %v388 = vpop.permute.xlu0 %387
      %391 = vset.pattern.permute.xlu0 0
      %392 = vperm.xlu0 %391, %v234
      %v393 = vpop.permute.xlu0 %392
      %v396 = vlaneseq
      %v397 = vshrl.u32 %v396, 7
      %v398 = vsub.s32 0, %v397
      %v399 = vrot.slane %v201, %v398
      %v400 = vlaneseq
      %v401 = vshrl.u32 %v400, 7
      %v402 = vsub.s32 1, %v401
      %v403 = vrot.slane %v201, %v402
      %vm406 = vcmp.gt.f32.partialorder %v238, %v399
      %vm407 = vcmp.gt.f32.partialorder %v238, %v403
      %vm408 = vcmp.gt.f32.partialorder %v243, %v399
      %vm409 = vcmp.gt.f32.partialorder %v243, %v403
      %vm410 = vcmp.gt.f32.partialorder %v248, %v399
      %vm411 = vcmp.gt.f32.partialorder %v248, %v403
      %vm412 = vcmp.gt.f32.partialorder %v253, %v399
      %vm413 = vcmp.gt.f32.partialorder %v253, %v403
      %vm414 = vcmp.gt.f32.partialorder %v258, %v399
      %vm415 = vcmp.gt.f32.partialorder %v258, %v403
      %vm416 = vcmp.gt.f32.partialorder %v263, %v399
      %vm417 = vcmp.gt.f32.partialorder %v263, %v403
      %vm418 = vcmp.gt.f32.partialorder %v268, %v399
      %vm419 = vcmp.gt.f32.partialorder %v268, %v403
      %vm420 = vcmp.gt.f32.partialorder %v273, %v399
      %vm421 = vcmp.gt.f32.partialorder %v273, %v403
      %vm422 = vcmp.gt.f32.partialorder %v278, %v399
      %vm423 = vcmp.gt.f32.partialorder %v278, %v403
      %vm424 = vcmp.gt.f32.partialorder %v283, %v399
      %vm425 = vcmp.gt.f32.partialorder %v283, %v403
      %vm426 = vcmp.gt.f32.partialorder %v288, %v399
      %vm427 = vcmp.gt.f32.partialorder %v288, %v403
      %vm428 = vcmp.gt.f32.partialorder %v293, %v399
      %vm429 = vcmp.gt.f32.partialorder %v293, %v403
      %vm430 = vcmp.gt.f32.partialorder %v298, %v399
      %vm431 = vcmp.gt.f32.partialorder %v298, %v403
      %vm432 = vcmp.gt.f32.partialorder %v303, %v399
      %vm433 = vcmp.gt.f32.partialorder %v303, %v403
      %vm434 = vcmp.gt.f32.partialorder %v308, %v399
      %vm435 = vcmp.gt.f32.partialorder %v308, %v403
      %vm436 = vcmp.gt.f32.partialorder %v313, %v399
      %vm437 = vcmp.gt.f32.partialorder %v313, %v403
      %vm438 = vcmp.gt.f32.partialorder %v318, %v399
      %vm439 = vcmp.gt.f32.partialorder %v318, %v403
      %vm440 = vcmp.gt.f32.partialorder %v323, %v399
      %vm441 = vcmp.gt.f32.partialorder %v323, %v403
      %vm442 = vcmp.gt.f32.partialorder %v328, %v399
      %vm443 = vcmp.gt.f32.partialorder %v328, %v403
      %vm444 = vcmp.gt.f32.partialorder %v333, %v399
      %vm445 = vcmp.gt.f32.partialorder %v333, %v403
      %vm446 = vcmp.gt.f32.partialorder %v338, %v399
      %vm447 = vcmp.gt.f32.partialorder %v338, %v403
      %vm448 = vcmp.gt.f32.partialorder %v343, %v399
      %vm449 = vcmp.gt.f32.partialorder %v343, %v403
      %vm450 = vcmp.gt.f32.partialorder %v348, %v399
      %vm451 = vcmp.gt.f32.partialorder %v348, %v403
      %vm452 = vcmp.gt.f32.partialorder %v353, %v399
      %vm453 = vcmp.gt.f32.partialorder %v353, %v403
      %vm454 = vcmp.gt.f32.partialorder %v358, %v399
      %vm455 = vcmp.gt.f32.partialorder %v358, %v403
      %vm456 = vcmp.gt.f32.partialorder %v363, %v399
      %vm457 = vcmp.gt.f32.partialorder %v363, %v403
      %vm458 = vcmp.gt.f32.partialorder %v368, %v399
      %vm459 = vcmp.gt.f32.partialorder %v368, %v403
      %vm460 = vcmp.gt.f32.partialorder %v373, %v399
      %vm461 = vcmp.gt.f32.partialorder %v373, %v403
      %vm462 = vcmp.gt.f32.partialorder %v378, %v399
      %vm463 = vcmp.gt.f32.partialorder %v378, %v403
      %vm464 = vcmp.gt.f32.partialorder %v383, %v399
      %vm465 = vcmp.gt.f32.partialorder %v383, %v403
      %vm466 = vcmp.gt.f32.partialorder %v388, %v399
      %vm467 = vcmp.gt.f32.partialorder %v388, %v403
      %vm468 = vcmp.gt.f32.partialorder %v393, %v399
      %vm469 = vcmp.gt.f32.partialorder %v393, %v403
      %v471 = vlaneseq
      %v472 = vshrl.u32 %v471, 7
      %v473 = vsub.s32 0, %v472
      %v474 = vrot.slane %v202, %v473
      %v475 = vlaneseq
      %v476 = vshrl.u32 %v475, 7
      %v477 = vsub.s32 1, %v476
      %v478 = vrot.slane %v202, %v477
      %vm481 = vcmp.le.f32.partialorder %v238, %v474
      %vm482 = vcmp.le.f32.partialorder %v238, %v478
      %vm483 = vcmp.le.f32.partialorder %v243, %v474
      %vm484 = vcmp.le.f32.partialorder %v243, %v478
      %vm485 = vcmp.le.f32.partialorder %v248, %v474
      %vm486 = vcmp.le.f32.partialorder %v248, %v478
      %vm487 = vcmp.le.f32.partialorder %v253, %v474
      %vm488 = vcmp.le.f32.partialorder %v253, %v478
      %vm489 = vcmp.le.f32.partialorder %v258, %v474
      %vm490 = vcmp.le.f32.partialorder %v258, %v478
      %vm491 = vcmp.le.f32.partialorder %v263, %v474
      %vm492 = vcmp.le.f32.partialorder %v263, %v478
      %vm493 = vcmp.le.f32.partialorder %v268, %v474
      %vm494 = vcmp.le.f32.partialorder %v268, %v478
      %vm495 = vcmp.le.f32.partialorder %v273, %v474
      %vm496 = vcmp.le.f32.partialorder %v273, %v478
      %vm497 = vcmp.le.f32.partialorder %v278, %v474
      %vm498 = vcmp.le.f32.partialorder %v278, %v478
      %vm499 = vcmp.le.f32.partialorder %v283, %v474
      %vm500 = vcmp.le.f32.partialorder %v283, %v478
      %vm501 = vcmp.le.f32.partialorder %v288, %v474
      %vm502 = vcmp.le.f32.partialorder %v288, %v478
      %vm503 = vcmp.le.f32.partialorder %v293, %v474
      %vm504 = vcmp.le.f32.partialorder %v293, %v478
      %vm505 = vcmp.le.f32.partialorder %v298, %v474
      %vm506 = vcmp.le.f32.partialorder %v298, %v478
      %vm507 = vcmp.le.f32.partialorder %v303, %v474
      %vm508 = vcmp.le.f32.partialorder %v303, %v478
      %vm509 = vcmp.le.f32.partialorder %v308, %v474
      %vm510 = vcmp.le.f32.partialorder %v308, %v478
      %vm511 = vcmp.le.f32.partialorder %v313, %v474
      %vm512 = vcmp.le.f32.partialorder %v313, %v478
      %vm513 = vcmp.le.f32.partialorder %v318, %v474
      %vm514 = vcmp.le.f32.partialorder %v318, %v478
      %vm515 = vcmp.le.f32.partialorder %v323, %v474
      %vm516 = vcmp.le.f32.partialorder %v323, %v478
      %vm517 = vcmp.le.f32.partialorder %v328, %v474
      %vm518 = vcmp.le.f32.partialorder %v328, %v478
      %vm519 = vcmp.le.f32.partialorder %v333, %v474
      %vm520 = vcmp.le.f32.partialorder %v333, %v478
      %vm521 = vcmp.le.f32.partialorder %v338, %v474
      %vm522 = vcmp.le.f32.partialorder %v338, %v478
      %vm523 = vcmp.le.f32.partialorder %v343, %v474
      %vm524 = vcmp.le.f32.partialorder %v343, %v478
      %vm525 = vcmp.le.f32.partialorder %v348, %v474
      %vm526 = vcmp.le.f32.partialorder %v348, %v478
      %vm527 = vcmp.le.f32.partialorder %v353, %v474
      %vm528 = vcmp.le.f32.partialorder %v353, %v478
      %vm529 = vcmp.le.f32.partialorder %v358, %v474
      %vm530 = vcmp.le.f32.partialorder %v358, %v478
      %vm531 = vcmp.le.f32.partialorder %v363, %v474
      %vm532 = vcmp.le.f32.partialorder %v363, %v478
      %vm533 = vcmp.le.f32.partialorder %v368, %v474
      %vm534 = vcmp.le.f32.partialorder %v368, %v478
      %vm535 = vcmp.le.f32.partialorder %v373, %v474
      %vm536 = vcmp.le.f32.partialorder %v373, %v478
      %vm537 = vcmp.le.f32.partialorder %v378, %v474
      %vm538 = vcmp.le.f32.partialorder %v378, %v478
      %vm539 = vcmp.le.f32.partialorder %v383, %v474
      %vm540 = vcmp.le.f32.partialorder %v383, %v478
      %vm541 = vcmp.le.f32.partialorder %v388, %v474
      %vm542 = vcmp.le.f32.partialorder %v388, %v478
      %vm543 = vcmp.le.f32.partialorder %v393, %v474
      %vm544 = vcmp.le.f32.partialorder %v393, %v478
      %vm545 = vmand %vm406, %vm481
      %vm546 = vmand %vm407, %vm482
      %vm547 = vmand %vm408, %vm483
      %vm548 = vmand %vm409, %vm484
      %vm549 = vmand %vm410, %vm485
      %vm550 = vmand %vm411, %vm486
      %vm551 = vmand %vm412, %vm487
      %vm552 = vmand %vm413, %vm488
      %vm553 = vmand %vm414, %vm489
      %vm554 = vmand %vm415, %vm490
      %vm555 = vmand %vm416, %vm491
      %vm556 = vmand %vm417, %vm492
      %vm557 = vmand %vm418, %vm493
      %vm558 = vmand %vm419, %vm494
      %vm559 = vmand %vm420, %vm495
      %vm560 = vmand %vm421, %vm496
      %vm561 = vmand %vm422, %vm497
      %vm562 = vmand %vm423, %vm498
      %vm563 = vmand %vm424, %vm499
      %vm564 = vmand %vm425, %vm500
      %vm565 = vmand %vm426, %vm501
      %vm566 = vmand %vm427, %vm502
      %vm567 = vmand %vm428, %vm503
      %vm568 = vmand %vm429, %vm504
      %vm569 = vmand %vm430, %vm505
      %vm570 = vmand %vm431, %vm506
      %vm571 = vmand %vm432, %vm507
      %vm572 = vmand %vm433, %vm508
      %vm573 = vmand %vm434, %vm509
      %vm574 = vmand %vm435, %vm510
      %vm575 = vmand %vm436, %vm511
      %vm576 = vmand %vm437, %vm512
      %vm577 = vmand %vm438, %vm513
      %vm578 = vmand %vm439, %vm514
      %vm579 = vmand %vm440, %vm515
      %vm580 = vmand %vm441, %vm516
      %vm581 = vmand %vm442, %vm517
      %vm582 = vmand %vm443, %vm518
      %vm583 = vmand %vm444, %vm519
      %vm584 = vmand %vm445, %vm520
      %vm585 = vmand %vm446, %vm521
      %vm586 = vmand %vm447, %vm522
      %vm587 = vmand %vm448, %vm523
      %vm588 = vmand %vm449, %vm524
      %vm589 = vmand %vm450, %vm525
      %vm590 = vmand %vm451, %vm526
      %vm591 = vmand %vm452, %vm527
      %vm592 = vmand %vm453, %vm528
      %vm593 = vmand %vm454, %vm529
      %vm594 = vmand %vm455, %vm530
      %vm595 = vmand %vm456, %vm531
      %vm596 = vmand %vm457, %vm532
      %vm597 = vmand %vm458, %vm533
      %vm598 = vmand %vm459, %vm534
      %vm599 = vmand %vm460, %vm535
      %vm600 = vmand %vm461, %vm536
      %vm601 = vmand %vm462, %vm537
      %vm602 = vmand %vm463, %vm538
      %vm603 = vmand %vm464, %vm539
      %vm604 = vmand %vm465, %vm540
      %vm605 = vmand %vm466, %vm541
      %vm606 = vmand %vm467, %vm542
      %vm607 = vmand %vm468, %vm543
      %vm608 = vmand %vm469, %vm544
      %v609 = vsel %vm545, 1, 0
      %v610 = vsel %vm546, 1, 0
      %v611 = vsel %vm547, 1, 0
      %v612 = vsel %vm548, 1, 0
      %v613 = vsel %vm549, 1, 0
      %v614 = vsel %vm550, 1, 0
      %v615 = vsel %vm551, 1, 0
      %v616 = vsel %vm552, 1, 0
      %v617 = vsel %vm553, 1, 0
      %v618 = vsel %vm554, 1, 0
      %v619 = vsel %vm555, 1, 0
      %v620 = vsel %vm556, 1, 0
      %v621 = vsel %vm557, 1, 0
      %v622 = vsel %vm558, 1, 0
      %v623 = vsel %vm559, 1, 0
      %v624 = vsel %vm560, 1, 0
      %v625 = vsel %vm561, 1, 0
      %v626 = vsel %vm562, 1, 0
      %v627 = vsel %vm563, 1, 0
      %v628 = vsel %vm564, 1, 0
      %v629 = vsel %vm565, 1, 0
      %v630 = vsel %vm566, 1, 0
      %v631 = vsel %vm567, 1, 0
      %v632 = vsel %vm568, 1, 0
      %v633 = vsel %vm569, 1, 0
      %v634 = vsel %vm570, 1, 0
      %v635 = vsel %vm571, 1, 0
      %v636 = vsel %vm572, 1, 0
      %v637 = vsel %vm573, 1, 0
      %v638 = vsel %vm574, 1, 0
      %v639 = vsel %vm575, 1, 0
      %v640 = vsel %vm576, 1, 0
      %v641 = vsel %vm577, 1, 0
      %v642 = vsel %vm578, 1, 0
      %v643 = vsel %vm579, 1, 0
      %v644 = vsel %vm580, 1, 0
      %v645 = vsel %vm581, 1, 0
      %v646 = vsel %vm582, 1, 0
      %v647 = vsel %vm583, 1, 0
      %v648 = vsel %vm584, 1, 0
      %v649 = vsel %vm585, 1, 0
      %v650 = vsel %vm586, 1, 0
      %v651 = vsel %vm587, 1, 0
      %v652 = vsel %vm588, 1, 0
      %v653 = vsel %vm589, 1, 0
      %v654 = vsel %vm590, 1, 0
      %v655 = vsel %vm591, 1, 0
      %v656 = vsel %vm592, 1, 0
      %v657 = vsel %vm593, 1, 0
      %v658 = vsel %vm594, 1, 0
      %v659 = vsel %vm595, 1, 0
      %v660 = vsel %vm596, 1, 0
      %v661 = vsel %vm597, 1, 0
      %v662 = vsel %vm598, 1, 0
      %v663 = vsel %vm599, 1, 0
      %v664 = vsel %vm600, 1, 0
      %v665 = vsel %vm601, 1, 0
      %v666 = vsel %vm602, 1, 0
      %v667 = vsel %vm603, 1, 0
      %v668 = vsel %vm604, 1, 0
      %v669 = vsel %vm605, 1, 0
      %v670 = vsel %vm606, 1, 0
      %v671 = vsel %vm607, 1, 0
      %v672 = vsel %vm608, 1, 0
      %v673 = vcvt.s32.f32 %v609
      %v674 = vcvt.s32.f32 %v610
      %v675 = vcvt.s32.f32 %v611
      %v676 = vcvt.s32.f32 %v612
      %v677 = vcvt.s32.f32 %v613
      %v678 = vcvt.s32.f32 %v614
      %v679 = vcvt.s32.f32 %v615
      %v680 = vcvt.s32.f32 %v616
      %v681 = vcvt.s32.f32 %v617
      %v682 = vcvt.s32.f32 %v618
      %v683 = vcvt.s32.f32 %v619
      %v684 = vcvt.s32.f32 %v620
      %v685 = vcvt.s32.f32 %v621
      %v686 = vcvt.s32.f32 %v622
      %v687 = vcvt.s32.f32 %v623
      %v688 = vcvt.s32.f32 %v624
      %v689 = vcvt.s32.f32 %v625
      %v690 = vcvt.s32.f32 %v626
      %v691 = vcvt.s32.f32 %v627
      %v692 = vcvt.s32.f32 %v628
      %v693 = vcvt.s32.f32 %v629
      %v694 = vcvt.s32.f32 %v630
      %v695 = vcvt.s32.f32 %v631
      %v696 = vcvt.s32.f32 %v632
      %v697 = vcvt.s32.f32 %v633
      %v698 = vcvt.s32.f32 %v634
      %v699 = vcvt.s32.f32 %v635
      %v700 = vcvt.s32.f32 %v636
      %v701 = vcvt.s32.f32 %v637
      %v702 = vcvt.s32.f32 %v638
      %v703 = vcvt.s32.f32 %v639
      %v704 = vcvt.s32.f32 %v640
      %v705 = vcvt.s32.f32 %v641
      %v706 = vcvt.s32.f32 %v642
      %v707 = vcvt.s32.f32 %v643
      %v708 = vcvt.s32.f32 %v644
      %v709 = vcvt.s32.f32 %v645
      %v710 = vcvt.s32.f32 %v646
      %v711 = vcvt.s32.f32 %v647
      %v712 = vcvt.s32.f32 %v648
      %v713 = vcvt.s32.f32 %v649
      %v714 = vcvt.s32.f32 %v650
      %v715 = vcvt.s32.f32 %v651
      %v716 = vcvt.s32.f32 %v652
      %v717 = vcvt.s32.f32 %v653
      %v718 = vcvt.s32.f32 %v654
      %v719 = vcvt.s32.f32 %v655
      %v720 = vcvt.s32.f32 %v656
      %v721 = vcvt.s32.f32 %v657
      %v722 = vcvt.s32.f32 %v658
      %v723 = vcvt.s32.f32 %v659
      %v724 = vcvt.s32.f32 %v660
      %v725 = vcvt.s32.f32 %v661
      %v726 = vcvt.s32.f32 %v662
      %v727 = vcvt.s32.f32 %v663
      %v728 = vcvt.s32.f32 %v664
      %v729 = vcvt.s32.f32 %v665
      %v730 = vcvt.s32.f32 %v666
      %v731 = vcvt.s32.f32 %v667
      %v732 = vcvt.s32.f32 %v668
      %v733 = vcvt.s32.f32 %v669
      %v734 = vcvt.s32.f32 %v670
      %v735 = vcvt.s32.f32 %v671
      %v736 = vcvt.s32.f32 %v672
      %v737 = vld [vmem:[%s3] sm:$0xff]
      %v738 = vld [vmem:[%s3 + $0x8] sm:$0xff]
      %v739 = vld [vmem:[%s3 + $0x10] sm:$0xff]
      %v740 = vld [vmem:[%s3 + $0x18] sm:$0xff]
      %v741 = vld [vmem:[%s3 + $0x20] sm:$0xff]
      %v742 = vld [vmem:[%s3 + $0x28] sm:$0xff]
      %v743 = vld [vmem:[%s3 + $0x30] sm:$0xff]
      %v744 = vld [vmem:[%s3 + $0x38] sm:$0xff]
      %v745 = vld [vmem:[%s3 + $0x40] sm:$0xff]
      %v746 = vld [vmem:[%s3 + $0x48] sm:$0xff]
      %v747 = vld [vmem:[%s3 + $0x50] sm:$0xff]
      %v748 = vld [vmem:[%s3 + $0x58] sm:$0xff]
      %v749 = vld [vmem:[%s3 + $0x60] sm:$0xff]
      %v750 = vld [vmem:[%s3 + $0x68] sm:$0xff]
      %v751 = vld [vmem:[%s3 + $0x70] sm:$0xff]
      %v752 = vld [vmem:[%s3 + $0x78] sm:$0xff]
      %v753 = vld [vmem:[%s3 + $0x80] sm:$0xff]
      %v754 = vld [vmem:[%s3 + $0x88] sm:$0xff]
      %v755 = vld [vmem:[%s3 + $0x90] sm:$0xff]
      %v756 = vld [vmem:[%s3 + $0x98] sm:$0xff]
      %v757 = vld [vmem:[%s3 + $0xa0] sm:$0xff]
      %v758 = vld [vmem:[%s3 + $0xa8] sm:$0xff]
      %v759 = vld [vmem:[%s3 + $0xb0] sm:$0xff]
      %v760 = vld [vmem:[%s3 + $0xb8] sm:$0xff]
      %v761 = vld [vmem:[%s3 + $0xc0] sm:$0xff]
      %v762 = vld [vmem:[%s3 + $0xc8] sm:$0xff]
      %v763 = vld [vmem:[%s3 + $0xd0] sm:$0xff]
      %v764 = vld [vmem:[%s3 + $0xd8] sm:$0xff]
      %v765 = vld [vmem:[%s3 + $0xe0] sm:$0xff]
      %v766 = vld [vmem:[%s3 + $0xe8] sm:$0xff]
      %v767 = vld [vmem:[%s3 + $0xf0] sm:$0xff]
      %v768 = vld [vmem:[%s3 + $0xf8] sm:$0xff]
      %769 = vset.pattern.permute.xlu0 1
      %770 = vperm.xlu0 %769, %v203
      %v771 = vpop.permute.xlu0 %770
      %773 = vset.pattern.permute.xlu0 1
      %774 = vperm.xlu0 %773, %v204
      %v775 = vpop.permute.xlu0 %774
      %777 = vset.pattern.permute.xlu0 1
      %778 = vperm.xlu0 %777, %v205
      %v779 = vpop.permute.xlu0 %778
      %781 = vset.pattern.permute.xlu0 1
      %782 = vperm.xlu0 %781, %v206
      %v783 = vpop.permute.xlu0 %782
      %785 = vset.pattern.permute.xlu0 1
      %786 = vperm.xlu0 %785, %v207
      %v787 = vpop.permute.xlu0 %786
      %789 = vset.pattern.permute.xlu0 1
      %790 = vperm.xlu0 %789, %v208
      %v791 = vpop.permute.xlu0 %790
      %793 = vset.pattern.permute.xlu0 1
      %794 = vperm.xlu0 %793, %v209
      %v795 = vpop.permute.xlu0 %794
      %797 = vset.pattern.permute.xlu0 1
      %798 = vperm.xlu0 %797, %v210
      %v799 = vpop.permute.xlu0 %798
      %801 = vset.pattern.permute.xlu0 1
      %802 = vperm.xlu0 %801, %v211
      %v803 = vpop.permute.xlu0 %802
      %805 = vset.pattern.permute.xlu0 1
      %806 = vperm.xlu0 %805, %v212
      %v807 = vpop.permute.xlu0 %806
      %809 = vset.pattern.permute.xlu0 1
      %810 = vperm.xlu0 %809, %v213
      %v811 = vpop.permute.xlu0 %810
      %813 = vset.pattern.permute.xlu0 1
      %814 = vperm.xlu0 %813, %v214
      %v815 = vpop.permute.xlu0 %814
      %817 = vset.pattern.permute.xlu0 1
      %818 = vperm.xlu0 %817, %v215
      %v819 = vpop.permute.xlu0 %818
      %821 = vset.pattern.permute.xlu0 1
      %822 = vperm.xlu0 %821, %v216
      %v823 = vpop.permute.xlu0 %822
      %825 = vset.pattern.permute.xlu0 1
      %826 = vperm.xlu0 %825, %v217
      %v827 = vpop.permute.xlu0 %826
      %829 = vset.pattern.permute.xlu0 1
      %830 = vperm.xlu0 %829, %v218
      %v831 = vpop.permute.xlu0 %830
      %833 = vset.pattern.permute.xlu0 1
      %834 = vperm.xlu0 %833, %v219
      %v835 = vpop.permute.xlu0 %834
      %837 = vset.pattern.permute.xlu0 1
      %838 = vperm.xlu0 %837, %v220
      %v839 = vpop.permute.xlu0 %838
      %841 = vset.pattern.permute.xlu0 1
      %842 = vperm.xlu0 %841, %v221
      %v843 = vpop.permute.xlu0 %842
      %845 = vset.pattern.permute.xlu0 1
      %846 = vperm.xlu0 %845, %v222
      %v847 = vpop.permute.xlu0 %846
      %849 = vset.pattern.permute.xlu0 1
      %850 = vperm.xlu0 %849, %v223
      %v851 = vpop.permute.xlu0 %850
      %853 = vset.pattern.permute.xlu0 1
      %854 = vperm.xlu0 %853, %v224
      %v855 = vpop.permute.xlu0 %854
      %857 = vset.pattern.permute.xlu0 1
      %858 = vperm.xlu0 %857, %v225
      %v859 = vpop.permute.xlu0 %858
      %861 = vset.pattern.permute.xlu0 1
      %862 = vperm.xlu0 %861, %v226
      %v863 = vpop.permute.xlu0 %862
      %865 = vset.pattern.permute.xlu0 1
      %866 = vperm.xlu0 %865, %v227
      %v867 = vpop.permute.xlu0 %866
      %869 = vset.pattern.permute.xlu0 1
      %870 = vperm.xlu0 %869, %v228
      %v871 = vpop.permute.xlu0 %870
      %873 = vset.pattern.permute.xlu0 1
      %874 = vperm.xlu0 %873, %v229
      %v875 = vpop.permute.xlu0 %874
      %877 = vset.pattern.permute.xlu0 1
      %878 = vperm.xlu0 %877, %v230
      %v879 = vpop.permute.xlu0 %878
      %881 = vset.pattern.permute.xlu0 1
      %882 = vperm.xlu0 %881, %v231
      %v883 = vpop.permute.xlu0 %882
      %885 = vset.pattern.permute.xlu0 1
      %886 = vperm.xlu0 %885, %v232
      %v887 = vpop.permute.xlu0 %886
      %889 = vset.pattern.permute.xlu0 1
      %890 = vperm.xlu0 %889, %v233
      %v891 = vpop.permute.xlu0 %890
      %893 = vset.pattern.permute.xlu0 1
      %894 = vperm.xlu0 %893, %v234
      %v895 = vpop.permute.xlu0 %894
      %vm897 = vcmp.gt.f32.partialorder %v771, %v399
      %vm898 = vcmp.gt.f32.partialorder %v771, %v403
      %vm899 = vcmp.gt.f32.partialorder %v775, %v399
      %vm900 = vcmp.gt.f32.partialorder %v775, %v403
      %vm901 = vcmp.gt.f32.partialorder %v779, %v399
      %vm902 = vcmp.gt.f32.partialorder %v779, %v403
      %vm903 = vcmp.gt.f32.partialorder %v783, %v399
      %vm904 = vcmp.gt.f32.partialorder %v783, %v403
      %vm905 = vcmp.gt.f32.partialorder %v787, %v399
      %vm906 = vcmp.gt.f32.partialorder %v787, %v403
      %vm907 = vcmp.gt.f32.partialorder %v791, %v399
      %vm908 = vcmp.gt.f32.partialorder %v791, %v403
      %vm909 = vcmp.gt.f32.partialorder %v795, %v399
      %vm910 = vcmp.gt.f32.partialorder %v795, %v403
      %vm911 = vcmp.gt.f32.partialorder %v799, %v399
      %vm912 = vcmp.gt.f32.partialorder %v799, %v403
      %vm913 = vcmp.gt.f32.partialorder %v803, %v399
      %vm914 = vcmp.gt.f32.partialorder %v803, %v403
      %vm915 = vcmp.gt.f32.partialorder %v807, %v399
      %vm916 = vcmp.gt.f32.partialorder %v807, %v403
      %vm917 = vcmp.gt.f32.partialorder %v811, %v399
      %vm918 = vcmp.gt.f32.partialorder %v811, %v403
      %vm919 = vcmp.gt.f32.partialorder %v815, %v399
      %vm920 = vcmp.gt.f32.partialorder %v815, %v403
      %vm921 = vcmp.gt.f32.partialorder %v819, %v399
      %vm922 = vcmp.gt.f32.partialorder %v819, %v403
      %vm923 = vcmp.gt.f32.partialorder %v823, %v399
      %vm924 = vcmp.gt.f32.partialorder %v823, %v403
      %vm925 = vcmp.gt.f32.partialorder %v827, %v399
      %vm926 = vcmp.gt.f32.partialorder %v827, %v403
      %vm927 = vcmp.gt.f32.partialorder %v831, %v399
      %vm928 = vcmp.gt.f32.partialorder %v831, %v403
      %vm929 = vcmp.gt.f32.partialorder %v835, %v399
      %vm930 = vcmp.gt.f32.partialorder %v835, %v403
      %vm931 = vcmp.gt.f32.partialorder %v839, %v399
      %vm932 = vcmp.gt.f32.partialorder %v839, %v403
      %vm933 = vcmp.gt.f32.partialorder %v843, %v399
      %vm934 = vcmp.gt.f32.partialorder %v843, %v403
      %vm935 = vcmp.gt.f32.partialorder %v847, %v399
      %vm936 = vcmp.gt.f32.partialorder %v847, %v403
      %vm937 = vcmp.gt.f32.partialorder %v851, %v399
      %vm938 = vcmp.gt.f32.partialorder %v851, %v403
      %vm939 = vcmp.gt.f32.partialorder %v855, %v399
      %vm940 = vcmp.gt.f32.partialorder %v855, %v403
      %vm941 = vcmp.gt.f32.partialorder %v859, %v399
      %vm942 = vcmp.gt.f32.partialorder %v859, %v403
      %vm943 = vcmp.gt.f32.partialorder %v863, %v399
      %vm944 = vcmp.gt.f32.partialorder %v863, %v403
      %vm945 = vcmp.gt.f32.partialorder %v867, %v399
      %vm946 = vcmp.gt.f32.partialorder %v867, %v403
      %vm947 = vcmp.gt.f32.partialorder %v871, %v399
      %vm948 = vcmp.gt.f32.partialorder %v871, %v403
      %vm949 = vcmp.gt.f32.partialorder %v875, %v399
      %vm950 = vcmp.gt.f32.partialorder %v875, %v403
      %vm951 = vcmp.gt.f32.partialorder %v879, %v399
      %vm952 = vcmp.gt.f32.partialorder %v879, %v403
      %vm953 = vcmp.gt.f32.partialorder %v883, %v399
      %vm954 = vcmp.gt.f32.partialorder %v883, %v403
      %vm955 = vcmp.gt.f32.partialorder %v887, %v399
      %vm956 = vcmp.gt.f32.partialorder %v887, %v403
      %vm957 = vcmp.gt.f32.partialorder %v891, %v399
      %vm958 = vcmp.gt.f32.partialorder %v891, %v403
      %vm959 = vcmp.gt.f32.partialorder %v895, %v399
      %vm960 = vcmp.gt.f32.partialorder %v895, %v403
      %vm961 = vcmp.le.f32.partialorder %v771, %v474
      %vm962 = vcmp.le.f32.partialorder %v771, %v478
      %vm963 = vcmp.le.f32.partialorder %v775, %v474
      %vm964 = vcmp.le.f32.partialorder %v775, %v478
      %vm965 = vcmp.le.f32.partialorder %v779, %v474
      %vm966 = vcmp.le.f32.partialorder %v779, %v478
      %vm967 = vcmp.le.f32.partialorder %v783, %v474
      %vm968 = vcmp.le.f32.partialorder %v783, %v478
      %vm969 = vcmp.le.f32.partialorder %v787, %v474
      %vm970 = vcmp.le.f32.partialorder %v787, %v478
      %vm971 = vcmp.le.f32.partialorder %v791, %v474
      %vm972 = vcmp.le.f32.partialorder %v791, %v478
      %vm973 = vcmp.le.f32.partialorder %v795, %v474
      %vm974 = vcmp.le.f32.partialorder %v795, %v478
      %vm975 = vcmp.le.f32.partialorder %v799, %v474
      %vm976 = vcmp.le.f32.partialorder %v799, %v478
      %vm977 = vcmp.le.f32.partialorder %v803, %v474
      %vm978 = vcmp.le.f32.partialorder %v803, %v478
      %vm979 = vcmp.le.f32.partialorder %v807, %v474
      %vm980 = vcmp.le.f32.partialorder %v807, %v478
      %vm981 = vcmp.le.f32.partialorder %v811, %v474
      %vm982 = vcmp.le.f32.partialorder %v811, %v478
      %vm983 = vcmp.le.f32.partialorder %v815, %v474
      %vm984 = vcmp.le.f32.partialorder %v815, %v478
      %vm985 = vcmp.le.f32.partialorder %v819, %v474
      %vm986 = vcmp.le.f32.partialorder %v819, %v478
      %vm987 = vcmp.le.f32.partialorder %v823, %v474
      %vm988 = vcmp.le.f32.partialorder %v823, %v478
      %vm989 = vcmp.le.f32.partialorder %v827, %v474
      %vm990 = vcmp.le.f32.partialorder %v827, %v478
      %vm991 = vcmp.le.f32.partialorder %v831, %v474
      %vm992 = vcmp.le.f32.partialorder %v831, %v478
      %vm993 = vcmp.le.f32.partialorder %v835, %v474
      %vm994 = vcmp.le.f32.partialorder %v835, %v478
      %vm995 = vcmp.le.f32.partialorder %v839, %v474
      %vm996 = vcmp.le.f32.partialorder %v839, %v478
      %vm997 = vcmp.le.f32.partialorder %v843, %v474
      %vm998 = vcmp.le.f32.partialorder %v843, %v478
      %vm999 = vcmp.le.f32.partialorder %v847, %v474
      %vm1000 = vcmp.le.f32.partialorder %v847, %v478
      %vm1001 = vcmp.le.f32.partialorder %v851, %v474
      %vm1002 = vcmp.le.f32.partialorder %v851, %v478
      %vm1003 = vcmp.le.f32.partialorder %v855, %v474
      %vm1004 = vcmp.le.f32.partialorder %v855, %v478
      %vm1005 = vcmp.le.f32.partialorder %v859, %v474
      %vm1006 = vcmp.le.f32.partialorder %v859, %v478
      %vm1007 = vcmp.le.f32.partialorder %v863, %v474
      %vm1008 = vcmp.le.f32.partialorder %v863, %v478
      %vm1009 = vcmp.le.f32.partialorder %v867, %v474
      %vm1010 = vcmp.le.f32.partialorder %v867, %v478
      %vm1011 = vcmp.le.f32.partialorder %v871, %v474
      %vm1012 = vcmp.le.f32.partialorder %v871, %v478
      %vm1013 = vcmp.le.f32.partialorder %v875, %v474
      %vm1014 = vcmp.le.f32.partialorder %v875, %v478
      %vm1015 = vcmp.le.f32.partialorder %v879, %v474
      %vm1016 = vcmp.le.f32.partialorder %v879, %v478
      %vm1017 = vcmp.le.f32.partialorder %v883, %v474
      %vm1018 = vcmp.le.f32.partialorder %v883, %v478
      %vm1019 = vcmp.le.f32.partialorder %v887, %v474
      %vm1020 = vcmp.le.f32.partialorder %v887, %v478
      %vm1021 = vcmp.le.f32.partialorder %v891, %v474
      %vm1022 = vcmp.le.f32.partialorder %v891, %v478
      %vm1023 = vcmp.le.f32.partialorder %v895, %v474
      %vm1024 = vcmp.le.f32.partialorder %v895, %v478
      %vm1025 = vmand %vm897, %vm961
      %vm1026 = vmand %vm898, %vm962
      %vm1027 = vmand %vm899, %vm963
      %vm1028 = vmand %vm900, %vm964
      %vm1029 = vmand %vm901, %vm965
      %vm1030 = vmand %vm902, %vm966
      %vm1031 = vmand %vm903, %vm967
      %vm1032 = vmand %vm904, %vm968
      %vm1033 = vmand %vm905, %vm969
      %vm1034 = vmand %vm906, %vm970
      %vm1035 = vmand %vm907, %vm971
      %vm1036 = vmand %vm908, %vm972
      %vm1037 = vmand %vm909, %vm973
      %vm1038 = vmand %vm910, %vm974
      %vm1039 = vmand %vm911, %vm975
      %vm1040 = vmand %vm912, %vm976
      %vm1041 = vmand %vm913, %vm977
      %vm1042 = vmand %vm914, %vm978
      %vm1043 = vmand %vm915, %vm979
      %vm1044 = vmand %vm916, %vm980
      %vm1045 = vmand %vm917, %vm981
      %vm1046 = vmand %vm918, %vm982
      %vm1047 = vmand %vm919, %vm983
      %vm1048 = vmand %vm920, %vm984
      %vm1049 = vmand %vm921, %vm985
      %vm1050 = vmand %vm922, %vm986
      %vm1051 = vmand %vm923, %vm987
      %vm1052 = vmand %vm924, %vm988
      %vm1053 = vmand %vm925, %vm989
      %vm1054 = vmand %vm926, %vm990
      %vm1055 = vmand %vm927, %vm991
      %vm1056 = vmand %vm928, %vm992
      %vm1057 = vmand %vm929, %vm993
      %vm1058 = vmand %vm930, %vm994
      %vm1059 = vmand %vm931, %vm995
      %vm1060 = vmand %vm932, %vm996
      %vm1061 = vmand %vm933, %vm997
      %vm1062 = vmand %vm934, %vm998
      %vm1063 = vmand %vm935, %vm999
      %vm1064 = vmand %vm936, %vm1000
      %vm1065 = vmand %vm937, %vm1001
      %vm1066 = vmand %vm938, %vm1002
      %vm1067 = vmand %vm939, %vm1003
      %vm1068 = vmand %vm940, %vm1004
      %vm1069 = vmand %vm941, %vm1005
      %vm1070 = vmand %vm942, %vm1006
      %vm1071 = vmand %vm943, %vm1007
      %vm1072 = vmand %vm944, %vm1008
      %vm1073 = vmand %vm945, %vm1009
      %vm1074 = vmand %vm946, %vm1010
      %vm1075 = vmand %vm947, %vm1011
      %vm1076 = vmand %vm948, %vm1012
      %vm1077 = vmand %vm949, %vm1013
      %vm1078 = vmand %vm950, %vm1014
      %vm1079 = vmand %vm951, %vm1015
      %vm1080 = vmand %vm952, %vm1016
      %vm1081 = vmand %vm953, %vm1017
      %vm1082 = vmand %vm954, %vm1018
      %vm1083 = vmand %vm955, %vm1019
      %vm1084 = vmand %vm956, %vm1020
      %vm1085 = vmand %vm957, %vm1021
      %vm1086 = vmand %vm958, %vm1022
      %vm1087 = vmand %vm959, %vm1023
      %vm1088 = vmand %vm960, %vm1024
      %v1089 = vsel %vm1025, 1, 0
      %v1090 = vsel %vm1026, 1, 0
      %v1091 = vsel %vm1027, 1, 0
      %v1092 = vsel %vm1028, 1, 0
      %v1093 = vsel %vm1029, 1, 0
      %v1094 = vsel %vm1030, 1, 0
      %v1095 = vsel %vm1031, 1, 0
      %v1096 = vsel %vm1032, 1, 0
      %v1097 = vsel %vm1033, 1, 0
      %v1098 = vsel %vm1034, 1, 0
      %v1099 = vsel %vm1035, 1, 0
      %v1100 = vsel %vm1036, 1, 0
      %v1101 = vsel %vm1037, 1, 0
      %v1102 = vsel %vm1038, 1, 0
      %v1103 = vsel %vm1039, 1, 0
      %v1104 = vsel %vm1040, 1, 0
      %v1105 = vsel %vm1041, 1, 0
      %v1106 = vsel %vm1042, 1, 0
      %v1107 = vsel %vm1043, 1, 0
      %v1108 = vsel %vm1044, 1, 0
      %v1109 = vsel %vm1045, 1, 0
      %v1110 = vsel %vm1046, 1, 0
      %v1111 = vsel %vm1047, 1, 0
      %v1112 = vsel %vm1048, 1, 0
      %v1113 = vsel %vm1049, 1, 0
      %v1114 = vsel %vm1050, 1, 0
      %v1115 = vsel %vm1051, 1, 0
      %v1116 = vsel %vm1052, 1, 0
      %v1117 = vsel %vm1053, 1, 0
      %v1118 = vsel %vm1054, 1, 0
      %v1119 = vsel %vm1055, 1, 0
      %v1120 = vsel %vm1056, 1, 0
      %v1121 = vsel %vm1057, 1, 0
      %v1122 = vsel %vm1058, 1, 0
      %v1123 = vsel %vm1059, 1, 0
      %v1124 = vsel %vm1060, 1, 0
      %v1125 = vsel %vm1061, 1, 0
      %v1126 = vsel %vm1062, 1, 0
      %v1127 = vsel %vm1063, 1, 0
      %v1128 = vsel %vm1064, 1, 0
      %v1129 = vsel %vm1065, 1, 0
      %v1130 = vsel %vm1066, 1, 0
      %v1131 = vsel %vm1067, 1, 0
      %v1132 = vsel %vm1068, 1, 0
      %v1133 = vsel %vm1069, 1, 0
      %v1134 = vsel %vm1070, 1, 0
      %v1135 = vsel %vm1071, 1, 0
      %v1136 = vsel %vm1072, 1, 0
      %v1137 = vsel %vm1073, 1, 0
      %v1138 = vsel %vm1074, 1, 0
      %v1139 = vsel %vm1075, 1, 0
      %v1140 = vsel %vm1076, 1, 0
      %v1141 = vsel %vm1077, 1, 0
      %v1142 = vsel %vm1078, 1, 0
      %v1143 = vsel %vm1079, 1, 0
      %v1144 = vsel %vm1080, 1, 0
      %v1145 = vsel %vm1081, 1, 0
      %v1146 = vsel %vm1082, 1, 0
      %v1147 = vsel %vm1083, 1, 0
      %v1148 = vsel %vm1084, 1, 0
      %v1149 = vsel %vm1085, 1, 0
      %v1150 = vsel %vm1086, 1, 0
      %v1151 = vsel %vm1087, 1, 0
      %v1152 = vsel %vm1088, 1, 0
      %v1153 = vcvt.s32.f32 %v1089
      %v1154 = vcvt.s32.f32 %v1090
      %v1155 = vcvt.s32.f32 %v1091
      %v1156 = vcvt.s32.f32 %v1092
      %v1157 = vcvt.s32.f32 %v1093
      %v1158 = vcvt.s32.f32 %v1094
      %v1159 = vcvt.s32.f32 %v1095
      %v1160 = vcvt.s32.f32 %v1096
      %v1161 = vcvt.s32.f32 %v1097
      %v1162 = vcvt.s32.f32 %v1098
      %v1163 = vcvt.s32.f32 %v1099
      %v1164 = vcvt.s32.f32 %v1100
      %v1165 = vcvt.s32.f32 %v1101
      %v1166 = vcvt.s32.f32 %v1102
      %v1167 = vcvt.s32.f32 %v1103
      %v1168 = vcvt.s32.f32 %v1104
      %v1169 = vcvt.s32.f32 %v1105
      %v1170 = vcvt.s32.f32 %v1106
      %v1171 = vcvt.s32.f32 %v1107
      %v1172 = vcvt.s32.f32 %v1108
      %v1173 = vcvt.s32.f32 %v1109
      %v1174 = vcvt.s32.f32 %v1110
      %v1175 = vcvt.s32.f32 %v1111
      %v1176 = vcvt.s32.f32 %v1112
      %v1177 = vcvt.s32.f32 %v1113
      %v1178 = vcvt.s32.f32 %v1114
      %v1179 = vcvt.s32.f32 %v1115
      %v1180 = vcvt.s32.f32 %v1116
      %v1181 = vcvt.s32.f32 %v1117
      %v1182 = vcvt.s32.f32 %v1118
      %v1183 = vcvt.s32.f32 %v1119
      %v1184 = vcvt.s32.f32 %v1120
      %v1185 = vcvt.s32.f32 %v1121
      %v1186 = vcvt.s32.f32 %v1122
      %v1187 = vcvt.s32.f32 %v1123
      %v1188 = vcvt.s32.f32 %v1124
      %v1189 = vcvt.s32.f32 %v1125
      %v1190 = vcvt.s32.f32 %v1126
      %v1191 = vcvt.s32.f32 %v1127
      %v1192 = vcvt.s32.f32 %v1128
      %v1193 = vcvt.s32.f32 %v1129
      %v1194 = vcvt.s32.f32 %v1130
      %v1195 = vcvt.s32.f32 %v1131
      %v1196 = vcvt.s32.f32 %v1132
      %v1197 = vcvt.s32.f32 %v1133
      %v1198 = vcvt.s32.f32 %v1134
      %v1199 = vcvt.s32.f32 %v1135
      %v1200 = vcvt.s32.f32 %v1136
      %v1201 = vcvt.s32.f32 %v1137
      %v1202 = vcvt.s32.f32 %v1138
      %v1203 = vcvt.s32.f32 %v1139
      %v1204 = vcvt.s32.f32 %v1140
      %v1205 = vcvt.s32.f32 %v1141
      %v1206 = vcvt.s32.f32 %v1142
      %v1207 = vcvt.s32.f32 %v1143
      %v1208 = vcvt.s32.f32 %v1144
      %v1209 = vcvt.s32.f32 %v1145
      %v1210 = vcvt.s32.f32 %v1146
      %v1211 = vcvt.s32.f32 %v1147
      %v1212 = vcvt.s32.f32 %v1148
      %v1213 = vcvt.s32.f32 %v1149
      %v1214 = vcvt.s32.f32 %v1150
      %v1215 = vcvt.s32.f32 %v1151
      %v1216 = vcvt.s32.f32 %v1152
      %s1217 = scalar_lea.vmem %s3, 256
      %v1218 = vld [vmem:[%s1217] sm:$0xff]
      %v1219 = vld [vmem:[%s1217 + $0x8] sm:$0xff]
      %v1220 = vld [vmem:[%s1217 + $0x10] sm:$0xff]
      %v1221 = vld [vmem:[%s1217 + $0x18] sm:$0xff]
      %v1222 = vld [vmem:[%s1217 + $0x20] sm:$0xff]
      %v1223 = vld [vmem:[%s1217 + $0x28] sm:$0xff]
      %v1224 = vld [vmem:[%s1217 + $0x30] sm:$0xff]
      %v1225 = vld [vmem:[%s1217 + $0x38] sm:$0xff]
      %v1226 = vld [vmem:[%s1217 + $0x40] sm:$0xff]
      %v1227 = vld [vmem:[%s1217 + $0x48] sm:$0xff]
      %v1228 = vld [vmem:[%s1217 + $0x50] sm:$0xff]
      %v1229 = vld [vmem:[%s1217 + $0x58] sm:$0xff]
      %v1230 = vld [vmem:[%s1217 + $0x60] sm:$0xff]
      %v1231 = vld [vmem:[%s1217 + $0x68] sm:$0xff]
      %v1232 = vld [vmem:[%s1217 + $0x70] sm:$0xff]
      %v1233 = vld [vmem:[%s1217 + $0x78] sm:$0xff]
      %v1234 = vld [vmem:[%s1217 + $0x80] sm:$0xff]
      %v1235 = vld [vmem:[%s1217 + $0x88] sm:$0xff]
      %v1236 = vld [vmem:[%s1217 + $0x90] sm:$0xff]
      %v1237 = vld [vmem:[%s1217 + $0x98] sm:$0xff]
      %v1238 = vld [vmem:[%s1217 + $0xa0] sm:$0xff]
      %v1239 = vld [vmem:[%s1217 + $0xa8] sm:$0xff]
      %v1240 = vld [vmem:[%s1217 + $0xb0] sm:$0xff]
      %v1241 = vld [vmem:[%s1217 + $0xb8] sm:$0xff]
      %v1242 = vld [vmem:[%s1217 + $0xc0] sm:$0xff]
      %v1243 = vld [vmem:[%s1217 + $0xc8] sm:$0xff]
      %v1244 = vld [vmem:[%s1217 + $0xd0] sm:$0xff]
      %v1245 = vld [vmem:[%s1217 + $0xd8] sm:$0xff]
      %v1246 = vld [vmem:[%s1217 + $0xe0] sm:$0xff]
      %v1247 = vld [vmem:[%s1217 + $0xe8] sm:$0xff]
      %v1248 = vld [vmem:[%s1217 + $0xf0] sm:$0xff]
      %v1249 = vld [vmem:[%s1217 + $0xf8] sm:$0xff]
      %1250 = vmatprep.subr.mxu0 0.0
      %1251 = vmatpush1.msra.mxu0 %v1233
      %1252 = vmatprep.subr.mxu0 0.0
      %1253 = vmatpush1.msra.mxu0 %v1232
      %1254 = vmatprep.subr.mxu0 0.0
      %1255 = vmatpush1.msra.mxu0 %v1231
      %1256 = vmatprep.subr.mxu0 0.0
      %1257 = vmatpush1.msra.mxu0 %v1230
      %1258 = vmatprep.subr.mxu0 0.0
      %1259 = vmatpush1.msra.mxu0 %v1229
      %1260 = vmatprep.subr.mxu0 0.0
      %1261 = vmatpush1.msra.mxu0 %v1228
      %1262 = vmatprep.subr.mxu0 0.0
      %1263 = vmatpush1.msra.mxu0 %v1227
      %1264 = vmatprep.subr.mxu0 0.0
      %1265 = vmatpush1.msra.mxu0 %v1226
      %1266 = vmatprep.subr.mxu0 0.0
      %1267 = vmatpush1.msra.mxu0 %v1225
      %1268 = vmatprep.subr.mxu0 0.0
      %1269 = vmatpush1.msra.mxu0 %v1224
      %1270 = vmatprep.subr.mxu0 0.0
      %1271 = vmatpush1.msra.mxu0 %v1223
      %1272 = vmatprep.subr.mxu0 0.0
      %1273 = vmatpush1.msra.mxu0 %v1222
      %1274 = vmatprep.subr.mxu0 0.0
      %1275 = vmatpush1.msra.mxu0 %v1221
      %1276 = vmatprep.subr.mxu0 0.0
      %1277 = vmatpush1.msra.mxu0 %v1220
      %1278 = vmatprep.subr.mxu0 0.0
      %1279 = vmatpush1.msra.mxu0 %v1219
      %1280 = vmatprep.subr.mxu0 0.0
      %1281 = vmatpush1.msra.mxu0 %v1218
      %1282 = vmatprep.subr.mxu0 0.0
      %1283 = vmatpush2.msra.mxu0 %v1249
      %1284 = vmatprep.subr.mxu0 0.0
      %1285 = vmatpush2.msra.mxu0 %v1248
      %1286 = vmatprep.subr.mxu0 0.0
      %1287 = vmatpush2.msra.mxu0 %v1247
      %1288 = vmatprep.subr.mxu0 0.0
      %1289 = vmatpush2.msra.mxu0 %v1246
      %1290 = vmatprep.subr.mxu0 0.0
      %1291 = vmatpush2.msra.mxu0 %v1245
      %1292 = vmatprep.subr.mxu0 0.0
      %1293 = vmatpush2.msra.mxu0 %v1244
      %1294 = vmatprep.subr.mxu0 0.0
      %1295 = vmatpush2.msra.mxu0 %v1243
      %1296 = vmatprep.subr.mxu0 0.0
      %1297 = vmatpush2.msra.mxu0 %v1242
      %1298 = vmatprep.subr.mxu0 0.0
      %1299 = vmatpush2.msra.mxu0 %v1241
      %1300 = vmatprep.subr.mxu0 0.0
      %1301 = vmatpush2.msra.mxu0 %v1240
      %1302 = vmatprep.subr.mxu0 0.0
      %1303 = vmatpush2.msra.mxu0 %v1239
      %1304 = vmatprep.subr.mxu0 0.0
      %1305 = vmatpush2.msra.mxu0 %v1238
      %1306 = vmatprep.subr.mxu0 0.0
      %1307 = vmatpush2.msra.mxu0 %v1237
      %1308 = vmatprep.subr.mxu0 0.0
      %1309 = vmatpush2.msra.mxu0 %v1236
      %1310 = vmatprep.subr.mxu0 0.0
      %1311 = vmatpush2.msra.mxu0 %v1235
      %1312 = vmatprep.subr.mxu0 0.0
      %1313 = vmatpush2.msra.mxu0 %v1234
      %1314 = vmatprep.mubr.f32.mxu0 %v1154
      %1315 = vmatmul.mubr.f32.gmra.mxu0 %v1153
      %v1316 = vpop.f32.mrf.mxu0
      %v1317 = vadd.f32 0.0, %v1316
      %v1318 = vpop.f32.mrf.mxu0
      %1319 = vmatprep.mubr.f32.mxu0 %v1156
      %1320 = vmatmul.mubr.f32.gmra.mxu0 %v1155
      %v1321 = vpop.f32.mrf.mxu0
      %v1322 = vadd.f32 0.0, %v1321
      %v1323 = vpop.f32.mrf.mxu0
      %1324 = vmatprep.mubr.f32.mxu0 %v1158
      %1325 = vmatmul.mubr.f32.gmra.mxu0 %v1157
      %v1326 = vpop.f32.mrf.mxu0
      %v1327 = vadd.f32 0.0, %v1326
      %v1328 = vpop.f32.mrf.mxu0
      %1329 = vmatprep.mubr.f32.mxu0 %v1160
      %1330 = vmatmul.mubr.f32.gmra.mxu0 %v1159
      %v1331 = vpop.f32.mrf.mxu0
      %v1332 = vadd.f32 0.0, %v1331
      %v1333 = vpop.f32.mrf.mxu0
      %1334 = vmatprep.mubr.f32.mxu0 %v1162
      %1335 = vmatmul.mubr.f32.gmra.mxu0 %v1161
      %v1336 = vpop.f32.mrf.mxu0
      %v1337 = vadd.f32 0.0, %v1336
      %v1338 = vpop.f32.mrf.mxu0
      %1339 = vmatprep.mubr.f32.mxu0 %v1164
      %1340 = vmatmul.mubr.f32.gmra.mxu0 %v1163
      %v1341 = vpop.f32.mrf.mxu0
      %v1342 = vadd.f32 0.0, %v1341
      %v1343 = vpop.f32.mrf.mxu0
      %1344 = vmatprep.mubr.f32.mxu0 %v1166
      %1345 = vmatmul.mubr.f32.gmra.mxu0 %v1165
      %v1346 = vpop.f32.mrf.mxu0
      %v1347 = vadd.f32 0.0, %v1346
      %v1348 = vpop.f32.mrf.mxu0
      %1349 = vmatprep.mubr.f32.mxu0 %v1168
      %1350 = vmatmul.mubr.f32.gmra.mxu0 %v1167
      %v1351 = vpop.f32.mrf.mxu0
      %v1352 = vadd.f32 0.0, %v1351
      %v1353 = vpop.f32.mrf.mxu0
      %1354 = vmatprep.mubr.f32.mxu0 %v1170
      %1355 = vmatmul.mubr.f32.gmra.mxu0 %v1169
      %v1356 = vpop.f32.mrf.mxu0
      %v1357 = vadd.f32 0.0, %v1356
      %v1358 = vpop.f32.mrf.mxu0
      %1359 = vmatprep.mubr.f32.mxu0 %v1172
      %1360 = vmatmul.mubr.f32.gmra.mxu0 %v1171
      %v1361 = vpop.f32.mrf.mxu0
      %v1362 = vadd.f32 0.0, %v1361
      %v1363 = vpop.f32.mrf.mxu0
      %1364 = vmatprep.mubr.f32.mxu0 %v1174
      %1365 = vmatmul.mubr.f32.gmra.mxu0 %v1173
      %v1366 = vpop.f32.mrf.mxu0
      %v1367 = vadd.f32 0.0, %v1366
      %v1368 = vpop.f32.mrf.mxu0
      %1369 = vmatprep.mubr.f32.mxu0 %v1176
      %1370 = vmatmul.mubr.f32.gmra.mxu0 %v1175
      %v1371 = vpop.f32.mrf.mxu0
      %v1372 = vadd.f32 0.0, %v1371
      %v1373 = vpop.f32.mrf.mxu0
      %1374 = vmatprep.mubr.f32.mxu0 %v1178
      %1375 = vmatmul.mubr.f32.gmra.mxu0 %v1177
      %v1376 = vpop.f32.mrf.mxu0
      %v1377 = vadd.f32 0.0, %v1376
      %v1378 = vpop.f32.mrf.mxu0
      %1379 = vmatprep.mubr.f32.mxu0 %v1180
      %1380 = vmatmul.mubr.f32.gmra.mxu0 %v1179
      %v1381 = vpop.f32.mrf.mxu0
      %v1382 = vadd.f32 0.0, %v1381
      %v1383 = vpop.f32.mrf.mxu0
      %1384 = vmatprep.mubr.f32.mxu0 %v1182
      %1385 = vmatmul.mubr.f32.gmra.mxu0 %v1181
      %v1386 = vpop.f32.mrf.mxu0
      %v1387 = vadd.f32 0.0, %v1386
      %v1388 = vpop.f32.mrf.mxu0
      %1389 = vmatprep.mubr.f32.mxu0 %v1184
      %1390 = vmatmul.mubr.f32.gmra.mxu0 %v1183
      %v1391 = vpop.f32.mrf.mxu0
      %v1392 = vadd.f32 0.0, %v1391
      %v1393 = vpop.f32.mrf.mxu0
      %1394 = vmatprep.mubr.f32.mxu0 %v1186
      %1395 = vmatmul.mubr.f32.gmra.mxu0 %v1185
      %v1396 = vpop.f32.mrf.mxu0
      %v1397 = vadd.f32 0.0, %v1396
      %v1398 = vpop.f32.mrf.mxu0
      %1399 = vmatprep.mubr.f32.mxu0 %v1188
      %1400 = vmatmul.mubr.f32.gmra.mxu0 %v1187
      %v1401 = vpop.f32.mrf.mxu0
      %v1402 = vadd.f32 0.0, %v1401
      %v1403 = vpop.f32.mrf.mxu0
      %1404 = vmatprep.mubr.f32.mxu0 %v1190
      %1405 = vmatmul.mubr.f32.gmra.mxu0 %v1189
      %v1406 = vpop.f32.mrf.mxu0
      %v1407 = vadd.f32 0.0, %v1406
      %v1408 = vpop.f32.mrf.mxu0
      %1409 = vmatprep.mubr.f32.mxu0 %v1192
      %1410 = vmatmul.mubr.f32.gmra.mxu0 %v1191
      %v1411 = vpop.f32.mrf.mxu0
      %v1412 = vadd.f32 0.0, %v1411
      %v1413 = vpop.f32.mrf.mxu0
      %1414 = vmatprep.mubr.f32.mxu0 %v1194
      %1415 = vmatmul.mubr.f32.gmra.mxu0 %v1193
      %v1416 = vpop.f32.mrf.mxu0
      %v1417 = vadd.f32 0.0, %v1416
      %v1418 = vpop.f32.mrf.mxu0
      %1419 = vmatprep.mubr.f32.mxu0 %v1196
      %1420 = vmatmul.mubr.f32.gmra.mxu0 %v1195
      %v1421 = vpop.f32.mrf.mxu0
      %v1422 = vadd.f32 0.0, %v1421
      %v1423 = vpop.f32.mrf.mxu0
      %1424 = vmatprep.mubr.f32.mxu0 %v1198
      %1425 = vmatmul.mubr.f32.gmra.mxu0 %v1197
      %v1426 = vpop.f32.mrf.mxu0
      %v1427 = vadd.f32 0.0, %v1426
      %v1428 = vpop.f32.mrf.mxu0
      %1429 = vmatprep.mubr.f32.mxu0 %v1200
      %1430 = vmatmul.mubr.f32.gmra.mxu0 %v1199
      %v1431 = vpop.f32.mrf.mxu0
      %v1432 = vadd.f32 0.0, %v1431
      %v1433 = vpop.f32.mrf.mxu0
      %1434 = vmatprep.mubr.f32.mxu0 %v1202
      %1435 = vmatmul.mubr.f32.gmra.mxu0 %v1201
      %v1436 = vpop.f32.mrf.mxu0
      %v1437 = vadd.f32 0.0, %v1436
      %v1438 = vpop.f32.mrf.mxu0
      %1439 = vmatprep.mubr.f32.mxu0 %v1204
      %1440 = vmatmul.mubr.f32.gmra.mxu0 %v1203
      %v1441 = vpop.f32.mrf.mxu0
      %v1442 = vadd.f32 0.0, %v1441
      %v1443 = vpop.f32.mrf.mxu0
      %1444 = vmatprep.mubr.f32.mxu0 %v1206
      %1445 = vmatmul.mubr.f32.gmra.mxu0 %v1205
      %v1446 = vpop.f32.mrf.mxu0
      %v1447 = vadd.f32 0.0, %v1446
      %v1448 = vpop.f32.mrf.mxu0
      %1449 = vmatprep.mubr.f32.mxu0 %v1208
      %1450 = vmatmul.mubr.f32.gmra.mxu0 %v1207
      %v1451 = vpop.f32.mrf.mxu0
      %v1452 = vadd.f32 0.0, %v1451
      %v1453 = vpop.f32.mrf.mxu0
      %1454 = vmatprep.mubr.f32.mxu0 %v1210
      %1455 = vmatmul.mubr.f32.gmra.mxu0 %v1209
      %v1456 = vpop.f32.mrf.mxu0
      %v1457 = vadd.f32 0.0, %v1456
      %v1458 = vpop.f32.mrf.mxu0
      %1459 = vmatprep.mubr.f32.mxu0 %v1212
      %1460 = vmatmul.mubr.f32.gmra.mxu0 %v1211
      %v1461 = vpop.f32.mrf.mxu0
      %v1462 = vadd.f32 0.0, %v1461
      %v1463 = vpop.f32.mrf.mxu0
      %1464 = vmatprep.mubr.f32.mxu0 %v1214
      %1465 = vmatmul.mubr.f32.gmra.mxu0 %v1213
      %v1466 = vpop.f32.mrf.mxu0
      %v1467 = vadd.f32 0.0, %v1466
      %v1468 = vpop.f32.mrf.mxu0
      %1469 = vmatprep.mubr.f32.mxu0 %v1216
      %1470 = vmatmul.mubr.f32.gmra.mxu0 %v1215
      %v1471 = vpop.f32.mrf.mxu0
      %v1472 = vadd.f32 0.0, %v1471
      %v1473 = vpop.f32.mrf.mxu0
      %1474 = vdwg.mxu0
      %1475 = vmatprep.subr.mxu0 0.0
      %1476 = vmatpush1.msra.mxu0 %v752
      %1477 = vmatprep.subr.mxu0 0.0
      %1478 = vmatpush1.msra.mxu0 %v751
      %1479 = vmatprep.subr.mxu0 0.0
      %1480 = vmatpush1.msra.mxu0 %v750
      %1481 = vmatprep.subr.mxu0 0.0
      %1482 = vmatpush1.msra.mxu0 %v749
      %1483 = vmatprep.subr.mxu0 0.0
      %1484 = vmatpush1.msra.mxu0 %v748
      %1485 = vmatprep.subr.mxu0 0.0
      %1486 = vmatpush1.msra.mxu0 %v747
      %1487 = vmatprep.subr.mxu0 0.0
      %1488 = vmatpush1.msra.mxu0 %v746
      %1489 = vmatprep.subr.mxu0 0.0
      %1490 = vmatpush1.msra.mxu0 %v745
      %1491 = vmatprep.subr.mxu0 0.0
      %1492 = vmatpush1.msra.mxu0 %v744
      %1493 = vmatprep.subr.mxu0 0.0
      %1494 = vmatpush1.msra.mxu0 %v743
      %1495 = vmatprep.subr.mxu0 0.0
      %1496 = vmatpush1.msra.mxu0 %v742
      %1497 = vmatprep.subr.mxu0 0.0
      %1498 = vmatpush1.msra.mxu0 %v741
      %1499 = vmatprep.subr.mxu0 0.0
      %1500 = vmatpush1.msra.mxu0 %v740
      %1501 = vmatprep.subr.mxu0 0.0
      %1502 = vmatpush1.msra.mxu0 %v739
      %1503 = vmatprep.subr.mxu0 0.0
      %1504 = vmatpush1.msra.mxu0 %v738
      %1505 = vmatprep.subr.mxu0 0.0
      %1506 = vmatpush1.msra.mxu0 %v737
      %1507 = vmatprep.subr.mxu0 0.0
      %1508 = vmatpush2.msra.mxu0 %v768
      %1509 = vmatprep.subr.mxu0 0.0
      %1510 = vmatpush2.msra.mxu0 %v767
      %1511 = vmatprep.subr.mxu0 0.0
      %1512 = vmatpush2.msra.mxu0 %v766
      %1513 = vmatprep.subr.mxu0 0.0
      %1514 = vmatpush2.msra.mxu0 %v765
      %1515 = vmatprep.subr.mxu0 0.0
      %1516 = vmatpush2.msra.mxu0 %v764
      %1517 = vmatprep.subr.mxu0 0.0
      %1518 = vmatpush2.msra.mxu0 %v763
      %1519 = vmatprep.subr.mxu0 0.0
      %1520 = vmatpush2.msra.mxu0 %v762
      %1521 = vmatprep.subr.mxu0 0.0
      %1522 = vmatpush2.msra.mxu0 %v761
      %1523 = vmatprep.subr.mxu0 0.0
      %1524 = vmatpush2.msra.mxu0 %v760
      %1525 = vmatprep.subr.mxu0 0.0
      %1526 = vmatpush2.msra.mxu0 %v759
      %1527 = vmatprep.subr.mxu0 0.0
      %1528 = vmatpush2.msra.mxu0 %v758
      %1529 = vmatprep.subr.mxu0 0.0
      %1530 = vmatpush2.msra.mxu0 %v757
      %1531 = vmatprep.subr.mxu0 0.0
      %1532 = vmatpush2.msra.mxu0 %v756
      %1533 = vmatprep.subr.mxu0 0.0
      %1534 = vmatpush2.msra.mxu0 %v755
      %1535 = vmatprep.subr.mxu0 0.0
      %1536 = vmatpush2.msra.mxu0 %v754
      %1537 = vmatprep.subr.mxu0 0.0
      %1538 = vmatpush2.msra.mxu0 %v753
      %1539 = vmatprep.mubr.f32.mxu0 %v674
      %1540 = vmatmul.mubr.f32.gmra.mxu0 %v673
      %v1541 = vpop.f32.mrf.mxu0
      %v1542 = vadd.f32 %v1317, %v1541
      %v1543 = vpop.f32.mrf.mxu0
      %1544 = vmatprep.mubr.f32.mxu0 %v676
      %1545 = vmatmul.mubr.f32.gmra.mxu0 %v675
      %v1546 = vpop.f32.mrf.mxu0
      %v1547 = vadd.f32 %v1322, %v1546
      %v1548 = vpop.f32.mrf.mxu0
      %1549 = vmatprep.mubr.f32.mxu0 %v678
      %1550 = vmatmul.mubr.f32.gmra.mxu0 %v677
      %v1551 = vpop.f32.mrf.mxu0
      %v1552 = vadd.f32 %v1327, %v1551
      %v1553 = vpop.f32.mrf.mxu0
      %1554 = vmatprep.mubr.f32.mxu0 %v680
      %1555 = vmatmul.mubr.f32.gmra.mxu0 %v679
      %v1556 = vpop.f32.mrf.mxu0
      %v1557 = vadd.f32 %v1332, %v1556
      %v1558 = vpop.f32.mrf.mxu0
      %1559 = vmatprep.mubr.f32.mxu0 %v682
      %1560 = vmatmul.mubr.f32.gmra.mxu0 %v681
      %v1561 = vpop.f32.mrf.mxu0
      %v1562 = vadd.f32 %v1337, %v1561
      %v1563 = vpop.f32.mrf.mxu0
      %1564 = vmatprep.mubr.f32.mxu0 %v684
      %1565 = vmatmul.mubr.f32.gmra.mxu0 %v683
      %v1566 = vpop.f32.mrf.mxu0
      %v1567 = vadd.f32 %v1342, %v1566
      %v1568 = vpop.f32.mrf.mxu0
      %1569 = vmatprep.mubr.f32.mxu0 %v686
      %1570 = vmatmul.mubr.f32.gmra.mxu0 %v685
      %v1571 = vpop.f32.mrf.mxu0
      %v1572 = vadd.f32 %v1347, %v1571
      %v1573 = vpop.f32.mrf.mxu0
      %1574 = vmatprep.mubr.f32.mxu0 %v688
      %1575 = vmatmul.mubr.f32.gmra.mxu0 %v687
      %v1576 = vpop.f32.mrf.mxu0
      %v1577 = vadd.f32 %v1352, %v1576
      %v1578 = vpop.f32.mrf.mxu0
      %1579 = vmatprep.mubr.f32.mxu0 %v690
      %1580 = vmatmul.mubr.f32.gmra.mxu0 %v689
      %v1581 = vpop.f32.mrf.mxu0
      %v1582 = vadd.f32 %v1357, %v1581
      %v1583 = vpop.f32.mrf.mxu0
      %1584 = vmatprep.mubr.f32.mxu0 %v692
      %1585 = vmatmul.mubr.f32.gmra.mxu0 %v691
      %v1586 = vpop.f32.mrf.mxu0
      %v1587 = vadd.f32 %v1362, %v1586
      %v1588 = vpop.f32.mrf.mxu0
      %1589 = vmatprep.mubr.f32.mxu0 %v694
      %1590 = vmatmul.mubr.f32.gmra.mxu0 %v693
      %v1591 = vpop.f32.mrf.mxu0
      %v1592 = vadd.f32 %v1367, %v1591
      %v1593 = vpop.f32.mrf.mxu0
      %1594 = vmatprep.mubr.f32.mxu0 %v696
      %1595 = vmatmul.mubr.f32.gmra.mxu0 %v695
      %v1596 = vpop.f32.mrf.mxu0
      %v1597 = vadd.f32 %v1372, %v1596
      %v1598 = vpop.f32.mrf.mxu0
      %1599 = vmatprep.mubr.f32.mxu0 %v698
      %1600 = vmatmul.mubr.f32.gmra.mxu0 %v697
      %v1601 = vpop.f32.mrf.mxu0
      %v1602 = vadd.f32 %v1377, %v1601
      %v1603 = vpop.f32.mrf.mxu0
      %1604 = vmatprep.mubr.f32.mxu0 %v700
      %1605 = vmatmul.mubr.f32.gmra.mxu0 %v699
      %v1606 = vpop.f32.mrf.mxu0
      %v1607 = vadd.f32 %v1382, %v1606
      %v1608 = vpop.f32.mrf.mxu0
      %1609 = vmatprep.mubr.f32.mxu0 %v702
      %1610 = vmatmul.mubr.f32.gmra.mxu0 %v701
      %v1611 = vpop.f32.mrf.mxu0
      %v1612 = vadd.f32 %v1387, %v1611
      %v1613 = vpop.f32.mrf.mxu0
      %1614 = vmatprep.mubr.f32.mxu0 %v704
      %1615 = vmatmul.mubr.f32.gmra.mxu0 %v703
      %v1616 = vpop.f32.mrf.mxu0
      %v1617 = vadd.f32 %v1392, %v1616
      %v1618 = vpop.f32.mrf.mxu0
      %1619 = vmatprep.mubr.f32.mxu0 %v706
      %1620 = vmatmul.mubr.f32.gmra.mxu0 %v705
      %v1621 = vpop.f32.mrf.mxu0
      %v1622 = vadd.f32 %v1397, %v1621
      %v1623 = vpop.f32.mrf.mxu0
      %1624 = vmatprep.mubr.f32.mxu0 %v708
      %1625 = vmatmul.mubr.f32.gmra.mxu0 %v707
      %v1626 = vpop.f32.mrf.mxu0
      %v1627 = vadd.f32 %v1402, %v1626
      %v1628 = vpop.f32.mrf.mxu0
      %1629 = vmatprep.mubr.f32.mxu0 %v710
      %1630 = vmatmul.mubr.f32.gmra.mxu0 %v709
      %v1631 = vpop.f32.mrf.mxu0
      %v1632 = vadd.f32 %v1407, %v1631
      %v1633 = vpop.f32.mrf.mxu0
      %1634 = vmatprep.mubr.f32.mxu0 %v712
      %1635 = vmatmul.mubr.f32.gmra.mxu0 %v711
      %v1636 = vpop.f32.mrf.mxu0
      %v1637 = vadd.f32 %v1412, %v1636
      %v1638 = vpop.f32.mrf.mxu0
      %1639 = vmatprep.mubr.f32.mxu0 %v714
      %1640 = vmatmul.mubr.f32.gmra.mxu0 %v713
      %v1641 = vpop.f32.mrf.mxu0
      %v1642 = vadd.f32 %v1417, %v1641
      %v1643 = vpop.f32.mrf.mxu0
      %1644 = vmatprep.mubr.f32.mxu0 %v716
      %1645 = vmatmul.mubr.f32.gmra.mxu0 %v715
      %v1646 = vpop.f32.mrf.mxu0
      %v1647 = vadd.f32 %v1422, %v1646
      %v1648 = vpop.f32.mrf.mxu0
      %1649 = vmatprep.mubr.f32.mxu0 %v718
      %1650 = vmatmul.mubr.f32.gmra.mxu0 %v717
      %v1651 = vpop.f32.mrf.mxu0
      %v1652 = vadd.f32 %v1427, %v1651
      %v1653 = vpop.f32.mrf.mxu0
      %1654 = vmatprep.mubr.f32.mxu0 %v720
      %1655 = vmatmul.mubr.f32.gmra.mxu0 %v719
      %v1656 = vpop.f32.mrf.mxu0
      %v1657 = vadd.f32 %v1432, %v1656
      %v1658 = vpop.f32.mrf.mxu0
      %1659 = vmatprep.mubr.f32.mxu0 %v722
      %1660 = vmatmul.mubr.f32.gmra.mxu0 %v721
      %v1661 = vpop.f32.mrf.mxu0
      %v1662 = vadd.f32 %v1437, %v1661
      %v1663 = vpop.f32.mrf.mxu0
      %1664 = vmatprep.mubr.f32.mxu0 %v724
      %1665 = vmatmul.mubr.f32.gmra.mxu0 %v723
      %v1666 = vpop.f32.mrf.mxu0
      %v1667 = vadd.f32 %v1442, %v1666
      %v1668 = vpop.f32.mrf.mxu0
      %1669 = vmatprep.mubr.f32.mxu0 %v726
      %1670 = vmatmul.mubr.f32.gmra.mxu0 %v725
      %v1671 = vpop.f32.mrf.mxu0
      %v1672 = vadd.f32 %v1447, %v1671
      %v1673 = vpop.f32.mrf.mxu0
      %1674 = vmatprep.mubr.f32.mxu0 %v728
      %1675 = vmatmul.mubr.f32.gmra.mxu0 %v727
      %v1676 = vpop.f32.mrf.mxu0
      %v1677 = vadd.f32 %v1452, %v1676
      %v1678 = vpop.f32.mrf.mxu0
      %1679 = vmatprep.mubr.f32.mxu0 %v730
      %1680 = vmatmul.mubr.f32.gmra.mxu0 %v729
      %v1681 = vpop.f32.mrf.mxu0
      %v1682 = vadd.f32 %v1457, %v1681
      %v1683 = vpop.f32.mrf.mxu0
      %1684 = vmatprep.mubr.f32.mxu0 %v732
      %1685 = vmatmul.mubr.f32.gmra.mxu0 %v731
      %v1686 = vpop.f32.mrf.mxu0
      %v1687 = vadd.f32 %v1462, %v1686
      %v1688 = vpop.f32.mrf.mxu0
      %1689 = vmatprep.mubr.f32.mxu0 %v734
      %1690 = vmatmul.mubr.f32.gmra.mxu0 %v733
      %v1691 = vpop.f32.mrf.mxu0
      %v1692 = vadd.f32 %v1467, %v1691
      %v1693 = vpop.f32.mrf.mxu0
      %1694 = vmatprep.mubr.f32.mxu0 %v736
      %1695 = vmatmul.mubr.f32.gmra.mxu0 %v735
      %v1696 = vpop.f32.mrf.mxu0
      %v1697 = vadd.f32 %v1472, %v1696
      %v1698 = vpop.f32.mrf.mxu0
      %1699 = vdwg.mxu0
      %1700 = vset.pattern.permute.xlu0 2
      %1701 = vperm.xlu0 %1700, %v203
      %v1702 = vpop.permute.xlu0 %1701
      %1704 = vset.pattern.permute.xlu0 2
      %1705 = vperm.xlu0 %1704, %v204
      %v1706 = vpop.permute.xlu0 %1705
      %1708 = vset.pattern.permute.xlu0 2
      %1709 = vperm.xlu0 %1708, %v205
      %v1710 = vpop.permute.xlu0 %1709
      %1712 = vset.pattern.permute.xlu0 2
      %1713 = vperm.xlu0 %1712, %v206
      %v1714 = vpop.permute.xlu0 %1713
      %1716 = vset.pattern.permute.xlu0 2
      %1717 = vperm.xlu0 %1716, %v207
      %v1718 = vpop.permute.xlu0 %1717
      %1720 = vset.pattern.permute.xlu0 2
      %1721 = vperm.xlu0 %1720, %v208
      %v1722 = vpop.permute.xlu0 %1721
      %1724 = vset.pattern.permute.xlu0 2
      %1725 = vperm.xlu0 %1724, %v209
      %v1726 = vpop.permute.xlu0 %1725
      %1728 = vset.pattern.permute.xlu0 2
      %1729 = vperm.xlu0 %1728, %v210
      %v1730 = vpop.permute.xlu0 %1729
      %1732 = vset.pattern.permute.xlu0 2
      %1733 = vperm.xlu0 %1732, %v211
      %v1734 = vpop.permute.xlu0 %1733
      %1736 = vset.pattern.permute.xlu0 2
      %1737 = vperm.xlu0 %1736, %v212
      %v1738 = vpop.permute.xlu0 %1737
      %1740 = vset.pattern.permute.xlu0 2
      %1741 = vperm.xlu0 %1740, %v213
      %v1742 = vpop.permute.xlu0 %1741
      %1744 = vset.pattern.permute.xlu0 2
      %1745 = vperm.xlu0 %1744, %v214
      %v1746 = vpop.permute.xlu0 %1745
      %1748 = vset.pattern.permute.xlu0 2
      %1749 = vperm.xlu0 %1748, %v215
      %v1750 = vpop.permute.xlu0 %1749
      %1752 = vset.pattern.permute.xlu0 2
      %1753 = vperm.xlu0 %1752, %v216
      %v1754 = vpop.permute.xlu0 %1753
      %1756 = vset.pattern.permute.xlu0 2
      %1757 = vperm.xlu0 %1756, %v217
      %v1758 = vpop.permute.xlu0 %1757
      %1760 = vset.pattern.permute.xlu0 2
      %1761 = vperm.xlu0 %1760, %v218
      %v1762 = vpop.permute.xlu0 %1761
      %1764 = vset.pattern.permute.xlu0 2
      %1765 = vperm.xlu0 %1764, %v219
      %v1766 = vpop.permute.xlu0 %1765
      %1768 = vset.pattern.permute.xlu0 2
      %1769 = vperm.xlu0 %1768, %v220
      %v1770 = vpop.permute.xlu0 %1769
      %1772 = vset.pattern.permute.xlu0 2
      %1773 = vperm.xlu0 %1772, %v221
      %v1774 = vpop.permute.xlu0 %1773
      %1776 = vset.pattern.permute.xlu0 2
      %1777 = vperm.xlu0 %1776, %v222
      %v1778 = vpop.permute.xlu0 %1777
      %1780 = vset.pattern.permute.xlu0 2
      %1781 = vperm.xlu0 %1780, %v223
      %v1782 = vpop.permute.xlu0 %1781
      %1784 = vset.pattern.permute.xlu0 2
      %1785 = vperm.xlu0 %1784, %v224
      %v1786 = vpop.permute.xlu0 %1785
      %1788 = vset.pattern.permute.xlu0 2
      %1789 = vperm.xlu0 %1788, %v225
      %v1790 = vpop.permute.xlu0 %1789
      %1792 = vset.pattern.permute.xlu0 2
      %1793 = vperm.xlu0 %1792, %v226
      %v1794 = vpop.permute.xlu0 %1793
      %1796 = vset.pattern.permute.xlu0 2
      %1797 = vperm.xlu0 %1796, %v227
      %v1798 = vpop.permute.xlu0 %1797
      %1800 = vset.pattern.permute.xlu0 2
      %1801 = vperm.xlu0 %1800, %v228
      %v1802 = vpop.permute.xlu0 %1801
      %1804 = vset.pattern.permute.xlu0 2
      %1805 = vperm.xlu0 %1804, %v229
      %v1806 = vpop.permute.xlu0 %1805
      %1808 = vset.pattern.permute.xlu0 2
      %1809 = vperm.xlu0 %1808, %v230
      %v1810 = vpop.permute.xlu0 %1809
      %1812 = vset.pattern.permute.xlu0 2
      %1813 = vperm.xlu0 %1812, %v231
      %v1814 = vpop.permute.xlu0 %1813
      %1816 = vset.pattern.permute.xlu0 2
      %1817 = vperm.xlu0 %1816, %v232
      %v1818 = vpop.permute.xlu0 %1817
      %1820 = vset.pattern.permute.xlu0 2
      %1821 = vperm.xlu0 %1820, %v233
      %v1822 = vpop.permute.xlu0 %1821
      %1824 = vset.pattern.permute.xlu0 2
      %1825 = vperm.xlu0 %1824, %v234
      %v1826 = vpop.permute.xlu0 %1825
      %vm1828 = vcmp.gt.f32.partialorder %v1702, %v399
      %vm1829 = vcmp.gt.f32.partialorder %v1702, %v403
      %vm1830 = vcmp.gt.f32.partialorder %v1706, %v399
      %vm1831 = vcmp.gt.f32.partialorder %v1706, %v403
      %vm1832 = vcmp.gt.f32.partialorder %v1710, %v399
      %vm1833 = vcmp.gt.f32.partialorder %v1710, %v403
      %vm1834 = vcmp.gt.f32.partialorder %v1714, %v399
      %vm1835 = vcmp.gt.f32.partialorder %v1714, %v403
      %vm1836 = vcmp.gt.f32.partialorder %v1718, %v399
      %vm1837 = vcmp.gt.f32.partialorder %v1718, %v403
      %vm1838 = vcmp.gt.f32.partialorder %v1722, %v399
      %vm1839 = vcmp.gt.f32.partialorder %v1722, %v403
      %vm1840 = vcmp.gt.f32.partialorder %v1726, %v399
      %vm1841 = vcmp.gt.f32.partialorder %v1726, %v403
      %vm1842 = vcmp.gt.f32.partialorder %v1730, %v399
      %vm1843 = vcmp.gt.f32.partialorder %v1730, %v403
      %vm1844 = vcmp.gt.f32.partialorder %v1734, %v399
      %vm1845 = vcmp.gt.f32.partialorder %v1734, %v403
      %vm1846 = vcmp.gt.f32.partialorder %v1738, %v399
      %vm1847 = vcmp.gt.f32.partialorder %v1738, %v403
      %vm1848 = vcmp.gt.f32.partialorder %v1742, %v399
      %vm1849 = vcmp.gt.f32.partialorder %v1742, %v403
      %vm1850 = vcmp.gt.f32.partialorder %v1746, %v399
      %vm1851 = vcmp.gt.f32.partialorder %v1746, %v403
      %vm1852 = vcmp.gt.f32.partialorder %v1750, %v399
      %vm1853 = vcmp.gt.f32.partialorder %v1750, %v403
      %vm1854 = vcmp.gt.f32.partialorder %v1754, %v399
      %vm1855 = vcmp.gt.f32.partialorder %v1754, %v403
      %vm1856 = vcmp.gt.f32.partialorder %v1758, %v399
      %vm1857 = vcmp.gt.f32.partialorder %v1758, %v403
      %vm1858 = vcmp.gt.f32.partialorder %v1762, %v399
      %vm1859 = vcmp.gt.f32.partialorder %v1762, %v403
      %vm1860 = vcmp.gt.f32.partialorder %v1766, %v399
      %vm1861 = vcmp.gt.f32.partialorder %v1766, %v403
      %vm1862 = vcmp.gt.f32.partialorder %v1770, %v399
      %vm1863 = vcmp.gt.f32.partialorder %v1770, %v403
      %vm1864 = vcmp.gt.f32.partialorder %v1774, %v399
      %vm1865 = vcmp.gt.f32.partialorder %v1774, %v403
      %vm1866 = vcmp.gt.f32.partialorder %v1778, %v399
      %vm1867 = vcmp.gt.f32.partialorder %v1778, %v403
      %vm1868 = vcmp.gt.f32.partialorder %v1782, %v399
      %vm1869 = vcmp.gt.f32.partialorder %v1782, %v403
      %vm1870 = vcmp.gt.f32.partialorder %v1786, %v399
      %vm1871 = vcmp.gt.f32.partialorder %v1786, %v403
      %vm1872 = vcmp.gt.f32.partialorder %v1790, %v399
      %vm1873 = vcmp.gt.f32.partialorder %v1790, %v403
      %vm1874 = vcmp.gt.f32.partialorder %v1794, %v399
      %vm1875 = vcmp.gt.f32.partialorder %v1794, %v403
      %vm1876 = vcmp.gt.f32.partialorder %v1798, %v399
      %vm1877 = vcmp.gt.f32.partialorder %v1798, %v403
      %vm1878 = vcmp.gt.f32.partialorder %v1802, %v399
      %vm1879 = vcmp.gt.f32.partialorder %v1802, %v403
      %vm1880 = vcmp.gt.f32.partialorder %v1806, %v399
      %vm1881 = vcmp.gt.f32.partialorder %v1806, %v403
      %vm1882 = vcmp.gt.f32.partialorder %v1810, %v399
      %vm1883 = vcmp.gt.f32.partialorder %v1810, %v403
      %vm1884 = vcmp.gt.f32.partialorder %v1814, %v399
      %vm1885 = vcmp.gt.f32.partialorder %v1814, %v403
      %vm1886 = vcmp.gt.f32.partialorder %v1818, %v399
      %vm1887 = vcmp.gt.f32.partialorder %v1818, %v403
      %vm1888 = vcmp.gt.f32.partialorder %v1822, %v399
      %vm1889 = vcmp.gt.f32.partialorder %v1822, %v403
      %vm1890 = vcmp.gt.f32.partialorder %v1826, %v399
      %vm1891 = vcmp.gt.f32.partialorder %v1826, %v403
      %vm1892 = vcmp.le.f32.partialorder %v1702, %v474
      %vm1893 = vcmp.le.f32.partialorder %v1702, %v478
      %vm1894 = vcmp.le.f32.partialorder %v1706, %v474
      %vm1895 = vcmp.le.f32.partialorder %v1706, %v478
      %vm1896 = vcmp.le.f32.partialorder %v1710, %v474
      %vm1897 = vcmp.le.f32.partialorder %v1710, %v478
      %vm1898 = vcmp.le.f32.partialorder %v1714, %v474
      %vm1899 = vcmp.le.f32.partialorder %v1714, %v478
      %vm1900 = vcmp.le.f32.partialorder %v1718, %v474
      %vm1901 = vcmp.le.f32.partialorder %v1718, %v478
      %vm1902 = vcmp.le.f32.partialorder %v1722, %v474
      %vm1903 = vcmp.le.f32.partialorder %v1722, %v478
      %vm1904 = vcmp.le.f32.partialorder %v1726, %v474
      %vm1905 = vcmp.le.f32.partialorder %v1726, %v478
      %vm1906 = vcmp.le.f32.partialorder %v1730, %v474
      %vm1907 = vcmp.le.f32.partialorder %v1730, %v478
      %vm1908 = vcmp.le.f32.partialorder %v1734, %v474
      %vm1909 = vcmp.le.f32.partialorder %v1734, %v478
      %vm1910 = vcmp.le.f32.partialorder %v1738, %v474
      %vm1911 = vcmp.le.f32.partialorder %v1738, %v478
      %vm1912 = vcmp.le.f32.partialorder %v1742, %v474
      %vm1913 = vcmp.le.f32.partialorder %v1742, %v478
      %vm1914 = vcmp.le.f32.partialorder %v1746, %v474
      %vm1915 = vcmp.le.f32.partialorder %v1746, %v478
      %vm1916 = vcmp.le.f32.partialorder %v1750, %v474
      %vm1917 = vcmp.le.f32.partialorder %v1750, %v478
      %vm1918 = vcmp.le.f32.partialorder %v1754, %v474
      %vm1919 = vcmp.le.f32.partialorder %v1754, %v478
      %vm1920 = vcmp.le.f32.partialorder %v1758, %v474
      %vm1921 = vcmp.le.f32.partialorder %v1758, %v478
      %vm1922 = vcmp.le.f32.partialorder %v1762, %v474
      %vm1923 = vcmp.le.f32.partialorder %v1762, %v478
      %vm1924 = vcmp.le.f32.partialorder %v1766, %v474
      %vm1925 = vcmp.le.f32.partialorder %v1766, %v478
      %vm1926 = vcmp.le.f32.partialorder %v1770, %v474
      %vm1927 = vcmp.le.f32.partialorder %v1770, %v478
      %vm1928 = vcmp.le.f32.partialorder %v1774, %v474
      %vm1929 = vcmp.le.f32.partialorder %v1774, %v478
      %vm1930 = vcmp.le.f32.partialorder %v1778, %v474
      %vm1931 = vcmp.le.f32.partialorder %v1778, %v478
      %vm1932 = vcmp.le.f32.partialorder %v1782, %v474
      %vm1933 = vcmp.le.f32.partialorder %v1782, %v478
      %vm1934 = vcmp.le.f32.partialorder %v1786, %v474
      %vm1935 = vcmp.le.f32.partialorder %v1786, %v478
      %vm1936 = vcmp.le.f32.partialorder %v1790, %v474
      %vm1937 = vcmp.le.f32.partialorder %v1790, %v478
      %vm1938 = vcmp.le.f32.partialorder %v1794, %v474
      %vm1939 = vcmp.le.f32.partialorder %v1794, %v478
      %vm1940 = vcmp.le.f32.partialorder %v1798, %v474
      %vm1941 = vcmp.le.f32.partialorder %v1798, %v478
      %vm1942 = vcmp.le.f32.partialorder %v1802, %v474
      %vm1943 = vcmp.le.f32.partialorder %v1802, %v478
      %vm1944 = vcmp.le.f32.partialorder %v1806, %v474
      %vm1945 = vcmp.le.f32.partialorder %v1806, %v478
      %vm1946 = vcmp.le.f32.partialorder %v1810, %v474
      %vm1947 = vcmp.le.f32.partialorder %v1810, %v478
      %vm1948 = vcmp.le.f32.partialorder %v1814, %v474
      %vm1949 = vcmp.le.f32.partialorder %v1814, %v478
      %vm1950 = vcmp.le.f32.partialorder %v1818, %v474
      %vm1951 = vcmp.le.f32.partialorder %v1818, %v478
      %vm1952 = vcmp.le.f32.partialorder %v1822, %v474
      %vm1953 = vcmp.le.f32.partialorder %v1822, %v478
      %vm1954 = vcmp.le.f32.partialorder %v1826, %v474
      %vm1955 = vcmp.le.f32.partialorder %v1826, %v478
      %vm1956 = vmand %vm1828, %vm1892
      %vm1957 = vmand %vm1829, %vm1893
      %vm1958 = vmand %vm1830, %vm1894
      %vm1959 = vmand %vm1831, %vm1895
      %vm1960 = vmand %vm1832, %vm1896
      %vm1961 = vmand %vm1833, %vm1897
      %vm1962 = vmand %vm1834, %vm1898
      %vm1963 = vmand %vm1835, %vm1899
      %vm1964 = vmand %vm1836, %vm1900
      %vm1965 = vmand %vm1837, %vm1901
      %vm1966 = vmand %vm1838, %vm1902
      %vm1967 = vmand %vm1839, %vm1903
      %vm1968 = vmand %vm1840, %vm1904
      %vm1969 = vmand %vm1841, %vm1905
      %vm1970 = vmand %vm1842, %vm1906
      %vm1971 = vmand %vm1843, %vm1907
      %vm1972 = vmand %vm1844, %vm1908
      %vm1973 = vmand %vm1845, %vm1909
      %vm1974 = vmand %vm1846, %vm1910
      %vm1975 = vmand %vm1847, %vm1911
      %vm1976 = vmand %vm1848, %vm1912
      %vm1977 = vmand %vm1849, %vm1913
      %vm1978 = vmand %vm1850, %vm1914
      %vm1979 = vmand %vm1851, %vm1915
      %vm1980 = vmand %vm1852, %vm1916
      %vm1981 = vmand %vm1853, %vm1917
      %vm1982 = vmand %vm1854, %vm1918
      %vm1983 = vmand %vm1855, %vm1919
      %vm1984 = vmand %vm1856, %vm1920
      %vm1985 = vmand %vm1857, %vm1921
      %vm1986 = vmand %vm1858, %vm1922
      %vm1987 = vmand %vm1859, %vm1923
      %vm1988 = vmand %vm1860, %vm1924
      %vm1989 = vmand %vm1861, %vm1925
      %vm1990 = vmand %vm1862, %vm1926
      %vm1991 = vmand %vm1863, %vm1927
      %vm1992 = vmand %vm1864, %vm1928
      %vm1993 = vmand %vm1865, %vm1929
      %vm1994 = vmand %vm1866, %vm1930
      %vm1995 = vmand %vm1867, %vm1931
      %vm1996 = vmand %vm1868, %vm1932
      %vm1997 = vmand %vm1869, %vm1933
      %vm1998 = vmand %vm1870, %vm1934
      %vm1999 = vmand %vm1871, %vm1935
      %vm2000 = vmand %vm1872, %vm1936
      %vm2001 = vmand %vm1873, %vm1937
      %vm2002 = vmand %vm1874, %vm1938
      %vm2003 = vmand %vm1875, %vm1939
      %vm2004 = vmand %vm1876, %vm1940
      %vm2005 = vmand %vm1877, %vm1941
      %vm2006 = vmand %vm1878, %vm1942
      %vm2007 = vmand %vm1879, %vm1943
      %vm2008 = vmand %vm1880, %vm1944
      %vm2009 = vmand %vm1881, %vm1945
      %vm2010 = vmand %vm1882, %vm1946
      %vm2011 = vmand %vm1883, %vm1947
      %vm2012 = vmand %vm1884, %vm1948
      %vm2013 = vmand %vm1885, %vm1949
      %vm2014 = vmand %vm1886, %vm1950
      %vm2015 = vmand %vm1887, %vm1951
      %vm2016 = vmand %vm1888, %vm1952
      %vm2017 = vmand %vm1889, %vm1953
      %vm2018 = vmand %vm1890, %vm1954
      %vm2019 = vmand %vm1891, %vm1955
      %v2020 = vsel %vm1956, 1, 0
      %v2021 = vsel %vm1957, 1, 0
      %v2022 = vsel %vm1958, 1, 0
      %v2023 = vsel %vm1959, 1, 0
      %v2024 = vsel %vm1960, 1, 0
      %v2025 = vsel %vm1961, 1, 0
      %v2026 = vsel %vm1962, 1, 0
      %v2027 = vsel %vm1963, 1, 0
      %v2028 = vsel %vm1964, 1, 0
      %v2029 = vsel %vm1965, 1, 0
      %v2030 = vsel %vm1966, 1, 0
      %v2031 = vsel %vm1967, 1, 0
      %v2032 = vsel %vm1968, 1, 0
      %v2033 = vsel %vm1969, 1, 0
      %v2034 = vsel %vm1970, 1, 0
      %v2035 = vsel %vm1971, 1, 0
      %v2036 = vsel %vm1972, 1, 0
      %v2037 = vsel %vm1973, 1, 0
      %v2038 = vsel %vm1974, 1, 0
      %v2039 = vsel %vm1975, 1, 0
      %v2040 = vsel %vm1976, 1, 0
      %v2041 = vsel %vm1977, 1, 0
      %v2042 = vsel %vm1978, 1, 0
      %v2043 = vsel %vm1979, 1, 0
      %v2044 = vsel %vm1980, 1, 0
      %v2045 = vsel %vm1981, 1, 0
      %v2046 = vsel %vm1982, 1, 0
      %v2047 = vsel %vm1983, 1, 0
      %v2048 = vsel %vm1984, 1, 0
      %v2049 = vsel %vm1985, 1, 0
      %v2050 = vsel %vm1986, 1, 0
      %v2051 = vsel %vm1987, 1, 0
      %v2052 = vsel %vm1988, 1, 0
      %v2053 = vsel %vm1989, 1, 0
      %v2054 = vsel %vm1990, 1, 0
      %v2055 = vsel %vm1991, 1, 0
      %v2056 = vsel %vm1992, 1, 0
      %v2057 = vsel %vm1993, 1, 0
      %v2058 = vsel %vm1994, 1, 0
      %v2059 = vsel %vm1995, 1, 0
      %v2060 = vsel %vm1996, 1, 0
      %v2061 = vsel %vm1997, 1, 0
      %v2062 = vsel %vm1998, 1, 0
      %v2063 = vsel %vm1999, 1, 0
      %v2064 = vsel %vm2000, 1, 0
      %v2065 = vsel %vm2001, 1, 0
      %v2066 = vsel %vm2002, 1, 0
      %v2067 = vsel %vm2003, 1, 0
      %v2068 = vsel %vm2004, 1, 0
      %v2069 = vsel %vm2005, 1, 0
      %v2070 = vsel %vm2006, 1, 0
      %v2071 = vsel %vm2007, 1, 0
      %v2072 = vsel %vm2008, 1, 0
      %v2073 = vsel %vm2009, 1, 0
      %v2074 = vsel %vm2010, 1, 0
      %v2075 = vsel %vm2011, 1, 0
      %v2076 = vsel %vm2012, 1, 0
      %v2077 = vsel %vm2013, 1, 0
      %v2078 = vsel %vm2014, 1, 0
      %v2079 = vsel %vm2015, 1, 0
      %v2080 = vsel %vm2016, 1, 0
      %v2081 = vsel %vm2017, 1, 0
      %v2082 = vsel %vm2018, 1, 0
      %v2083 = vsel %vm2019, 1, 0
      %v2084 = vcvt.s32.f32 %v2020
      %v2085 = vcvt.s32.f32 %v2021
      %v2086 = vcvt.s32.f32 %v2022
      %v2087 = vcvt.s32.f32 %v2023
      %v2088 = vcvt.s32.f32 %v2024
      %v2089 = vcvt.s32.f32 %v2025
      %v2090 = vcvt.s32.f32 %v2026
      %v2091 = vcvt.s32.f32 %v2027
      %v2092 = vcvt.s32.f32 %v2028
      %v2093 = vcvt.s32.f32 %v2029
      %v2094 = vcvt.s32.f32 %v2030
      %v2095 = vcvt.s32.f32 %v2031
      %v2096 = vcvt.s32.f32 %v2032
      %v2097 = vcvt.s32.f32 %v2033
      %v2098 = vcvt.s32.f32 %v2034
      %v2099 = vcvt.s32.f32 %v2035
      %v2100 = vcvt.s32.f32 %v2036
      %v2101 = vcvt.s32.f32 %v2037
      %v2102 = vcvt.s32.f32 %v2038
      %v2103 = vcvt.s32.f32 %v2039
      %v2104 = vcvt.s32.f32 %v2040
      %v2105 = vcvt.s32.f32 %v2041
      %v2106 = vcvt.s32.f32 %v2042
      %v2107 = vcvt.s32.f32 %v2043
      %v2108 = vcvt.s32.f32 %v2044
      %v2109 = vcvt.s32.f32 %v2045
      %v2110 = vcvt.s32.f32 %v2046
      %v2111 = vcvt.s32.f32 %v2047
      %v2112 = vcvt.s32.f32 %v2048
      %v2113 = vcvt.s32.f32 %v2049
      %v2114 = vcvt.s32.f32 %v2050
      %v2115 = vcvt.s32.f32 %v2051
      %v2116 = vcvt.s32.f32 %v2052
      %v2117 = vcvt.s32.f32 %v2053
      %v2118 = vcvt.s32.f32 %v2054
      %v2119 = vcvt.s32.f32 %v2055
      %v2120 = vcvt.s32.f32 %v2056
      %v2121 = vcvt.s32.f32 %v2057
      %v2122 = vcvt.s32.f32 %v2058
      %v2123 = vcvt.s32.f32 %v2059
      %v2124 = vcvt.s32.f32 %v2060
      %v2125 = vcvt.s32.f32 %v2061
      %v2126 = vcvt.s32.f32 %v2062
      %v2127 = vcvt.s32.f32 %v2063
      %v2128 = vcvt.s32.f32 %v2064
      %v2129 = vcvt.s32.f32 %v2065
      %v2130 = vcvt.s32.f32 %v2066
      %v2131 = vcvt.s32.f32 %v2067
      %v2132 = vcvt.s32.f32 %v2068
      %v2133 = vcvt.s32.f32 %v2069
      %v2134 = vcvt.s32.f32 %v2070
      %v2135 = vcvt.s32.f32 %v2071
      %v2136 = vcvt.s32.f32 %v2072
      %v2137 = vcvt.s32.f32 %v2073
      %v2138 = vcvt.s32.f32 %v2074
      %v2139 = vcvt.s32.f32 %v2075
      %v2140 = vcvt.s32.f32 %v2076
      %v2141 = vcvt.s32.f32 %v2077
      %v2142 = vcvt.s32.f32 %v2078
      %v2143 = vcvt.s32.f32 %v2079
      %v2144 = vcvt.s32.f32 %v2080
      %v2145 = vcvt.s32.f32 %v2081
      %v2146 = vcvt.s32.f32 %v2082
      %v2147 = vcvt.s32.f32 %v2083
      %s2148 = scalar_lea.vmem %s3, 512
      %v2149 = vld [vmem:[%s2148] sm:$0xff]
      %v2150 = vld [vmem:[%s2148 + $0x8] sm:$0xff]
      %v2151 = vld [vmem:[%s2148 + $0x10] sm:$0xff]
      %v2152 = vld [vmem:[%s2148 + $0x18] sm:$0xff]
      %v2153 = vld [vmem:[%s2148 + $0x20] sm:$0xff]
      %v2154 = vld [vmem:[%s2148 + $0x28] sm:$0xff]
      %v2155 = vld [vmem:[%s2148 + $0x30] sm:$0xff]
      %v2156 = vld [vmem:[%s2148 + $0x38] sm:$0xff]
      %v2157 = vld [vmem:[%s2148 + $0x40] sm:$0xff]
      %v2158 = vld [vmem:[%s2148 + $0x48] sm:$0xff]
      %v2159 = vld [vmem:[%s2148 + $0x50] sm:$0xff]
      %v2160 = vld [vmem:[%s2148 + $0x58] sm:$0xff]
      %v2161 = vld [vmem:[%s2148 + $0x60] sm:$0xff]
      %v2162 = vld [vmem:[%s2148 + $0x68] sm:$0xff]
      %v2163 = vld [vmem:[%s2148 + $0x70] sm:$0xff]
      %v2164 = vld [vmem:[%s2148 + $0x78] sm:$0xff]
      %v2165 = vld [vmem:[%s2148 + $0x80] sm:$0xff]
      %v2166 = vld [vmem:[%s2148 + $0x88] sm:$0xff]
      %v2167 = vld [vmem:[%s2148 + $0x90] sm:$0xff]
      %v2168 = vld [vmem:[%s2148 + $0x98] sm:$0xff]
      %v2169 = vld [vmem:[%s2148 + $0xa0] sm:$0xff]
      %v2170 = vld [vmem:[%s2148 + $0xa8] sm:$0xff]
      %v2171 = vld [vmem:[%s2148 + $0xb0] sm:$0xff]
      %v2172 = vld [vmem:[%s2148 + $0xb8] sm:$0xff]
      %v2173 = vld [vmem:[%s2148 + $0xc0] sm:$0xff]
      %v2174 = vld [vmem:[%s2148 + $0xc8] sm:$0xff]
      %v2175 = vld [vmem:[%s2148 + $0xd0] sm:$0xff]
      %v2176 = vld [vmem:[%s2148 + $0xd8] sm:$0xff]
      %v2177 = vld [vmem:[%s2148 + $0xe0] sm:$0xff]
      %v2178 = vld [vmem:[%s2148 + $0xe8] sm:$0xff]
      %v2179 = vld [vmem:[%s2148 + $0xf0] sm:$0xff]
      %v2180 = vld [vmem:[%s2148 + $0xf8] sm:$0xff]
      %2181 = vmatprep.subr.mxu0 0.0
      %2182 = vmatpush1.msra.mxu0 %v2164
      %2183 = vmatprep.subr.mxu0 0.0
      %2184 = vmatpush1.msra.mxu0 %v2163
      %2185 = vmatprep.subr.mxu0 0.0
      %2186 = vmatpush1.msra.mxu0 %v2162
      %2187 = vmatprep.subr.mxu0 0.0
      %2188 = vmatpush1.msra.mxu0 %v2161
      %2189 = vmatprep.subr.mxu0 0.0
      %2190 = vmatpush1.msra.mxu0 %v2160
      %2191 = vmatprep.subr.mxu0 0.0
      %2192 = vmatpush1.msra.mxu0 %v2159
      %2193 = vmatprep.subr.mxu0 0.0
      %2194 = vmatpush1.msra.mxu0 %v2158
      %2195 = vmatprep.subr.mxu0 0.0
      %2196 = vmatpush1.msra.mxu0 %v2157
      %2197 = vmatprep.subr.mxu0 0.0
      %2198 = vmatpush1.msra.mxu0 %v2156
      %2199 = vmatprep.subr.mxu0 0.0
      %2200 = vmatpush1.msra.mxu0 %v2155
      %2201 = vmatprep.subr.mxu0 0.0
      %2202 = vmatpush1.msra.mxu0 %v2154
      %2203 = vmatprep.subr.mxu0 0.0
      %2204 = vmatpush1.msra.mxu0 %v2153
      %2205 = vmatprep.subr.mxu0 0.0
      %2206 = vmatpush1.msra.mxu0 %v2152
      %2207 = vmatprep.subr.mxu0 0.0
      %2208 = vmatpush1.msra.mxu0 %v2151
      %2209 = vmatprep.subr.mxu0 0.0
      %2210 = vmatpush1.msra.mxu0 %v2150
      %2211 = vmatprep.subr.mxu0 0.0
      %2212 = vmatpush1.msra.mxu0 %v2149
      %2213 = vmatprep.subr.mxu0 0.0
      %2214 = vmatpush2.msra.mxu0 %v2180
      %2215 = vmatprep.subr.mxu0 0.0
      %2216 = vmatpush2.msra.mxu0 %v2179
      %2217 = vmatprep.subr.mxu0 0.0
      %2218 = vmatpush2.msra.mxu0 %v2178
      %2219 = vmatprep.subr.mxu0 0.0
      %2220 = vmatpush2.msra.mxu0 %v2177
      %2221 = vmatprep.subr.mxu0 0.0
      %2222 = vmatpush2.msra.mxu0 %v2176
      %2223 = vmatprep.subr.mxu0 0.0
      %2224 = vmatpush2.msra.mxu0 %v2175
      %2225 = vmatprep.subr.mxu0 0.0
      %2226 = vmatpush2.msra.mxu0 %v2174
      %2227 = vmatprep.subr.mxu0 0.0
      %2228 = vmatpush2.msra.mxu0 %v2173
      %2229 = vmatprep.subr.mxu0 0.0
      %2230 = vmatpush2.msra.mxu0 %v2172
      %2231 = vmatprep.subr.mxu0 0.0
      %2232 = vmatpush2.msra.mxu0 %v2171
      %2233 = vmatprep.subr.mxu0 0.0
      %2234 = vmatpush2.msra.mxu0 %v2170
      %2235 = vmatprep.subr.mxu0 0.0
      %2236 = vmatpush2.msra.mxu0 %v2169
      %2237 = vmatprep.subr.mxu0 0.0
      %2238 = vmatpush2.msra.mxu0 %v2168
      %2239 = vmatprep.subr.mxu0 0.0
      %2240 = vmatpush2.msra.mxu0 %v2167
      %2241 = vmatprep.subr.mxu0 0.0
      %2242 = vmatpush2.msra.mxu0 %v2166
      %2243 = vmatprep.subr.mxu0 0.0
      %2244 = vmatpush2.msra.mxu0 %v2165
      %2245 = vmatprep.mubr.f32.mxu0 %v2085
      %2246 = vmatmul.mubr.f32.gmra.mxu0 %v2084
      %v2247 = vpop.f32.mrf.mxu0
      %v2248 = vadd.f32 0.0, %v2247
      %v2249 = vpop.f32.mrf.mxu0
      %2250 = vmatprep.mubr.f32.mxu0 %v2087
      %2251 = vmatmul.mubr.f32.gmra.mxu0 %v2086
      %v2252 = vpop.f32.mrf.mxu0
      %v2253 = vadd.f32 0.0, %v2252
      %v2254 = vpop.f32.mrf.mxu0
      %2255 = vmatprep.mubr.f32.mxu0 %v2089
      %2256 = vmatmul.mubr.f32.gmra.mxu0 %v2088
      %v2257 = vpop.f32.mrf.mxu0
      %v2258 = vadd.f32 0.0, %v2257
      %v2259 = vpop.f32.mrf.mxu0
      %2260 = vmatprep.mubr.f32.mxu0 %v2091
      %2261 = vmatmul.mubr.f32.gmra.mxu0 %v2090
      %v2262 = vpop.f32.mrf.mxu0
      %v2263 = vadd.f32 0.0, %v2262
      %v2264 = vpop.f32.mrf.mxu0
      %2265 = vmatprep.mubr.f32.mxu0 %v2093
      %2266 = vmatmul.mubr.f32.gmra.mxu0 %v2092
      %v2267 = vpop.f32.mrf.mxu0
      %v2268 = vadd.f32 0.0, %v2267
      %v2269 = vpop.f32.mrf.mxu0
      %2270 = vmatprep.mubr.f32.mxu0 %v2095
      %2271 = vmatmul.mubr.f32.gmra.mxu0 %v2094
      %v2272 = vpop.f32.mrf.mxu0
      %v2273 = vadd.f32 0.0, %v2272
      %v2274 = vpop.f32.mrf.mxu0
      %2275 = vmatprep.mubr.f32.mxu0 %v2097
      %2276 = vmatmul.mubr.f32.gmra.mxu0 %v2096
      %v2277 = vpop.f32.mrf.mxu0
      %v2278 = vadd.f32 0.0, %v2277
      %v2279 = vpop.f32.mrf.mxu0
      %2280 = vmatprep.mubr.f32.mxu0 %v2099
      %2281 = vmatmul.mubr.f32.gmra.mxu0 %v2098
      %v2282 = vpop.f32.mrf.mxu0
      %v2283 = vadd.f32 0.0, %v2282
      %v2284 = vpop.f32.mrf.mxu0
      %2285 = vmatprep.mubr.f32.mxu0 %v2101
      %2286 = vmatmul.mubr.f32.gmra.mxu0 %v2100
      %v2287 = vpop.f32.mrf.mxu0
      %v2288 = vadd.f32 0.0, %v2287
      %v2289 = vpop.f32.mrf.mxu0
      %2290 = vmatprep.mubr.f32.mxu0 %v2103
      %2291 = vmatmul.mubr.f32.gmra.mxu0 %v2102
      %v2292 = vpop.f32.mrf.mxu0
      %v2293 = vadd.f32 0.0, %v2292
      %v2294 = vpop.f32.mrf.mxu0
      %2295 = vmatprep.mubr.f32.mxu0 %v2105
      %2296 = vmatmul.mubr.f32.gmra.mxu0 %v2104
      %v2297 = vpop.f32.mrf.mxu0
      %v2298 = vadd.f32 0.0, %v2297
      %v2299 = vpop.f32.mrf.mxu0
      %2300 = vmatprep.mubr.f32.mxu0 %v2107
      %2301 = vmatmul.mubr.f32.gmra.mxu0 %v2106
      %v2302 = vpop.f32.mrf.mxu0
      %v2303 = vadd.f32 0.0, %v2302
      %v2304 = vpop.f32.mrf.mxu0
      %2305 = vmatprep.mubr.f32.mxu0 %v2109
      %2306 = vmatmul.mubr.f32.gmra.mxu0 %v2108
      %v2307 = vpop.f32.mrf.mxu0
      %v2308 = vadd.f32 0.0, %v2307
      %v2309 = vpop.f32.mrf.mxu0
      %2310 = vmatprep.mubr.f32.mxu0 %v2111
      %2311 = vmatmul.mubr.f32.gmra.mxu0 %v2110
      %v2312 = vpop.f32.mrf.mxu0
      %v2313 = vadd.f32 0.0, %v2312
      %v2314 = vpop.f32.mrf.mxu0
      %2315 = vmatprep.mubr.f32.mxu0 %v2113
      %2316 = vmatmul.mubr.f32.gmra.mxu0 %v2112
      %v2317 = vpop.f32.mrf.mxu0
      %v2318 = vadd.f32 0.0, %v2317
      %v2319 = vpop.f32.mrf.mxu0
      %2320 = vmatprep.mubr.f32.mxu0 %v2115
      %2321 = vmatmul.mubr.f32.gmra.mxu0 %v2114
      %v2322 = vpop.f32.mrf.mxu0
      %v2323 = vadd.f32 0.0, %v2322
      %v2324 = vpop.f32.mrf.mxu0
      %2325 = vmatprep.mubr.f32.mxu0 %v2117
      %2326 = vmatmul.mubr.f32.gmra.mxu0 %v2116
      %v2327 = vpop.f32.mrf.mxu0
      %v2328 = vadd.f32 0.0, %v2327
      %v2329 = vpop.f32.mrf.mxu0
      %2330 = vmatprep.mubr.f32.mxu0 %v2119
      %2331 = vmatmul.mubr.f32.gmra.mxu0 %v2118
      %v2332 = vpop.f32.mrf.mxu0
      %v2333 = vadd.f32 0.0, %v2332
      %v2334 = vpop.f32.mrf.mxu0
      %2335 = vmatprep.mubr.f32.mxu0 %v2121
      %2336 = vmatmul.mubr.f32.gmra.mxu0 %v2120
      %v2337 = vpop.f32.mrf.mxu0
      %v2338 = vadd.f32 0.0, %v2337
      %v2339 = vpop.f32.mrf.mxu0
      %2340 = vmatprep.mubr.f32.mxu0 %v2123
      %2341 = vmatmul.mubr.f32.gmra.mxu0 %v2122
      %v2342 = vpop.f32.mrf.mxu0
      %v2343 = vadd.f32 0.0, %v2342
      %v2344 = vpop.f32.mrf.mxu0
      %2345 = vmatprep.mubr.f32.mxu0 %v2125
      %2346 = vmatmul.mubr.f32.gmra.mxu0 %v2124
      %v2347 = vpop.f32.mrf.mxu0
      %v2348 = vadd.f32 0.0, %v2347
      %v2349 = vpop.f32.mrf.mxu0
      %2350 = vmatprep.mubr.f32.mxu0 %v2127
      %2351 = vmatmul.mubr.f32.gmra.mxu0 %v2126
      %v2352 = vpop.f32.mrf.mxu0
      %v2353 = vadd.f32 0.0, %v2352
      %v2354 = vpop.f32.mrf.mxu0
      %2355 = vmatprep.mubr.f32.mxu0 %v2129
      %2356 = vmatmul.mubr.f32.gmra.mxu0 %v2128
      %v2357 = vpop.f32.mrf.mxu0
      %v2358 = vadd.f32 0.0, %v2357
      %v2359 = vpop.f32.mrf.mxu0
      %2360 = vmatprep.mubr.f32.mxu0 %v2131
      %2361 = vmatmul.mubr.f32.gmra.mxu0 %v2130
      %v2362 = vpop.f32.mrf.mxu0
      %v2363 = vadd.f32 0.0, %v2362
      %v2364 = vpop.f32.mrf.mxu0
      %2365 = vmatprep.mubr.f32.mxu0 %v2133
      %2366 = vmatmul.mubr.f32.gmra.mxu0 %v2132
      %v2367 = vpop.f32.mrf.mxu0
      %v2368 = vadd.f32 0.0, %v2367
      %v2369 = vpop.f32.mrf.mxu0
      %2370 = vmatprep.mubr.f32.mxu0 %v2135
      %2371 = vmatmul.mubr.f32.gmra.mxu0 %v2134
      %v2372 = vpop.f32.mrf.mxu0
      %v2373 = vadd.f32 0.0, %v2372
      %v2374 = vpop.f32.mrf.mxu0
      %2375 = vmatprep.mubr.f32.mxu0 %v2137
      %2376 = vmatmul.mubr.f32.gmra.mxu0 %v2136
      %v2377 = vpop.f32.mrf.mxu0
      %v2378 = vadd.f32 0.0, %v2377
      %v2379 = vpop.f32.mrf.mxu0
      %2380 = vmatprep.mubr.f32.mxu0 %v2139
      %2381 = vmatmul.mubr.f32.gmra.mxu0 %v2138
      %v2382 = vpop.f32.mrf.mxu0
      %v2383 = vadd.f32 0.0, %v2382
      %v2384 = vpop.f32.mrf.mxu0
      %2385 = vmatprep.mubr.f32.mxu0 %v2141
      %2386 = vmatmul.mubr.f32.gmra.mxu0 %v2140
      %v2387 = vpop.f32.mrf.mxu0
      %v2388 = vadd.f32 0.0, %v2387
      %v2389 = vpop.f32.mrf.mxu0
      %2390 = vmatprep.mubr.f32.mxu0 %v2143
      %2391 = vmatmul.mubr.f32.gmra.mxu0 %v2142
      %v2392 = vpop.f32.mrf.mxu0
      %v2393 = vadd.f32 0.0, %v2392
      %v2394 = vpop.f32.mrf.mxu0
      %2395 = vmatprep.mubr.f32.mxu0 %v2145
      %2396 = vmatmul.mubr.f32.gmra.mxu0 %v2144
      %v2397 = vpop.f32.mrf.mxu0
      %v2398 = vadd.f32 0.0, %v2397
      %v2399 = vpop.f32.mrf.mxu0
      %2400 = vmatprep.mubr.f32.mxu0 %v2147
      %2401 = vmatmul.mubr.f32.gmra.mxu0 %v2146
      %v2402 = vpop.f32.mrf.mxu0
      %v2403 = vadd.f32 0.0, %v2402
      %v2404 = vpop.f32.mrf.mxu0
      %2405 = vdwg.mxu0
      %v2406 = vadd.f32 %v1542, %v2248
      %v2407 = vadd.f32 %v1547, %v2253
      %v2408 = vadd.f32 %v1552, %v2258
      %v2409 = vadd.f32 %v1557, %v2263
      %v2410 = vadd.f32 %v1562, %v2268
      %v2411 = vadd.f32 %v1567, %v2273
      %v2412 = vadd.f32 %v1572, %v2278
      %v2413 = vadd.f32 %v1577, %v2283
      %v2414 = vadd.f32 %v1582, %v2288
      %v2415 = vadd.f32 %v1587, %v2293
      %v2416 = vadd.f32 %v1592, %v2298
      %v2417 = vadd.f32 %v1597, %v2303
      %v2418 = vadd.f32 %v1602, %v2308
      %v2419 = vadd.f32 %v1607, %v2313
      %v2420 = vadd.f32 %v1612, %v2318
      %v2421 = vadd.f32 %v1617, %v2323
      %v2422 = vadd.f32 %v1622, %v2328
      %v2423 = vadd.f32 %v1627, %v2333
      %v2424 = vadd.f32 %v1632, %v2338
      %v2425 = vadd.f32 %v1637, %v2343
      %v2426 = vadd.f32 %v1642, %v2348
      %v2427 = vadd.f32 %v1647, %v2353
      %v2428 = vadd.f32 %v1652, %v2358
      %v2429 = vadd.f32 %v1657, %v2363
      %v2430 = vadd.f32 %v1662, %v2368
      %v2431 = vadd.f32 %v1667, %v2373
      %v2432 = vadd.f32 %v1672, %v2378
      %v2433 = vadd.f32 %v1677, %v2383
      %v2434 = vadd.f32 %v1682, %v2388
      %v2435 = vadd.f32 %v1687, %v2393
      %v2436 = vadd.f32 %v1692, %v2398
      %v2437 = vadd.f32 %v1697, %v2403
      %2438 = vset.pattern.permute.xlu0 3
      %2439 = vperm.xlu0 %2438, %v203
      %v2440 = vpop.permute.xlu0 %2439
      %2442 = vset.pattern.permute.xlu0 3
      %2443 = vperm.xlu0 %2442, %v204
      %v2444 = vpop.permute.xlu0 %2443
      %2446 = vset.pattern.permute.xlu0 3
      %2447 = vperm.xlu0 %2446, %v205
      %v2448 = vpop.permute.xlu0 %2447
      %2450 = vset.pattern.permute.xlu0 3
      %2451 = vperm.xlu0 %2450, %v206
      %v2452 = vpop.permute.xlu0 %2451
      %2454 = vset.pattern.permute.xlu0 3
      %2455 = vperm.xlu0 %2454, %v207
      %v2456 = vpop.permute.xlu0 %2455
      %2458 = vset.pattern.permute.xlu0 3
      %2459 = vperm.xlu0 %2458, %v208
      %v2460 = vpop.permute.xlu0 %2459
      %2462 = vset.pattern.permute.xlu0 3
      %2463 = vperm.xlu0 %2462, %v209
      %v2464 = vpop.permute.xlu0 %2463
      %2466 = vset.pattern.permute.xlu0 3
      %2467 = vperm.xlu0 %2466, %v210
      %v2468 = vpop.permute.xlu0 %2467
      %2470 = vset.pattern.permute.xlu0 3
      %2471 = vperm.xlu0 %2470, %v211
      %v2472 = vpop.permute.xlu0 %2471
      %2474 = vset.pattern.permute.xlu0 3
      %2475 = vperm.xlu0 %2474, %v212
      %v2476 = vpop.permute.xlu0 %2475
      %2478 = vset.pattern.permute.xlu0 3
      %2479 = vperm.xlu0 %2478, %v213
      %v2480 = vpop.permute.xlu0 %2479
      %2482 = vset.pattern.permute.xlu0 3
      %2483 = vperm.xlu0 %2482, %v214
      %v2484 = vpop.permute.xlu0 %2483
      %2486 = vset.pattern.permute.xlu0 3
      %2487 = vperm.xlu0 %2486, %v215
      %v2488 = vpop.permute.xlu0 %2487
      %2490 = vset.pattern.permute.xlu0 3
      %2491 = vperm.xlu0 %2490, %v216
      %v2492 = vpop.permute.xlu0 %2491
      %2494 = vset.pattern.permute.xlu0 3
      %2495 = vperm.xlu0 %2494, %v217
      %v2496 = vpop.permute.xlu0 %2495
      %2498 = vset.pattern.permute.xlu0 3
      %2499 = vperm.xlu0 %2498, %v218
      %v2500 = vpop.permute.xlu0 %2499
      %2502 = vset.pattern.permute.xlu0 3
      %2503 = vperm.xlu0 %2502, %v219
      %v2504 = vpop.permute.xlu0 %2503
      %2506 = vset.pattern.permute.xlu0 3
      %2507 = vperm.xlu0 %2506, %v220
      %v2508 = vpop.permute.xlu0 %2507
      %2510 = vset.pattern.permute.xlu0 3
      %2511 = vperm.xlu0 %2510, %v221
      %v2512 = vpop.permute.xlu0 %2511
      %2514 = vset.pattern.permute.xlu0 3
      %2515 = vperm.xlu0 %2514, %v222
      %v2516 = vpop.permute.xlu0 %2515
      %2518 = vset.pattern.permute.xlu0 3
      %2519 = vperm.xlu0 %2518, %v223
      %v2520 = vpop.permute.xlu0 %2519
      %2522 = vset.pattern.permute.xlu0 3
      %2523 = vperm.xlu0 %2522, %v224
      %v2524 = vpop.permute.xlu0 %2523
      %2526 = vset.pattern.permute.xlu0 3
      %2527 = vperm.xlu0 %2526, %v225
      %v2528 = vpop.permute.xlu0 %2527
      %2530 = vset.pattern.permute.xlu0 3
      %2531 = vperm.xlu0 %2530, %v226
      %v2532 = vpop.permute.xlu0 %2531
      %2534 = vset.pattern.permute.xlu0 3
      %2535 = vperm.xlu0 %2534, %v227
      %v2536 = vpop.permute.xlu0 %2535
      %2538 = vset.pattern.permute.xlu0 3
      %2539 = vperm.xlu0 %2538, %v228
      %v2540 = vpop.permute.xlu0 %2539
      %2542 = vset.pattern.permute.xlu0 3
      %2543 = vperm.xlu0 %2542, %v229
      %v2544 = vpop.permute.xlu0 %2543
      %2546 = vset.pattern.permute.xlu0 3
      %2547 = vperm.xlu0 %2546, %v230
      %v2548 = vpop.permute.xlu0 %2547
      %2550 = vset.pattern.permute.xlu0 3
      %2551 = vperm.xlu0 %2550, %v231
      %v2552 = vpop.permute.xlu0 %2551
      %2554 = vset.pattern.permute.xlu0 3
      %2555 = vperm.xlu0 %2554, %v232
      %v2556 = vpop.permute.xlu0 %2555
      %2558 = vset.pattern.permute.xlu0 3
      %2559 = vperm.xlu0 %2558, %v233
      %v2560 = vpop.permute.xlu0 %2559
      %2562 = vset.pattern.permute.xlu0 3
      %2563 = vperm.xlu0 %2562, %v234
      %v2564 = vpop.permute.xlu0 %2563
      %vm2566 = vcmp.gt.f32.partialorder %v2440, %v399
      %vm2567 = vcmp.gt.f32.partialorder %v2440, %v403
      %vm2568 = vcmp.gt.f32.partialorder %v2444, %v399
      %vm2569 = vcmp.gt.f32.partialorder %v2444, %v403
      %vm2570 = vcmp.gt.f32.partialorder %v2448, %v399
      %vm2571 = vcmp.gt.f32.partialorder %v2448, %v403
      %vm2572 = vcmp.gt.f32.partialorder %v2452, %v399
      %vm2573 = vcmp.gt.f32.partialorder %v2452, %v403
      %vm2574 = vcmp.gt.f32.partialorder %v2456, %v399
      %vm2575 = vcmp.gt.f32.partialorder %v2456, %v403
      %vm2576 = vcmp.gt.f32.partialorder %v2460, %v399
      %vm2577 = vcmp.gt.f32.partialorder %v2460, %v403
      %vm2578 = vcmp.gt.f32.partialorder %v2464, %v399
      %vm2579 = vcmp.gt.f32.partialorder %v2464, %v403
      %vm2580 = vcmp.gt.f32.partialorder %v2468, %v399
      %vm2581 = vcmp.gt.f32.partialorder %v2468, %v403
      %vm2582 = vcmp.gt.f32.partialorder %v2472, %v399
      %vm2583 = vcmp.gt.f32.partialorder %v2472, %v403
      %vm2584 = vcmp.gt.f32.partialorder %v2476, %v399
      %vm2585 = vcmp.gt.f32.partialorder %v2476, %v403
      %vm2586 = vcmp.gt.f32.partialorder %v2480, %v399
      %vm2587 = vcmp.gt.f32.partialorder %v2480, %v403
      %vm2588 = vcmp.gt.f32.partialorder %v2484, %v399
      %vm2589 = vcmp.gt.f32.partialorder %v2484, %v403
      %vm2590 = vcmp.gt.f32.partialorder %v2488, %v399
      %vm2591 = vcmp.gt.f32.partialorder %v2488, %v403
      %vm2592 = vcmp.gt.f32.partialorder %v2492, %v399
      %vm2593 = vcmp.gt.f32.partialorder %v2492, %v403
      %vm2594 = vcmp.gt.f32.partialorder %v2496, %v399
      %vm2595 = vcmp.gt.f32.partialorder %v2496, %v403
      %vm2596 = vcmp.gt.f32.partialorder %v2500, %v399
      %vm2597 = vcmp.gt.f32.partialorder %v2500, %v403
      %vm2598 = vcmp.gt.f32.partialorder %v2504, %v399
      %vm2599 = vcmp.gt.f32.partialorder %v2504, %v403
      %vm2600 = vcmp.gt.f32.partialorder %v2508, %v399
      %vm2601 = vcmp.gt.f32.partialorder %v2508, %v403
      %vm2602 = vcmp.gt.f32.partialorder %v2512, %v399
      %vm2603 = vcmp.gt.f32.partialorder %v2512, %v403
      %vm2604 = vcmp.gt.f32.partialorder %v2516, %v399
      %vm2605 = vcmp.gt.f32.partialorder %v2516, %v403
      %vm2606 = vcmp.gt.f32.partialorder %v2520, %v399
      %vm2607 = vcmp.gt.f32.partialorder %v2520, %v403
      %vm2608 = vcmp.gt.f32.partialorder %v2524, %v399
      %vm2609 = vcmp.gt.f32.partialorder %v2524, %v403
      %vm2610 = vcmp.gt.f32.partialorder %v2528, %v399
      %vm2611 = vcmp.gt.f32.partialorder %v2528, %v403
      %vm2612 = vcmp.gt.f32.partialorder %v2532, %v399
      %vm2613 = vcmp.gt.f32.partialorder %v2532, %v403
      %vm2614 = vcmp.gt.f32.partialorder %v2536, %v399
      %vm2615 = vcmp.gt.f32.partialorder %v2536, %v403
      %vm2616 = vcmp.gt.f32.partialorder %v2540, %v399
      %vm2617 = vcmp.gt.f32.partialorder %v2540, %v403
      %vm2618 = vcmp.gt.f32.partialorder %v2544, %v399
      %vm2619 = vcmp.gt.f32.partialorder %v2544, %v403
      %vm2620 = vcmp.gt.f32.partialorder %v2548, %v399
      %vm2621 = vcmp.gt.f32.partialorder %v2548, %v403
      %vm2622 = vcmp.gt.f32.partialorder %v2552, %v399
      %vm2623 = vcmp.gt.f32.partialorder %v2552, %v403
      %vm2624 = vcmp.gt.f32.partialorder %v2556, %v399
      %vm2625 = vcmp.gt.f32.partialorder %v2556, %v403
      %vm2626 = vcmp.gt.f32.partialorder %v2560, %v399
      %vm2627 = vcmp.gt.f32.partialorder %v2560, %v403
      %vm2628 = vcmp.gt.f32.partialorder %v2564, %v399
      %vm2629 = vcmp.gt.f32.partialorder %v2564, %v403
      %vm2630 = vcmp.le.f32.partialorder %v2440, %v474
      %vm2631 = vcmp.le.f32.partialorder %v2440, %v478
      %vm2632 = vcmp.le.f32.partialorder %v2444, %v474
      %vm2633 = vcmp.le.f32.partialorder %v2444, %v478
      %vm2634 = vcmp.le.f32.partialorder %v2448, %v474
      %vm2635 = vcmp.le.f32.partialorder %v2448, %v478
      %vm2636 = vcmp.le.f32.partialorder %v2452, %v474
      %vm2637 = vcmp.le.f32.partialorder %v2452, %v478
      %vm2638 = vcmp.le.f32.partialorder %v2456, %v474
      %vm2639 = vcmp.le.f32.partialorder %v2456, %v478
      %vm2640 = vcmp.le.f32.partialorder %v2460, %v474
      %vm2641 = vcmp.le.f32.partialorder %v2460, %v478
      %vm2642 = vcmp.le.f32.partialorder %v2464, %v474
      %vm2643 = vcmp.le.f32.partialorder %v2464, %v478
      %vm2644 = vcmp.le.f32.partialorder %v2468, %v474
      %vm2645 = vcmp.le.f32.partialorder %v2468, %v478
      %vm2646 = vcmp.le.f32.partialorder %v2472, %v474
      %vm2647 = vcmp.le.f32.partialorder %v2472, %v478
      %vm2648 = vcmp.le.f32.partialorder %v2476, %v474
      %vm2649 = vcmp.le.f32.partialorder %v2476, %v478
      %vm2650 = vcmp.le.f32.partialorder %v2480, %v474
      %vm2651 = vcmp.le.f32.partialorder %v2480, %v478
      %vm2652 = vcmp.le.f32.partialorder %v2484, %v474
      %vm2653 = vcmp.le.f32.partialorder %v2484, %v478
      %vm2654 = vcmp.le.f32.partialorder %v2488, %v474
      %vm2655 = vcmp.le.f32.partialorder %v2488, %v478
      %vm2656 = vcmp.le.f32.partialorder %v2492, %v474
      %vm2657 = vcmp.le.f32.partialorder %v2492, %v478
      %vm2658 = vcmp.le.f32.partialorder %v2496, %v474
      %vm2659 = vcmp.le.f32.partialorder %v2496, %v478
      %vm2660 = vcmp.le.f32.partialorder %v2500, %v474
      %vm2661 = vcmp.le.f32.partialorder %v2500, %v478
      %vm2662 = vcmp.le.f32.partialorder %v2504, %v474
      %vm2663 = vcmp.le.f32.partialorder %v2504, %v478
      %vm2664 = vcmp.le.f32.partialorder %v2508, %v474
      %vm2665 = vcmp.le.f32.partialorder %v2508, %v478
      %vm2666 = vcmp.le.f32.partialorder %v2512, %v474
      %vm2667 = vcmp.le.f32.partialorder %v2512, %v478
      %vm2668 = vcmp.le.f32.partialorder %v2516, %v474
      %vm2669 = vcmp.le.f32.partialorder %v2516, %v478
      %vm2670 = vcmp.le.f32.partialorder %v2520, %v474
      %vm2671 = vcmp.le.f32.partialorder %v2520, %v478
      %vm2672 = vcmp.le.f32.partialorder %v2524, %v474
      %vm2673 = vcmp.le.f32.partialorder %v2524, %v478
      %vm2674 = vcmp.le.f32.partialorder %v2528, %v474
      %vm2675 = vcmp.le.f32.partialorder %v2528, %v478
      %vm2676 = vcmp.le.f32.partialorder %v2532, %v474
      %vm2677 = vcmp.le.f32.partialorder %v2532, %v478
      %vm2678 = vcmp.le.f32.partialorder %v2536, %v474
      %vm2679 = vcmp.le.f32.partialorder %v2536, %v478
      %vm2680 = vcmp.le.f32.partialorder %v2540, %v474
      %vm2681 = vcmp.le.f32.partialorder %v2540, %v478
      %vm2682 = vcmp.le.f32.partialorder %v2544, %v474
      %vm2683 = vcmp.le.f32.partialorder %v2544, %v478
      %vm2684 = vcmp.le.f32.partialorder %v2548, %v474
      %vm2685 = vcmp.le.f32.partialorder %v2548, %v478
      %vm2686 = vcmp.le.f32.partialorder %v2552, %v474
      %vm2687 = vcmp.le.f32.partialorder %v2552, %v478
      %vm2688 = vcmp.le.f32.partialorder %v2556, %v474
      %vm2689 = vcmp.le.f32.partialorder %v2556, %v478
      %vm2690 = vcmp.le.f32.partialorder %v2560, %v474
      %vm2691 = vcmp.le.f32.partialorder %v2560, %v478
      %vm2692 = vcmp.le.f32.partialorder %v2564, %v474
      %vm2693 = vcmp.le.f32.partialorder %v2564, %v478
      %vm2694 = vmand %vm2566, %vm2630
      %vm2695 = vmand %vm2567, %vm2631
      %vm2696 = vmand %vm2568, %vm2632
      %vm2697 = vmand %vm2569, %vm2633
      %vm2698 = vmand %vm2570, %vm2634
      %vm2699 = vmand %vm2571, %vm2635
      %vm2700 = vmand %vm2572, %vm2636
      %vm2701 = vmand %vm2573, %vm2637
      %vm2702 = vmand %vm2574, %vm2638
      %vm2703 = vmand %vm2575, %vm2639
      %vm2704 = vmand %vm2576, %vm2640
      %vm2705 = vmand %vm2577, %vm2641
      %vm2706 = vmand %vm2578, %vm2642
      %vm2707 = vmand %vm2579, %vm2643
      %vm2708 = vmand %vm2580, %vm2644
      %vm2709 = vmand %vm2581, %vm2645
      %vm2710 = vmand %vm2582, %vm2646
      %vm2711 = vmand %vm2583, %vm2647
      %vm2712 = vmand %vm2584, %vm2648
      %vm2713 = vmand %vm2585, %vm2649
      %vm2714 = vmand %vm2586, %vm2650
      %vm2715 = vmand %vm2587, %vm2651
      %vm2716 = vmand %vm2588, %vm2652
      %vm2717 = vmand %vm2589, %vm2653
      %vm2718 = vmand %vm2590, %vm2654
      %vm2719 = vmand %vm2591, %vm2655
      %vm2720 = vmand %vm2592, %vm2656
      %vm2721 = vmand %vm2593, %vm2657
      %vm2722 = vmand %vm2594, %vm2658
      %vm2723 = vmand %vm2595, %vm2659
      %vm2724 = vmand %vm2596, %vm2660
      %vm2725 = vmand %vm2597, %vm2661
      %vm2726 = vmand %vm2598, %vm2662
      %vm2727 = vmand %vm2599, %vm2663
      %vm2728 = vmand %vm2600, %vm2664
      %vm2729 = vmand %vm2601, %vm2665
      %vm2730 = vmand %vm2602, %vm2666
      %vm2731 = vmand %vm2603, %vm2667
      %vm2732 = vmand %vm2604, %vm2668
      %vm2733 = vmand %vm2605, %vm2669
      %vm2734 = vmand %vm2606, %vm2670
      %vm2735 = vmand %vm2607, %vm2671
      %vm2736 = vmand %vm2608, %vm2672
      %vm2737 = vmand %vm2609, %vm2673
      %vm2738 = vmand %vm2610, %vm2674
      %vm2739 = vmand %vm2611, %vm2675
      %vm2740 = vmand %vm2612, %vm2676
      %vm2741 = vmand %vm2613, %vm2677
      %vm2742 = vmand %vm2614, %vm2678
      %vm2743 = vmand %vm2615, %vm2679
      %vm2744 = vmand %vm2616, %vm2680
      %vm2745 = vmand %vm2617, %vm2681
      %vm2746 = vmand %vm2618, %vm2682
      %vm2747 = vmand %vm2619, %vm2683
      %vm2748 = vmand %vm2620, %vm2684
      %vm2749 = vmand %vm2621, %vm2685
      %vm2750 = vmand %vm2622, %vm2686
      %vm2751 = vmand %vm2623, %vm2687
      %vm2752 = vmand %vm2624, %vm2688
      %vm2753 = vmand %vm2625, %vm2689
      %vm2754 = vmand %vm2626, %vm2690
      %vm2755 = vmand %vm2627, %vm2691
      %vm2756 = vmand %vm2628, %vm2692
      %vm2757 = vmand %vm2629, %vm2693
      %v2758 = vsel %vm2694, 1, 0
      %v2759 = vsel %vm2695, 1, 0
      %v2760 = vsel %vm2696, 1, 0
      %v2761 = vsel %vm2697, 1, 0
      %v2762 = vsel %vm2698, 1, 0
      %v2763 = vsel %vm2699, 1, 0
      %v2764 = vsel %vm2700, 1, 0
      %v2765 = vsel %vm2701, 1, 0
      %v2766 = vsel %vm2702, 1, 0
      %v2767 = vsel %vm2703, 1, 0
      %v2768 = vsel %vm2704, 1, 0
      %v2769 = vsel %vm2705, 1, 0
      %v2770 = vsel %vm2706, 1, 0
      %v2771 = vsel %vm2707, 1, 0
      %v2772 = vsel %vm2708, 1, 0
      %v2773 = vsel %vm2709, 1, 0
      %v2774 = vsel %vm2710, 1, 0
      %v2775 = vsel %vm2711, 1, 0
      %v2776 = vsel %vm2712, 1, 0
      %v2777 = vsel %vm2713, 1, 0
      %v2778 = vsel %vm2714, 1, 0
      %v2779 = vsel %vm2715, 1, 0
      %v2780 = vsel %vm2716, 1, 0
      %v2781 = vsel %vm2717, 1, 0
      %v2782 = vsel %vm2718, 1, 0
      %v2783 = vsel %vm2719, 1, 0
      %v2784 = vsel %vm2720, 1, 0
      %v2785 = vsel %vm2721, 1, 0
      %v2786 = vsel %vm2722, 1, 0
      %v2787 = vsel %vm2723, 1, 0
      %v2788 = vsel %vm2724, 1, 0
      %v2789 = vsel %vm2725, 1, 0
      %v2790 = vsel %vm2726, 1, 0
      %v2791 = vsel %vm2727, 1, 0
      %v2792 = vsel %vm2728, 1, 0
      %v2793 = vsel %vm2729, 1, 0
      %v2794 = vsel %vm2730, 1, 0
      %v2795 = vsel %vm2731, 1, 0
      %v2796 = vsel %vm2732, 1, 0
      %v2797 = vsel %vm2733, 1, 0
      %v2798 = vsel %vm2734, 1, 0
      %v2799 = vsel %vm2735, 1, 0
      %v2800 = vsel %vm2736, 1, 0
      %v2801 = vsel %vm2737, 1, 0
      %v2802 = vsel %vm2738, 1, 0
      %v2803 = vsel %vm2739, 1, 0
      %v2804 = vsel %vm2740, 1, 0
      %v2805 = vsel %vm2741, 1, 0
      %v2806 = vsel %vm2742, 1, 0
      %v2807 = vsel %vm2743, 1, 0
      %v2808 = vsel %vm2744, 1, 0
      %v2809 = vsel %vm2745, 1, 0
      %v2810 = vsel %vm2746, 1, 0
      %v2811 = vsel %vm2747, 1, 0
      %v2812 = vsel %vm2748, 1, 0
      %v2813 = vsel %vm2749, 1, 0
      %v2814 = vsel %vm2750, 1, 0
      %v2815 = vsel %vm2751, 1, 0
      %v2816 = vsel %vm2752, 1, 0
      %v2817 = vsel %vm2753, 1, 0
      %v2818 = vsel %vm2754, 1, 0
      %v2819 = vsel %vm2755, 1, 0
      %v2820 = vsel %vm2756, 1, 0
      %v2821 = vsel %vm2757, 1, 0
      %v2822 = vcvt.s32.f32 %v2758
      %v2823 = vcvt.s32.f32 %v2759
      %v2824 = vcvt.s32.f32 %v2760
      %v2825 = vcvt.s32.f32 %v2761
      %v2826 = vcvt.s32.f32 %v2762
      %v2827 = vcvt.s32.f32 %v2763
      %v2828 = vcvt.s32.f32 %v2764
      %v2829 = vcvt.s32.f32 %v2765
      %v2830 = vcvt.s32.f32 %v2766
      %v2831 = vcvt.s32.f32 %v2767
      %v2832 = vcvt.s32.f32 %v2768
      %v2833 = vcvt.s32.f32 %v2769
      %v2834 = vcvt.s32.f32 %v2770
      %v2835 = vcvt.s32.f32 %v2771
      %v2836 = vcvt.s32.f32 %v2772
      %v2837 = vcvt.s32.f32 %v2773
      %v2838 = vcvt.s32.f32 %v2774
      %v2839 = vcvt.s32.f32 %v2775
      %v2840 = vcvt.s32.f32 %v2776
      %v2841 = vcvt.s32.f32 %v2777
      %v2842 = vcvt.s32.f32 %v2778
      %v2843 = vcvt.s32.f32 %v2779
      %v2844 = vcvt.s32.f32 %v2780
      %v2845 = vcvt.s32.f32 %v2781
      %v2846 = vcvt.s32.f32 %v2782
      %v2847 = vcvt.s32.f32 %v2783
      %v2848 = vcvt.s32.f32 %v2784
      %v2849 = vcvt.s32.f32 %v2785
      %v2850 = vcvt.s32.f32 %v2786
      %v2851 = vcvt.s32.f32 %v2787
      %v2852 = vcvt.s32.f32 %v2788
      %v2853 = vcvt.s32.f32 %v2789
      %v2854 = vcvt.s32.f32 %v2790
      %v2855 = vcvt.s32.f32 %v2791
      %v2856 = vcvt.s32.f32 %v2792
      %v2857 = vcvt.s32.f32 %v2793
      %v2858 = vcvt.s32.f32 %v2794
      %v2859 = vcvt.s32.f32 %v2795
      %v2860 = vcvt.s32.f32 %v2796
      %v2861 = vcvt.s32.f32 %v2797
      %v2862 = vcvt.s32.f32 %v2798
      %v2863 = vcvt.s32.f32 %v2799
      %v2864 = vcvt.s32.f32 %v2800
      %v2865 = vcvt.s32.f32 %v2801
      %v2866 = vcvt.s32.f32 %v2802
      %v2867 = vcvt.s32.f32 %v2803
      %v2868 = vcvt.s32.f32 %v2804
      %v2869 = vcvt.s32.f32 %v2805
      %v2870 = vcvt.s32.f32 %v2806
      %v2871 = vcvt.s32.f32 %v2807
      %v2872 = vcvt.s32.f32 %v2808
      %v2873 = vcvt.s32.f32 %v2809
      %v2874 = vcvt.s32.f32 %v2810
      %v2875 = vcvt.s32.f32 %v2811
      %v2876 = vcvt.s32.f32 %v2812
      %v2877 = vcvt.s32.f32 %v2813
      %v2878 = vcvt.s32.f32 %v2814
      %v2879 = vcvt.s32.f32 %v2815
      %v2880 = vcvt.s32.f32 %v2816
      %v2881 = vcvt.s32.f32 %v2817
      %v2882 = vcvt.s32.f32 %v2818
      %v2883 = vcvt.s32.f32 %v2819
      %v2884 = vcvt.s32.f32 %v2820
      %v2885 = vcvt.s32.f32 %v2821
      %s2886 = scalar_lea.vmem %s3, 768
      %v2887 = vld [vmem:[%s2886] sm:$0xff]
      %v2888 = vld [vmem:[%s2886 + $0x8] sm:$0xff]
      %v2889 = vld [vmem:[%s2886 + $0x10] sm:$0xff]
      %v2890 = vld [vmem:[%s2886 + $0x18] sm:$0xff]
      %v2891 = vld [vmem:[%s2886 + $0x20] sm:$0xff]
      %v2892 = vld [vmem:[%s2886 + $0x28] sm:$0xff]
      %v2893 = vld [vmem:[%s2886 + $0x30] sm:$0xff]
      %v2894 = vld [vmem:[%s2886 + $0x38] sm:$0xff]
      %v2895 = vld [vmem:[%s2886 + $0x40] sm:$0xff]
      %v2896 = vld [vmem:[%s2886 + $0x48] sm:$0xff]
      %v2897 = vld [vmem:[%s2886 + $0x50] sm:$0xff]
      %v2898 = vld [vmem:[%s2886 + $0x58] sm:$0xff]
      %v2899 = vld [vmem:[%s2886 + $0x60] sm:$0xff]
      %v2900 = vld [vmem:[%s2886 + $0x68] sm:$0xff]
      %v2901 = vld [vmem:[%s2886 + $0x70] sm:$0xff]
      %v2902 = vld [vmem:[%s2886 + $0x78] sm:$0xff]
      %v2903 = vld [vmem:[%s2886 + $0x80] sm:$0xff]
      %v2904 = vld [vmem:[%s2886 + $0x88] sm:$0xff]
      %v2905 = vld [vmem:[%s2886 + $0x90] sm:$0xff]
      %v2906 = vld [vmem:[%s2886 + $0x98] sm:$0xff]
      %v2907 = vld [vmem:[%s2886 + $0xa0] sm:$0xff]
      %v2908 = vld [vmem:[%s2886 + $0xa8] sm:$0xff]
      %v2909 = vld [vmem:[%s2886 + $0xb0] sm:$0xff]
      %v2910 = vld [vmem:[%s2886 + $0xb8] sm:$0xff]
      %v2911 = vld [vmem:[%s2886 + $0xc0] sm:$0xff]
      %v2912 = vld [vmem:[%s2886 + $0xc8] sm:$0xff]
      %v2913 = vld [vmem:[%s2886 + $0xd0] sm:$0xff]
      %v2914 = vld [vmem:[%s2886 + $0xd8] sm:$0xff]
      %v2915 = vld [vmem:[%s2886 + $0xe0] sm:$0xff]
      %v2916 = vld [vmem:[%s2886 + $0xe8] sm:$0xff]
      %v2917 = vld [vmem:[%s2886 + $0xf0] sm:$0xff]
      %v2918 = vld [vmem:[%s2886 + $0xf8] sm:$0xff]
      %2919 = vmatprep.subr.mxu0 0.0
      %2920 = vmatpush1.msra.mxu0 %v2902
      %2921 = vmatprep.subr.mxu0 0.0
      %2922 = vmatpush1.msra.mxu0 %v2901
      %2923 = vmatprep.subr.mxu0 0.0
      %2924 = vmatpush1.msra.mxu0 %v2900
      %2925 = vmatprep.subr.mxu0 0.0
      %2926 = vmatpush1.msra.mxu0 %v2899
      %2927 = vmatprep.subr.mxu0 0.0
      %2928 = vmatpush1.msra.mxu0 %v2898
      %2929 = vmatprep.subr.mxu0 0.0
      %2930 = vmatpush1.msra.mxu0 %v2897
      %2931 = vmatprep.subr.mxu0 0.0
      %2932 = vmatpush1.msra.mxu0 %v2896
      %2933 = vmatprep.subr.mxu0 0.0
      %2934 = vmatpush1.msra.mxu0 %v2895
      %2935 = vmatprep.subr.mxu0 0.0
      %2936 = vmatpush1.msra.mxu0 %v2894
      %2937 = vmatprep.subr.mxu0 0.0
      %2938 = vmatpush1.msra.mxu0 %v2893
      %2939 = vmatprep.subr.mxu0 0.0
      %2940 = vmatpush1.msra.mxu0 %v2892
      %2941 = vmatprep.subr.mxu0 0.0
      %2942 = vmatpush1.msra.mxu0 %v2891
      %2943 = vmatprep.subr.mxu0 0.0
      %2944 = vmatpush1.msra.mxu0 %v2890
      %2945 = vmatprep.subr.mxu0 0.0
      %2946 = vmatpush1.msra.mxu0 %v2889
      %2947 = vmatprep.subr.mxu0 0.0
      %2948 = vmatpush1.msra.mxu0 %v2888
      %2949 = vmatprep.subr.mxu0 0.0
      %2950 = vmatpush1.msra.mxu0 %v2887
      %2951 = vmatprep.subr.mxu0 0.0
      %2952 = vmatpush2.msra.mxu0 %v2918
      %2953 = vmatprep.subr.mxu0 0.0
      %2954 = vmatpush2.msra.mxu0 %v2917
      %2955 = vmatprep.subr.mxu0 0.0
      %2956 = vmatpush2.msra.mxu0 %v2916
      %2957 = vmatprep.subr.mxu0 0.0
      %2958 = vmatpush2.msra.mxu0 %v2915
      %2959 = vmatprep.subr.mxu0 0.0
      %2960 = vmatpush2.msra.mxu0 %v2914
      %2961 = vmatprep.subr.mxu0 0.0
      %2962 = vmatpush2.msra.mxu0 %v2913
      %2963 = vmatprep.subr.mxu0 0.0
      %2964 = vmatpush2.msra.mxu0 %v2912
      %2965 = vmatprep.subr.mxu0 0.0
      %2966 = vmatpush2.msra.mxu0 %v2911
      %2967 = vmatprep.subr.mxu0 0.0
      %2968 = vmatpush2.msra.mxu0 %v2910
      %2969 = vmatprep.subr.mxu0 0.0
      %2970 = vmatpush2.msra.mxu0 %v2909
      %2971 = vmatprep.subr.mxu0 0.0
      %2972 = vmatpush2.msra.mxu0 %v2908
      %2973 = vmatprep.subr.mxu0 0.0
      %2974 = vmatpush2.msra.mxu0 %v2907
      %2975 = vmatprep.subr.mxu0 0.0
      %2976 = vmatpush2.msra.mxu0 %v2906
      %2977 = vmatprep.subr.mxu0 0.0
      %2978 = vmatpush2.msra.mxu0 %v2905
      %2979 = vmatprep.subr.mxu0 0.0
      %2980 = vmatpush2.msra.mxu0 %v2904
      %2981 = vmatprep.subr.mxu0 0.0
      %2982 = vmatpush2.msra.mxu0 %v2903
      %2983 = vmatprep.mubr.f32.mxu0 %v2823
      %2984 = vmatmul.mubr.f32.gmra.mxu0 %v2822
      %v2985 = vpop.f32.mrf.mxu0
      %v2986 = vadd.f32 0.0, %v2985
      %v2987 = vpop.f32.mrf.mxu0
      %2988 = vmatprep.mubr.f32.mxu0 %v2825
      %2989 = vmatmul.mubr.f32.gmra.mxu0 %v2824
      %v2990 = vpop.f32.mrf.mxu0
      %v2991 = vadd.f32 0.0, %v2990
      %v2992 = vpop.f32.mrf.mxu0
      %2993 = vmatprep.mubr.f32.mxu0 %v2827
      %2994 = vmatmul.mubr.f32.gmra.mxu0 %v2826
      %v2995 = vpop.f32.mrf.mxu0
      %v2996 = vadd.f32 0.0, %v2995
      %v2997 = vpop.f32.mrf.mxu0
      %2998 = vmatprep.mubr.f32.mxu0 %v2829
      %2999 = vmatmul.mubr.f32.gmra.mxu0 %v2828
      %v3000 = vpop.f32.mrf.mxu0
      %v3001 = vadd.f32 0.0, %v3000
      %v3002 = vpop.f32.mrf.mxu0
      %3003 = vmatprep.mubr.f32.mxu0 %v2831
      %3004 = vmatmul.mubr.f32.gmra.mxu0 %v2830
      %v3005 = vpop.f32.mrf.mxu0
      %v3006 = vadd.f32 0.0, %v3005
      %v3007 = vpop.f32.mrf.mxu0
      %3008 = vmatprep.mubr.f32.mxu0 %v2833
      %3009 = vmatmul.mubr.f32.gmra.mxu0 %v2832
      %v3010 = vpop.f32.mrf.mxu0
      %v3011 = vadd.f32 0.0, %v3010
      %v3012 = vpop.f32.mrf.mxu0
      %3013 = vmatprep.mubr.f32.mxu0 %v2835
      %3014 = vmatmul.mubr.f32.gmra.mxu0 %v2834
      %v3015 = vpop.f32.mrf.mxu0
      %v3016 = vadd.f32 0.0, %v3015
      %v3017 = vpop.f32.mrf.mxu0
      %3018 = vmatprep.mubr.f32.mxu0 %v2837
      %3019 = vmatmul.mubr.f32.gmra.mxu0 %v2836
      %v3020 = vpop.f32.mrf.mxu0
      %v3021 = vadd.f32 0.0, %v3020
      %v3022 = vpop.f32.mrf.mxu0
      %3023 = vmatprep.mubr.f32.mxu0 %v2839
      %3024 = vmatmul.mubr.f32.gmra.mxu0 %v2838
      %v3025 = vpop.f32.mrf.mxu0
      %v3026 = vadd.f32 0.0, %v3025
      %v3027 = vpop.f32.mrf.mxu0
      %3028 = vmatprep.mubr.f32.mxu0 %v2841
      %3029 = vmatmul.mubr.f32.gmra.mxu0 %v2840
      %v3030 = vpop.f32.mrf.mxu0
      %v3031 = vadd.f32 0.0, %v3030
      %v3032 = vpop.f32.mrf.mxu0
      %3033 = vmatprep.mubr.f32.mxu0 %v2843
      %3034 = vmatmul.mubr.f32.gmra.mxu0 %v2842
      %v3035 = vpop.f32.mrf.mxu0
      %v3036 = vadd.f32 0.0, %v3035
      %v3037 = vpop.f32.mrf.mxu0
      %3038 = vmatprep.mubr.f32.mxu0 %v2845
      %3039 = vmatmul.mubr.f32.gmra.mxu0 %v2844
      %v3040 = vpop.f32.mrf.mxu0
      %v3041 = vadd.f32 0.0, %v3040
      %v3042 = vpop.f32.mrf.mxu0
      %3043 = vmatprep.mubr.f32.mxu0 %v2847
      %3044 = vmatmul.mubr.f32.gmra.mxu0 %v2846
      %v3045 = vpop.f32.mrf.mxu0
      %v3046 = vadd.f32 0.0, %v3045
      %v3047 = vpop.f32.mrf.mxu0
      %3048 = vmatprep.mubr.f32.mxu0 %v2849
      %3049 = vmatmul.mubr.f32.gmra.mxu0 %v2848
      %v3050 = vpop.f32.mrf.mxu0
      %v3051 = vadd.f32 0.0, %v3050
      %v3052 = vpop.f32.mrf.mxu0
      %3053 = vmatprep.mubr.f32.mxu0 %v2851
      %3054 = vmatmul.mubr.f32.gmra.mxu0 %v2850
      %v3055 = vpop.f32.mrf.mxu0
      %v3056 = vadd.f32 0.0, %v3055
      %v3057 = vpop.f32.mrf.mxu0
      %3058 = vmatprep.mubr.f32.mxu0 %v2853
      %3059 = vmatmul.mubr.f32.gmra.mxu0 %v2852
      %v3060 = vpop.f32.mrf.mxu0
      %v3061 = vadd.f32 0.0, %v3060
      %v3062 = vpop.f32.mrf.mxu0
      %3063 = vmatprep.mubr.f32.mxu0 %v2855
      %3064 = vmatmul.mubr.f32.gmra.mxu0 %v2854
      %v3065 = vpop.f32.mrf.mxu0
      %v3066 = vadd.f32 0.0, %v3065
      %v3067 = vpop.f32.mrf.mxu0
      %3068 = vmatprep.mubr.f32.mxu0 %v2857
      %3069 = vmatmul.mubr.f32.gmra.mxu0 %v2856
      %v3070 = vpop.f32.mrf.mxu0
      %v3071 = vadd.f32 0.0, %v3070
      %v3072 = vpop.f32.mrf.mxu0
      %3073 = vmatprep.mubr.f32.mxu0 %v2859
      %3074 = vmatmul.mubr.f32.gmra.mxu0 %v2858
      %v3075 = vpop.f32.mrf.mxu0
      %v3076 = vadd.f32 0.0, %v3075
      %v3077 = vpop.f32.mrf.mxu0
      %3078 = vmatprep.mubr.f32.mxu0 %v2861
      %3079 = vmatmul.mubr.f32.gmra.mxu0 %v2860
      %v3080 = vpop.f32.mrf.mxu0
      %v3081 = vadd.f32 0.0, %v3080
      %v3082 = vpop.f32.mrf.mxu0
      %3083 = vmatprep.mubr.f32.mxu0 %v2863
      %3084 = vmatmul.mubr.f32.gmra.mxu0 %v2862
      %v3085 = vpop.f32.mrf.mxu0
      %v3086 = vadd.f32 0.0, %v3085
      %v3087 = vpop.f32.mrf.mxu0
      %3088 = vmatprep.mubr.f32.mxu0 %v2865
      %3089 = vmatmul.mubr.f32.gmra.mxu0 %v2864
      %v3090 = vpop.f32.mrf.mxu0
      %v3091 = vadd.f32 0.0, %v3090
      %v3092 = vpop.f32.mrf.mxu0
      %3093 = vmatprep.mubr.f32.mxu0 %v2867
      %3094 = vmatmul.mubr.f32.gmra.mxu0 %v2866
      %v3095 = vpop.f32.mrf.mxu0
      %v3096 = vadd.f32 0.0, %v3095
      %v3097 = vpop.f32.mrf.mxu0
      %3098 = vmatprep.mubr.f32.mxu0 %v2869
      %3099 = vmatmul.mubr.f32.gmra.mxu0 %v2868
      %v3100 = vpop.f32.mrf.mxu0
      %v3101 = vadd.f32 0.0, %v3100
      %v3102 = vpop.f32.mrf.mxu0
      %3103 = vmatprep.mubr.f32.mxu0 %v2871
      %3104 = vmatmul.mubr.f32.gmra.mxu0 %v2870
      %v3105 = vpop.f32.mrf.mxu0
      %v3106 = vadd.f32 0.0, %v3105
      %v3107 = vpop.f32.mrf.mxu0
      %3108 = vmatprep.mubr.f32.mxu0 %v2873
      %3109 = vmatmul.mubr.f32.gmra.mxu0 %v2872
      %v3110 = vpop.f32.mrf.mxu0
      %v3111 = vadd.f32 0.0, %v3110
      %v3112 = vpop.f32.mrf.mxu0
      %3113 = vmatprep.mubr.f32.mxu0 %v2875
      %3114 = vmatmul.mubr.f32.gmra.mxu0 %v2874
      %v3115 = vpop.f32.mrf.mxu0
      %v3116 = vadd.f32 0.0, %v3115
      %v3117 = vpop.f32.mrf.mxu0
      %3118 = vmatprep.mubr.f32.mxu0 %v2877
      %3119 = vmatmul.mubr.f32.gmra.mxu0 %v2876
      %v3120 = vpop.f32.mrf.mxu0
      %v3121 = vadd.f32 0.0, %v3120
      %v3122 = vpop.f32.mrf.mxu0
      %3123 = vmatprep.mubr.f32.mxu0 %v2879
      %3124 = vmatmul.mubr.f32.gmra.mxu0 %v2878
      %v3125 = vpop.f32.mrf.mxu0
      %v3126 = vadd.f32 0.0, %v3125
      %v3127 = vpop.f32.mrf.mxu0
      %3128 = vmatprep.mubr.f32.mxu0 %v2881
      %3129 = vmatmul.mubr.f32.gmra.mxu0 %v2880
      %v3130 = vpop.f32.mrf.mxu0
      %v3131 = vadd.f32 0.0, %v3130
      %v3132 = vpop.f32.mrf.mxu0
      %3133 = vmatprep.mubr.f32.mxu0 %v2883
      %3134 = vmatmul.mubr.f32.gmra.mxu0 %v2882
      %v3135 = vpop.f32.mrf.mxu0
      %v3136 = vadd.f32 0.0, %v3135
      %v3137 = vpop.f32.mrf.mxu0
      %3138 = vmatprep.mubr.f32.mxu0 %v2885
      %3139 = vmatmul.mubr.f32.gmra.mxu0 %v2884
      %v3140 = vpop.f32.mrf.mxu0
      %v3141 = vadd.f32 0.0, %v3140
      %v3142 = vpop.f32.mrf.mxu0
      %3143 = vdwg.mxu0
      %v3144 = vadd.f32 %v2406, %v2986
      %v3145 = vadd.f32 %v2407, %v2991
      %v3146 = vadd.f32 %v2408, %v2996
      %v3147 = vadd.f32 %v2409, %v3001
      %v3148 = vadd.f32 %v2410, %v3006
      %v3149 = vadd.f32 %v2411, %v3011
      %v3150 = vadd.f32 %v2412, %v3016
      %v3151 = vadd.f32 %v2413, %v3021
      %v3152 = vadd.f32 %v2414, %v3026
      %v3153 = vadd.f32 %v2415, %v3031
      %v3154 = vadd.f32 %v2416, %v3036
      %v3155 = vadd.f32 %v2417, %v3041
      %v3156 = vadd.f32 %v2418, %v3046
      %v3157 = vadd.f32 %v2419, %v3051
      %v3158 = vadd.f32 %v2420, %v3056
      %v3159 = vadd.f32 %v2421, %v3061
      %v3160 = vadd.f32 %v2422, %v3066
      %v3161 = vadd.f32 %v2423, %v3071
      %v3162 = vadd.f32 %v2424, %v3076
      %v3163 = vadd.f32 %v2425, %v3081
      %v3164 = vadd.f32 %v2426, %v3086
      %v3165 = vadd.f32 %v2427, %v3091
      %v3166 = vadd.f32 %v2428, %v3096
      %v3167 = vadd.f32 %v2429, %v3101
      %v3168 = vadd.f32 %v2430, %v3106
      %v3169 = vadd.f32 %v2431, %v3111
      %v3170 = vadd.f32 %v2432, %v3116
      %v3171 = vadd.f32 %v2433, %v3121
      %v3172 = vadd.f32 %v2434, %v3126
      %v3173 = vadd.f32 %v2435, %v3131
      %v3174 = vadd.f32 %v2436, %v3136
      %v3175 = vadd.f32 %v2437, %v3141
      %3176 = vst [vmem:[%s199] sm:$0xff] %v3144
      %3177 = vst [vmem:[%s199 + $0x8] sm:$0xff] %v3145
      %3178 = vst [vmem:[%s199 + $0x10] sm:$0xff] %v3146
      %3179 = vst [vmem:[%s199 + $0x18] sm:$0xff] %v3147
      %3180 = vst [vmem:[%s199 + $0x20] sm:$0xff] %v3148
      %3181 = vst [vmem:[%s199 + $0x28] sm:$0xff] %v3149
      %3182 = vst [vmem:[%s199 + $0x30] sm:$0xff] %v3150
      %3183 = vst [vmem:[%s199 + $0x38] sm:$0xff] %v3151
      %3184 = vst [vmem:[%s199 + $0x40] sm:$0xff] %v3152
      %3185 = vst [vmem:[%s199 + $0x48] sm:$0xff] %v3153
      %3186 = vst [vmem:[%s199 + $0x50] sm:$0xff] %v3154
      %3187 = vst [vmem:[%s199 + $0x58] sm:$0xff] %v3155
      %3188 = vst [vmem:[%s199 + $0x60] sm:$0xff] %v3156
      %3189 = vst [vmem:[%s199 + $0x68] sm:$0xff] %v3157
      %3190 = vst [vmem:[%s199 + $0x70] sm:$0xff] %v3158
      %3191 = vst [vmem:[%s199 + $0x78] sm:$0xff] %v3159
      %3192 = vst [vmem:[%s199 + $0x80] sm:$0xff] %v3160
      %3193 = vst [vmem:[%s199 + $0x88] sm:$0xff] %v3161
      %3194 = vst [vmem:[%s199 + $0x90] sm:$0xff] %v3162
      %3195 = vst [vmem:[%s199 + $0x98] sm:$0xff] %v3163
      %3196 = vst [vmem:[%s199 + $0xa0] sm:$0xff] %v3164
      %3197 = vst [vmem:[%s199 + $0xa8] sm:$0xff] %v3165
      %3198 = vst [vmem:[%s199 + $0xb0] sm:$0xff] %v3166
      %3199 = vst [vmem:[%s199 + $0xb8] sm:$0xff] %v3167
      %3200 = vst [vmem:[%s199 + $0xc0] sm:$0xff] %v3168
      %3201 = vst [vmem:[%s199 + $0xc8] sm:$0xff] %v3169
      %3202 = vst [vmem:[%s199 + $0xd0] sm:$0xff] %v3170
      %3203 = vst [vmem:[%s199 + $0xd8] sm:$0xff] %v3171
      %3204 = vst [vmem:[%s199 + $0xe0] sm:$0xff] %v3172
      %3205 = vst [vmem:[%s199 + $0xe8] sm:$0xff] %v3173
      %3206 = vst [vmem:[%s199 + $0xf0] sm:$0xff] %v3174
      %3207 = vst [vmem:[%s199 + $0xf8] sm:$0xff] %v3175
      %s3208 = smul.u32 32, %s15
      %p3209 = scmp.lt.s32.totalorder %s3208, 63
      %s3210 = scalar_select %p3209, %s3208, 63
      %s3211 = smul.addr %s3210, 8
      %s3212 = scalar_lea.vmem %s4, %s3211
      // Predicated region
      $region37: #{quantization_embedding.1} parent=35 // pred_check
        %p3213 = pneg %p122
      $region38: #{quantization_embedding.1} parent=35 // pred_check_branch
        %3215 = sbr.rel (%p3213) target = $region40
      $region39: #{quantization_embedding.1} parent=35 // pred_region
        %s3216 = smul.u32 32, %s15
      $region40: #{quantization_embedding.1} parent=35 // pred_fallthru
        _
    $region36: #{quantization_embedding.1} parent=5 // pred_fallthru
      _
    %p3217 = scmp.le.s32.totalorder 2, %s10
    // Predicated region
    $region41: #{quantization_embedding.1} parent=5 // pred_check
      %p3218 = pneg %p3217
    $region42: #{quantization_embedding.1} parent=5 // pred_check_branch
      %3220 = sbr.rel (%p3218) target = $region44
    $region43: #{quantization_embedding.1} parent=5 // pred_region
      %s3221 = ssub.s32 %s10, 2
      // Predicated region
      $region45: #{quantization_embedding.1} parent=43 // pred_check
        %p3222 = pneg %p128
      $region46: #{quantization_embedding.1} parent=43 // pred_check_branch
        %3224 = sbr.rel (%p3222) target = $region48
      $region47: #{quantization_embedding.1} parent=43 // pred_region
        %s3225 = smul.u32 32, %s16
        %p3226 = scmp.lt.s32.totalorder %s3225, 63
        %s3227 = scalar_select %p3226, %s3225, 63
        %s3228 = smul.addr %s3227, 8
        %s3229 = scalar_lea.vmem %s4, %s3228
      $region48: #{quantization_embedding.1} parent=43 // pred_fallthru
        _
    $region44: #{quantization_embedding.1} parent=5 // pred_fallthru
      _
  $region6: #{quantization_embedding.1} parent=0 // loop_footer
    %s14 = sadd.s32 1, %s10
  $region7: #{quantization_embedding.1} parent=0 // loop_footer_branch
    %9 = sbr.rel target = $region3
  $region8: #{quantization_embedding.1} parent=0 // loop_exit
    _

</llo_original>
